<compile_context>
chip_gen: v7x
topology: tpu7x:2x2x1
jax: 0.10.0
libtpu: 0.0.40
codegen_flags: <defaults>
</compile_context>

<pallas_src>
import functools

import jax
import jax.numpy as jnp
from jax.experimental import pallas as pl
from jax.experimental.pallas import tpu as pltpu

LANE = 128


def _cdiv(a, b):
    return -(-a // b)


def _round_up(x, m):
    return ((x + m - 1) // m) * m


def _softplus(x):
    # Matches torch.nn.Softplus(beta=1, threshold=20): linear above threshold.
    return jnp.where(x > 20.0, x, jnp.log1p(jnp.exp(jnp.minimum(x, 20.0))))


def make_odenet_kernel(n_layers):
    """Kernel args: (txc, W0, vec0, W1, vec1, ..., W_{n-1}, vec_{n-1}, out).

    txc   : (TB, 1 + in_dim + cond_dim) bf16; column 0 is t.
    W_l   : (din_l, dout_l) bf16 weights (layer 0 has a zero top row so the
            t column of txc contributes nothing to the matmul).
    vec_l : (8, dout_l) f32; rows 0..3 hold (b, Wg, bg, Wb) of layer l.
    """

    def kernel(txc_ref, *rest):
        out_ref = rest[-1]
        params = rest[:-1]
        assert len(params) == 2 * n_layers

        txc = txc_ref[...]                            # (TB, din0) bf16
        t = txc[:, 0:1].astype(jnp.float32)           # (TB, 1) f32

        h = txc
        for l in range(n_layers):
            w = params[2 * l][...]                    # (din, dout) bf16
            vec = params[2 * l + 1][...]              # (8, dout) f32
            b, wg, bg, wb = vec[0:1], vec[1:2], vec[2:3], vec[3:4]
            # t-only work stays inside the layer loop (short live ranges,
            # no vreg spills); bias is folded into the gate term.
            gate = jax.nn.sigmoid(t * wg + bg)        # (TB, dout) f32
            add = b * gate + t * wb                   # (TB, dout) f32
            lin = jnp.dot(h.astype(w.dtype), w,
                          preferred_element_type=jnp.float32)
            h = lin * gate + add
            if l < n_layers - 1:                      # no act after last layer
                h = _softplus(h)

        out_ref[...] = h.astype(out_ref.dtype)

    return kernel


def init_odenet_params(key, input_dim, cond_dim, hidden_dim, hidden_layer=2):
    """Deterministic init mimicking nn.Linear defaults (uniform +/- 1/sqrt(fan_in))."""
    dims = [(input_dim + cond_dim, hidden_dim)]
    for _ in range(hidden_layer):
        dims.append((hidden_dim, hidden_dim))
    dims.append((hidden_dim, input_dim))

    params = []
    for (din, dout) in dims:
        key, k1, k2, k3, k4, k5 = jax.random.split(key, 6)
        bound = 1.0 / jnp.sqrt(float(din))
        W = jax.random.uniform(k1, (din, dout), jnp.float32, -bound, bound)
        b = jax.random.uniform(k2, (dout,), jnp.float32, -bound, bound)
        # gate / bias linears have fan_in = 1 -> bound = 1.0
        Wg = jax.random.uniform(k3, (1, dout), jnp.float32, -1.0, 1.0)
        bg = jax.random.uniform(k4, (dout,), jnp.float32, -1.0, 1.0)
        Wb = jax.random.uniform(k5, (1, dout), jnp.float32, -1.0, 1.0)
        params.append((W, b, Wg, bg, Wb))
    return params


def pack_params(params, weight_dtype=jnp.bfloat16):
    """Flatten per-layer params for the kernel.

    - Layer-0 weight gets a zero top row so the packed [t|x|cond] block feeds
      the matmul directly (t column times the zero row contributes exactly 0).
    - Last layer zero-padded to a 128-lane multiple (lane-dense stores); the
      padded columns compute to exactly 0 and are sliced off in the wrapper.
    - (b, Wg, bg, Wb) packed into one (8, dout) f32 array per layer (1 DMA).
    - Matmul weights stored in bf16 (half DMA/VMEM, 2x MXU rate; f32 acc).
    """
    n = len(params)
    flat = []
    for l, (W, b, Wg, bg, Wb) in enumerate(params):
        dout = W.shape[1]
        if l == n - 1 and dout % LANE != 0:
            pad = _round_up(dout, LANE) - dout
            W = jnp.pad(W, ((0, 0), (0, pad)))
            b = jnp.pad(b, ((0, pad),))
            Wg = jnp.pad(Wg, ((0, 0), (0, pad)))
            bg = jnp.pad(bg, ((0, pad),))
            Wb = jnp.pad(Wb, ((0, 0), (0, pad)))
            dout += pad
        if l == 0:
            W = jnp.concatenate([jnp.zeros((1, dout), W.dtype), W], axis=0)
        vec = jnp.zeros((8, dout), jnp.float32)
        vec = vec.at[0].set(b)
        vec = vec.at[1].set(Wg[0])
        vec = vec.at[2].set(bg)
        vec = vec.at[3].set(Wb[0])
        flat += [W.astype(weight_dtype), vec]
    return tuple(flat)


@functools.partial(jax.jit, static_argnames=("out_dim", "block_batch"))
def odenet_forward(t, x, cond, packed_params, *, out_dim, block_batch=512):
    """t: (B,1), x: (B, input_dim), cond: (B, cond_dim) -> (B, out_dim) f32."""
    B = x.shape[0]
    din0 = 1 + x.shape[1] + cond.shape[1]
    n_layers = len(packed_params) // 2
    out_pad = packed_params[-1].shape[1]            # last-layer dout (lane-padded)
    assert packed_params[0].shape[0] == din0

    # --- chip-generation awareness (trace-time Python, safe fallbacks) -----
    try:
        kind = jax.devices()[0].device_kind.lower()
    except Exception:
        kind = ""
    is_v7x = "v7" in kind
    try:
        vmem_cap = int(getattr(pltpu.get_tpu_info(), "vmem_capacity_bytes",
                               64 * 1024 * 1024))
    except Exception:
        vmem_cap = 64 * 1024 * 1024                  # conservative = v7x per-TC

    # --- batch tiling: minimal padding, bf16-sublane multiple, even steps on v7x
    n_steps = max(1, _cdiv(B, int(block_batch)))
    if is_v7x and n_steps > 1 and n_steps % 2 == 1:
        n_steps += 1                                 # balance the 2 TensorCores
    TB = _round_up(_cdiv(B, n_steps), 16)
    B_pad = n_steps * TB

    # --- single packed bf16 activation block: [t | x | cond] ----------------
    txc = jnp.concatenate(
        [t.astype(jnp.float32), x.astype(jnp.float32), cond.astype(jnp.float32)],
        axis=1).astype(jnp.bfloat16)
    if B_pad != B:
        txc = jnp.pad(txc, ((0, B_pad - B), (0, 0)))

    grid = (n_steps,)
    in_specs = ([pl.BlockSpec((TB, din0), lambda i: (i, 0))]
                + [pl.BlockSpec(p.shape, lambda i: (0, 0)) for p in packed_params])
    out_specs = pl.BlockSpec((TB, out_pad), lambda i: (i, 0))

    # --- advisory cost estimate ---------------------------------------------
    mm = 0
    dout_sum = 0
    for l in range(n_layers):
        w = packed_params[2 * l]
        mm += w.shape[0] * w.shape[1]
        dout_sum += w.shape[1]
    weight_bytes = sum(int(p.size) * p.dtype.itemsize for p in packed_params)
    cost = pl.CostEstimate(
        flops=int(2 * B_pad * mm),
        transcendentals=int(3 * B_pad * dout_sum),
        bytes_accessed=int(2 * B_pad * din0 + 4 * B_pad * out_pad + weight_bytes),
    )

    # --- VMEM budget (generation-aware; always set explicitly) --------------
    # resident weights + double-buffered in/out blocks + f32 layer temporaries
    act_bytes = 2 * TB * din0 * 2 + 2 * TB * out_pad * 4
    temp_bytes = 6 * TB * max(p.shape[1] for p in packed_params[1::2]) * 4
    vmem_est = weight_bytes + act_bytes + temp_bytes
    vmem_limit = int(min(max(2 * vmem_est + (4 << 20), 16 << 20),
                         int(0.75 * vmem_cap)))
    # TODO(synk): if hidden_dim grows so resident weights exceed ~40 MiB (v7x)
    # / ~90 MiB (v5e/v6e), switch to streaming K-tiles of W via an extra
    # "arbitrary" grid axis + f32 accumulator instead of VMEM-resident weights.

    compiler_params = pltpu.CompilerParams(
        dimension_semantics=("parallel",),
        vmem_limit_bytes=vmem_limit,
    )

    # TODO(synk): output could be emitted in bf16 to halve writeback bytes if
    # the downstream divergence / log-det accumulation tolerates the drift.
    out = pl.pallas_call(
        make_odenet_kernel(n_layers),
        out_shape=jax.ShapeDtypeStruct((B_pad, out_pad), jnp.float32),
        grid_spec=pltpu.PrefetchScalarGridSpec(
            num_scalar_prefetch=0,
            grid=grid,
            in_specs=in_specs,
            out_specs=out_specs,
        ),
        compiler_params=compiler_params,
        cost_estimate=cost,
    )(txc, *packed_params)

    return out[:B, :out_dim]


def reference_forward(t, x, cond, params, compute_dtype=jnp.float32):
    """Pure-JAX reference mirroring the PyTorch ODENet forward.

    With compute_dtype=bfloat16 it mirrors the kernel's numerics (bf16 matmul
    operands + bf16-rounded t, f32 accumulation and elementwise math).
    """
    h = jnp.concatenate([x, cond], axis=1)
    tq = t.astype(compute_dtype).astype(jnp.float32)
    n = len(params)
    for l, (W, b, Wg, bg, Wb) in enumerate(params):
        lin = jnp.dot(h.astype(compute_dtype), W.astype(compute_dtype),
                      preferred_element_type=jnp.float32) + b
        gate = jax.nn.sigmoid(tq * Wg + bg)
        h = lin * gate + tq * Wb
        if l < n - 1:
            h = _softplus(h)
    return h


if __name__ == "__main__":
    # Small shapes that still exercise batch tiling + padding.
    B = 520
    input_dim = 4
    cond_dim = 4
    hidden_dim = 32
    hidden_layer = 2

    key = jax.random.PRNGKey(0)
    k_p, k_t, k_x, k_c = jax.random.split(key, 4)

    params = init_odenet_params(k_p, input_dim, cond_dim, hidden_dim, hidden_layer)
    packed = pack_params(params)

    t = jax.random.uniform(k_t, (B, 1), jnp.float32)
    x = jax.random.normal(k_x, (B, input_dim), jnp.float32)
    cond = jax.random.normal(k_c, (B, cond_dim), jnp.float32)

    out = odenet_forward(t, x, cond, packed, out_dim=input_dim, block_batch=512)
    out = jax.block_until_ready(out)
    assert out.shape == (B, input_dim)

    # bf16-operand reference (same numerics as the kernel's MXU path).
    ref_bf16 = reference_forward(t, x, cond, params, compute_dtype=jnp.bfloat16)
    assert jnp.allclose(out, ref_bf16, atol=3e-3, rtol=3e-3), "mismatch vs bf16 reference"

    # f32 reference: sanity check that bf16 operands stay close to full precision.
    # TODO(synk): verify the CNF log-det accumulation downstream tolerates this drift.
    ref_f32 = reference_forward(t, x, cond, params, compute_dtype=jnp.float32)
    assert jnp.allclose(out, ref_f32, atol=1e-1, rtol=1e-1), "bf16 drift too large"

    print("KERNEL_OK")
</pallas_src>

<mosaic_0001>
module attributes {stable_mosaic.version = 11 : i64} {
  func.func @kernel(%arg0: i32, %arg1: memref<272x9xbf16, #tpu.memory_space<vmem>>, %arg2: memref<9x32xbf16, #tpu.memory_space<vmem>>, %arg3: memref<8x32xf32, #tpu.memory_space<vmem>>, %arg4: memref<32x32xbf16, #tpu.memory_space<vmem>>, %arg5: memref<8x32xf32, #tpu.memory_space<vmem>>, %arg6: memref<32x32xbf16, #tpu.memory_space<vmem>>, %arg7: memref<8x32xf32, #tpu.memory_space<vmem>>, %arg8: memref<32x128xbf16, #tpu.memory_space<vmem>>, %arg9: memref<8x128xf32, #tpu.memory_space<vmem>>, %arg10: memref<272x128xf32, #tpu.memory_space<vmem>>) attributes {dimension_semantics = [#tpu.dimension_semantics<parallel>], iteration_bounds = array<i64: 2>, scalar_prefetch = 0 : i64, scratch_operands = 0 : i64, tpu.core_type = #tpu.core_type<tc>, window_params = [{transform_indices = @transform_0, window_bounds = array<i64: 272, 9>}, {pipeline_mode = #tpu.pipeline_mode<synchronous>, transform_indices = @transform_1, window_bounds = array<i64: 9, 32>}, {pipeline_mode = #tpu.pipeline_mode<synchronous>, transform_indices = @transform_2, window_bounds = array<i64: 8, 32>}, {pipeline_mode = #tpu.pipeline_mode<synchronous>, transform_indices = @transform_3, window_bounds = array<i64: 32, 32>}, {pipeline_mode = #tpu.pipeline_mode<synchronous>, transform_indices = @transform_4, window_bounds = array<i64: 8, 32>}, {pipeline_mode = #tpu.pipeline_mode<synchronous>, transform_indices = @transform_5, window_bounds = array<i64: 32, 32>}, {pipeline_mode = #tpu.pipeline_mode<synchronous>, transform_indices = @transform_6, window_bounds = array<i64: 8, 32>}, {pipeline_mode = #tpu.pipeline_mode<synchronous>, transform_indices = @transform_7, window_bounds = array<i64: 32, 128>}, {pipeline_mode = #tpu.pipeline_mode<synchronous>, transform_indices = @transform_8, window_bounds = array<i64: 8, 128>}, {transform_indices = @transform_9, window_bounds = array<i64: 272, 128>}]} {
    %c0 = arith.constant 0 : index
    %c0_0 = arith.constant 0 : index
    %0 = vector.load %arg1[%c0, %c0_0] : memref<272x9xbf16, #tpu.memory_space<vmem>>, vector<272x9xbf16>
    %1 = vector.extract_strided_slice %0 {offsets = [0, 0], sizes = [272, 1], strides = [1, 1]} : vector<272x9xbf16> to vector<272x1xbf16>
    %2 = arith.extf %1 : vector<272x1xbf16> to vector<272x1xf32>
    %c0_1 = arith.constant 0 : index
    %c0_2 = arith.constant 0 : index
    %3 = vector.load %arg2[%c0_1, %c0_2] : memref<9x32xbf16, #tpu.memory_space<vmem>>, vector<9x32xbf16>
    %c0_3 = arith.constant 0 : index
    %c0_4 = arith.constant 0 : index
    %4 = vector.load %arg3[%c0_3, %c0_4] : memref<8x32xf32, #tpu.memory_space<vmem>>, vector<8x32xf32>
    %5 = vector.extract_strided_slice %4 {offsets = [0, 0], sizes = [1, 32], strides = [1, 1]} : vector<8x32xf32> to vector<1x32xf32>
    %6 = vector.extract_strided_slice %4 {offsets = [1, 0], sizes = [1, 32], strides = [1, 1]} : vector<8x32xf32> to vector<1x32xf32>
    %7 = vector.extract_strided_slice %4 {offsets = [2, 0], sizes = [1, 32], strides = [1, 1]} : vector<8x32xf32> to vector<1x32xf32>
    %8 = vector.extract_strided_slice %4 {offsets = [3, 0], sizes = [1, 32], strides = [1, 1]} : vector<8x32xf32> to vector<1x32xf32>
    %9 = vector.broadcast %2 : vector<272x1xf32> to vector<272x32xf32>
    %10 = vector.broadcast %6 : vector<1x32xf32> to vector<272x32xf32>
    %11 = arith.mulf %9, %10 : vector<272x32xf32>
    %12 = vector.broadcast %7 : vector<1x32xf32> to vector<272x32xf32>
    %13 = arith.addf %11, %12 : vector<272x32xf32>
    %14 = arith.negf %13 : vector<272x32xf32>
    %15 = math.exp %14 : vector<272x32xf32>
    %cst = arith.constant 1.000000e+00 : f32
    %16 = vector.broadcast %cst : f32 to vector<272x32xf32>
    %17 = arith.addf %16, %15 : vector<272x32xf32>
    %18 = arith.divf %16, %17 : vector<272x32xf32>
    %19 = vector.broadcast %5 : vector<1x32xf32> to vector<272x32xf32>
    %20 = arith.mulf %19, %18 : vector<272x32xf32>
    %21 = vector.broadcast %2 : vector<272x1xf32> to vector<272x32xf32>
    %22 = vector.broadcast %8 : vector<1x32xf32> to vector<272x32xf32>
    %23 = arith.mulf %21, %22 : vector<272x32xf32>
    %24 = arith.addf %20, %23 : vector<272x32xf32>
    %cst_5 = arith.constant dense<0.000000e+00> : vector<272x32xf32>
    %25 = tpu.matmul %0, %3, %cst_5 {dimension_numbers = #tpu.dot_dimension_numbers<[1], [0], [0], [1], [0, 0, 1, 1], [], []>} : vector<272x9xbf16>, vector<9x32xbf16>, vector<272x32xf32> -> vector<272x32xf32>
    %26 = arith.mulf %25, %18 : vector<272x32xf32>
    %27 = arith.addf %26, %24 : vector<272x32xf32>
    %cst_6 = arith.constant 2.000000e+01 : f32
    %28 = vector.broadcast %cst_6 : f32 to vector<272x32xf32>
    %29 = arith.cmpf ogt, %27, %28 : vector<272x32xf32>
    %cst_7 = arith.constant 2.000000e+01 : f32
    %30 = vector.broadcast %cst_7 : f32 to vector<272x32xf32>
    %31 = arith.minimumf %27, %30 : vector<272x32xf32>
    %32 = math.exp %31 : vector<272x32xf32>
    %33 = math.log1p %32 : vector<272x32xf32>
    %34 = arith.select %29, %27, %33 : vector<272x32xi1>, vector<272x32xf32>
    %c0_8 = arith.constant 0 : index
    %c0_9 = arith.constant 0 : index
    %35 = vector.load %arg4[%c0_8, %c0_9] : memref<32x32xbf16, #tpu.memory_space<vmem>>, vector<32x32xbf16>
    %c0_10 = arith.constant 0 : index
    %c0_11 = arith.constant 0 : index
    %36 = vector.load %arg5[%c0_10, %c0_11] : memref<8x32xf32, #tpu.memory_space<vmem>>, vector<8x32xf32>
    %37 = vector.extract_strided_slice %36 {offsets = [0, 0], sizes = [1, 32], strides = [1, 1]} : vector<8x32xf32> to vector<1x32xf32>
    %38 = vector.extract_strided_slice %36 {offsets = [1, 0], sizes = [1, 32], strides = [1, 1]} : vector<8x32xf32> to vector<1x32xf32>
    %39 = vector.extract_strided_slice %36 {offsets = [2, 0], sizes = [1, 32], strides = [1, 1]} : vector<8x32xf32> to vector<1x32xf32>
    %40 = vector.extract_strided_slice %36 {offsets = [3, 0], sizes = [1, 32], strides = [1, 1]} : vector<8x32xf32> to vector<1x32xf32>
    %41 = vector.broadcast %2 : vector<272x1xf32> to vector<272x32xf32>
    %42 = vector.broadcast %38 : vector<1x32xf32> to vector<272x32xf32>
    %43 = arith.mulf %41, %42 : vector<272x32xf32>
    %44 = vector.broadcast %39 : vector<1x32xf32> to vector<272x32xf32>
    %45 = arith.addf %43, %44 : vector<272x32xf32>
    %46 = arith.negf %45 : vector<272x32xf32>
    %47 = math.exp %46 : vector<272x32xf32>
    %cst_12 = arith.constant 1.000000e+00 : f32
    %48 = vector.broadcast %cst_12 : f32 to vector<272x32xf32>
    %49 = arith.addf %48, %47 : vector<272x32xf32>
    %50 = arith.divf %48, %49 : vector<272x32xf32>
    %51 = vector.broadcast %37 : vector<1x32xf32> to vector<272x32xf32>
    %52 = arith.mulf %51, %50 : vector<272x32xf32>
    %53 = vector.broadcast %2 : vector<272x1xf32> to vector<272x32xf32>
    %54 = vector.broadcast %40 : vector<1x32xf32> to vector<272x32xf32>
    %55 = arith.mulf %53, %54 : vector<272x32xf32>
    %56 = arith.addf %52, %55 : vector<272x32xf32>
    %57 = arith.truncf %34 : vector<272x32xf32> to vector<272x32xbf16>
    %cst_13 = arith.constant dense<0.000000e+00> : vector<272x32xf32>
    %58 = tpu.matmul %57, %35, %cst_13 {dimension_numbers = #tpu.dot_dimension_numbers<[1], [0], [0], [1], [0, 0, 1, 1], [], []>} : vector<272x32xbf16>, vector<32x32xbf16>, vector<272x32xf32> -> vector<272x32xf32>
    %59 = arith.mulf %58, %50 : vector<272x32xf32>
    %60 = arith.addf %59, %56 : vector<272x32xf32>
    %cst_14 = arith.constant 2.000000e+01 : f32
    %61 = vector.broadcast %cst_14 : f32 to vector<272x32xf32>
    %62 = arith.cmpf ogt, %60, %61 : vector<272x32xf32>
    %cst_15 = arith.constant 2.000000e+01 : f32
    %63 = vector.broadcast %cst_15 : f32 to vector<272x32xf32>
    %64 = arith.minimumf %60, %63 : vector<272x32xf32>
    %65 = math.exp %64 : vector<272x32xf32>
    %66 = math.log1p %65 : vector<272x32xf32>
    %67 = arith.select %62, %60, %66 : vector<272x32xi1>, vector<272x32xf32>
    %c0_16 = arith.constant 0 : index
    %c0_17 = arith.constant 0 : index
    %68 = vector.load %arg6[%c0_16, %c0_17] : memref<32x32xbf16, #tpu.memory_space<vmem>>, vector<32x32xbf16>
    %c0_18 = arith.constant 0 : index
    %c0_19 = arith.constant 0 : index
    %69 = vector.load %arg7[%c0_18, %c0_19] : memref<8x32xf32, #tpu.memory_space<vmem>>, vector<8x32xf32>
    %70 = vector.extract_strided_slice %69 {offsets = [0, 0], sizes = [1, 32], strides = [1, 1]} : vector<8x32xf32> to vector<1x32xf32>
    %71 = vector.extract_strided_slice %69 {offsets = [1, 0], sizes = [1, 32], strides = [1, 1]} : vector<8x32xf32> to vector<1x32xf32>
    %72 = vector.extract_strided_slice %69 {offsets = [2, 0], sizes = [1, 32], strides = [1, 1]} : vector<8x32xf32> to vector<1x32xf32>
    %73 = vector.extract_strided_slice %69 {offsets = [3, 0], sizes = [1, 32], strides = [1, 1]} : vector<8x32xf32> to vector<1x32xf32>
    %74 = vector.broadcast %2 : vector<272x1xf32> to vector<272x32xf32>
    %75 = vector.broadcast %71 : vector<1x32xf32> to vector<272x32xf32>
    %76 = arith.mulf %74, %75 : vector<272x32xf32>
    %77 = vector.broadcast %72 : vector<1x32xf32> to vector<272x32xf32>
    %78 = arith.addf %76, %77 : vector<272x32xf32>
    %79 = arith.negf %78 : vector<272x32xf32>
    %80 = math.exp %79 : vector<272x32xf32>
    %cst_20 = arith.constant 1.000000e+00 : f32
    %81 = vector.broadcast %cst_20 : f32 to vector<272x32xf32>
    %82 = arith.addf %81, %80 : vector<272x32xf32>
    %83 = arith.divf %81, %82 : vector<272x32xf32>
    %84 = vector.broadcast %70 : vector<1x32xf32> to vector<272x32xf32>
    %85 = arith.mulf %84, %83 : vector<272x32xf32>
    %86 = vector.broadcast %2 : vector<272x1xf32> to vector<272x32xf32>
    %87 = vector.broadcast %73 : vector<1x32xf32> to vector<272x32xf32>
    %88 = arith.mulf %86, %87 : vector<272x32xf32>
    %89 = arith.addf %85, %88 : vector<272x32xf32>
    %90 = arith.truncf %67 : vector<272x32xf32> to vector<272x32xbf16>
    %cst_21 = arith.constant dense<0.000000e+00> : vector<272x32xf32>
    %91 = tpu.matmul %90, %68, %cst_21 {dimension_numbers = #tpu.dot_dimension_numbers<[1], [0], [0], [1], [0, 0, 1, 1], [], []>} : vector<272x32xbf16>, vector<32x32xbf16>, vector<272x32xf32> -> vector<272x32xf32>
    %92 = arith.mulf %91, %83 : vector<272x32xf32>
    %93 = arith.addf %92, %89 : vector<272x32xf32>
    %cst_22 = arith.constant 2.000000e+01 : f32
    %94 = vector.broadcast %cst_22 : f32 to vector<272x32xf32>
    %95 = arith.cmpf ogt, %93, %94 : vector<272x32xf32>
    %cst_23 = arith.constant 2.000000e+01 : f32
    %96 = vector.broadcast %cst_23 : f32 to vector<272x32xf32>
    %97 = arith.minimumf %93, %96 : vector<272x32xf32>
    %98 = math.exp %97 : vector<272x32xf32>
    %99 = math.log1p %98 : vector<272x32xf32>
    %100 = arith.select %95, %93, %99 : vector<272x32xi1>, vector<272x32xf32>
    %c0_24 = arith.constant 0 : index
    %c0_25 = arith.constant 0 : index
    %101 = vector.load %arg8[%c0_24, %c0_25] : memref<32x128xbf16, #tpu.memory_space<vmem>>, vector<32x128xbf16>
    %c0_26 = arith.constant 0 : index
    %c0_27 = arith.constant 0 : index
    %102 = vector.load %arg9[%c0_26, %c0_27] : memref<8x128xf32, #tpu.memory_space<vmem>>, vector<8x128xf32>
    %103 = vector.extract_strided_slice %102 {offsets = [0, 0], sizes = [1, 128], strides = [1, 1]} : vector<8x128xf32> to vector<1x128xf32>
    %104 = vector.extract_strided_slice %102 {offsets = [1, 0], sizes = [1, 128], strides = [1, 1]} : vector<8x128xf32> to vector<1x128xf32>
    %105 = vector.extract_strided_slice %102 {offsets = [2, 0], sizes = [1, 128], strides = [1, 1]} : vector<8x128xf32> to vector<1x128xf32>
    %106 = vector.extract_strided_slice %102 {offsets = [3, 0], sizes = [1, 128], strides = [1, 1]} : vector<8x128xf32> to vector<1x128xf32>
    %107 = vector.broadcast %2 : vector<272x1xf32> to vector<272x128xf32>
    %108 = vector.broadcast %104 : vector<1x128xf32> to vector<272x128xf32>
    %109 = arith.mulf %107, %108 : vector<272x128xf32>
    %110 = vector.broadcast %105 : vector<1x128xf32> to vector<272x128xf32>
    %111 = arith.addf %109, %110 : vector<272x128xf32>
    %112 = arith.negf %111 : vector<272x128xf32>
    %113 = math.exp %112 : vector<272x128xf32>
    %cst_28 = arith.constant 1.000000e+00 : f32
    %114 = vector.broadcast %cst_28 : f32 to vector<272x128xf32>
    %115 = arith.addf %114, %113 : vector<272x128xf32>
    %116 = arith.divf %114, %115 : vector<272x128xf32>
    %117 = vector.broadcast %103 : vector<1x128xf32> to vector<272x128xf32>
    %118 = arith.mulf %117, %116 : vector<272x128xf32>
    %119 = vector.broadcast %2 : vector<272x1xf32> to vector<272x128xf32>
    %120 = vector.broadcast %106 : vector<1x128xf32> to vector<272x128xf32>
    %121 = arith.mulf %119, %120 : vector<272x128xf32>
    %122 = arith.addf %118, %121 : vector<272x128xf32>
    %123 = arith.truncf %100 : vector<272x32xf32> to vector<272x32xbf16>
    %cst_29 = arith.constant dense<0.000000e+00> : vector<272x128xf32>
    %124 = tpu.matmul %123, %101, %cst_29 {dimension_numbers = #tpu.dot_dimension_numbers<[1], [0], [0], [1], [0, 0, 1, 1], [], []>} : vector<272x32xbf16>, vector<32x128xbf16>, vector<272x128xf32> -> vector<272x128xf32>
    %125 = arith.mulf %124, %116 : vector<272x128xf32>
    %126 = arith.addf %125, %122 : vector<272x128xf32>
    %c0_30 = arith.constant 0 : index
    %c0_31 = arith.constant 0 : index
    %127 = vector.load %arg10[%c0_30, %c0_31] : memref<272x128xf32, #tpu.memory_space<vmem>>, vector<272x128xf32>
    tpu.vector_store %arg10[%c0_30, %c0_31], %126 {strides = array<i32>} : memref<272x128xf32, #tpu.memory_space<vmem>>, vector<272x128xf32>,
    return
  }
  func.func @transform_0(%arg0: i32) -> (i32, i32) {
    %c0_i32 = arith.constant 0 : i32
    %c0_i32_0 = arith.constant 0 : i32
    return %arg0, %c0_i32 : i32, i32
  }
  func.func @transform_1(%arg0: i32) -> (i32, i32) {
    %c0_i32 = arith.constant 0 : i32
    %c0_i32_0 = arith.constant 0 : i32
    %c0_i32_1 = arith.constant 0 : i32
    return %c0_i32, %c0_i32_0 : i32, i32
  }
  func.func @transform_2(%arg0: i32) -> (i32, i32) {
    %c0_i32 = arith.constant 0 : i32
    %c0_i32_0 = arith.constant 0 : i32
    %c0_i32_1 = arith.constant 0 : i32
    return %c0_i32, %c0_i32_0 : i32, i32
  }
  func.func @transform_3(%arg0: i32) -> (i32, i32) {
    %c0_i32 = arith.constant 0 : i32
    %c0_i32_0 = arith.constant 0 : i32
    %c0_i32_1 = arith.constant 0 : i32
    return %c0_i32, %c0_i32_0 : i32, i32
  }
  func.func @transform_4(%arg0: i32) -> (i32, i32) {
    %c0_i32 = arith.constant 0 : i32
    %c0_i32_0 = arith.constant 0 : i32
    %c0_i32_1 = arith.constant 0 : i32
    return %c0_i32, %c0_i32_0 : i32, i32
  }
  func.func @transform_5(%arg0: i32) -> (i32, i32) {
    %c0_i32 = arith.constant 0 : i32
    %c0_i32_0 = arith.constant 0 : i32
    %c0_i32_1 = arith.constant 0 : i32
    return %c0_i32, %c0_i32_0 : i32, i32
  }
  func.func @transform_6(%arg0: i32) -> (i32, i32) {
    %c0_i32 = arith.constant 0 : i32
    %c0_i32_0 = arith.constant 0 : i32
    %c0_i32_1 = arith.constant 0 : i32
    return %c0_i32, %c0_i32_0 : i32, i32
  }
  func.func @transform_7(%arg0: i32) -> (i32, i32) {
    %c0_i32 = arith.constant 0 : i32
    %c0_i32_0 = arith.constant 0 : i32
    %c0_i32_1 = arith.constant 0 : i32
    return %c0_i32, %c0_i32_0 : i32, i32
  }
  func.func @transform_8(%arg0: i32) -> (i32, i32) {
    %c0_i32 = arith.constant 0 : i32
    %c0_i32_0 = arith.constant 0 : i32
    %c0_i32_1 = arith.constant 0 : i32
    return %c0_i32, %c0_i32_0 : i32, i32
  }
  func.func @transform_9(%arg0: i32) -> (i32, i32) {
    %c0_i32 = arith.constant 0 : i32
    %c0_i32_0 = arith.constant 0 : i32
    return %arg0, %c0_i32 : i32, i32
  }
}

</mosaic_0001>

<llo_original>
// kernel: odenet_forward.1
$region0: #{odenet_forward.1}
  #allocation0 [shape = 'u32[]', space=smem, size = 0x4, offset = 0x4, fixed_abs, tag = 'smem constant byte address 0x4 - core index']
  #allocation1 [shape = 'u32[144,128]{1,0:T(1,128)}', space=vmem, size = 0x12000, scoped, tag = 'internal scratch']
  %s0 = inlined_call_operand.vmem [shape: bf16[544,9], index: 0, kind: input, shape index: {}]
  %s1 = inlined_call_operand.vmem [shape: bf16[9,32], index: 1, kind: input, shape index: {}]
  %s2 = inlined_call_operand.vmem [shape: f32[8,32], index: 2, kind: input, shape index: {}]
  %s3 = inlined_call_operand.vmem [shape: bf16[32,32], index: 3, kind: input, shape index: {}]
  %s4 = inlined_call_operand.vmem [shape: f32[8,32], index: 4, kind: input, shape index: {}]
  %s5 = inlined_call_operand.vmem [shape: bf16[32,32], index: 5, kind: input, shape index: {}]
  %s6 = inlined_call_operand.vmem [shape: f32[8,32], index: 6, kind: input, shape index: {}]
  %s7 = inlined_call_operand.vmem [shape: bf16[32,128], index: 7, kind: input, shape index: {}]
  %s8 = inlined_call_operand.vmem [shape: f32[8,128], index: 8, kind: input, shape index: {}]
  %s9 = inlined_call_operand.vmem [shape: f32[544,128], index: 9, kind: output, shape index: {}]
  %s10 = sld [smem:[#allocation0]]
  $region69: #{odenet_forward.1} parent=0
    _
  %s12 = ssub.s32 1, %s10
  %s13 = scalar_select 0, %s12, %s10
  loop: start=0, step=1, limit=4
  $region2: #{odenet_forward.1} parent=0 // loop_pre_header
    _
  $region3: #{odenet_forward.1} parent=0 // loop_header
    %s15 = sphi 0, %s19
    %p16 = scmp.ge.s32.totalorder %s15, 4
    %s25 = sphi 0, %s27
    %s28 = sphi 0, %s25
    %s29 = sphi 0, %s28
    %s45 = sphi 0, %s29
    %s49 = sphi 0, %s49
    %s51 = sphi 0, %s49
    %s52 = sphi 0, %s51
    %s66 = sphi 0, %s52
    %s70 = sphi 0, %s70
    %s72 = sphi 0, %s70
    %s73 = sphi 0, %s72
    %s87 = sphi 0, %s73
    %s91 = sphi 0, %s91
    %s93 = sphi 0, %s91
    %s94 = sphi 0, %s93
    %s108 = sphi 0, %s94
    %s112 = sphi 0, %s112
    %s114 = sphi 0, %s112
    %s115 = sphi 0, %s114
    %s129 = sphi 0, %s115
    %s133 = sphi 0, %s133
    %s135 = sphi 0, %s133
    %s136 = sphi 0, %s135
    %s150 = sphi 0, %s136
    %s154 = sphi 0, %s154
    %s156 = sphi 0, %s154
    %s157 = sphi 0, %s156
    %s171 = sphi 0, %s157
    %s175 = sphi 0, %s175
    %s177 = sphi 0, %s175
    %s178 = sphi 0, %s177
    %s192 = sphi 0, %s178
    %s196 = sphi 0, %s196
    %s198 = sphi 0, %s196
    %s199 = sphi 0, %s198
    %s213 = sphi 0, %s199
    %s219 = sphi 0, %s221
    %s222 = sphi 0, %s219
    %s223 = sphi 0, %s222
    %s239 = sphi 0, %s223
  $region4: #{odenet_forward.1} parent=0 // loop_header_branch
    %18 = sbr.rel (%p16) target = $region8
  $region5: #{odenet_forward.1} parent=0 // loop_body
    %s20 = ssub.s32 %s15, 1
    %s21 = ssub.s32 %s15, 2
    %s22 = sadd.s32 %s15, 1
    %s23 = ssub.s32 %s15, %s22
    %p24 = scmp.eq.s32.totalorder %s23, 0
    %s26 = sadd.s32 %s25, 1
    %s27 = scalar_select %p24, %s25, %s26
    %p30 = pneg %p24
    %p31 = scmp.eq.s32.totalorder %s15, 1
    %p32 = por %p30, %p31
    %p33 = scmp.ne.s32.totalorder %s25, %s28
    %p34 = scmp.eq.s32.totalorder %s15, 0
    %p35 = por %p33, %p34
    %p36 = scmp.ne.s32.totalorder %s25, %s28
    %p37 = scmp.eq.s32.totalorder %s20, 1
    %p38 = por %p36, %p37
    %p39 = scmp.ne.s32.totalorder %s28, %s29
    %p40 = scmp.eq.s32.totalorder %s20, 0
    %p41 = por %p39, %p40
    %p42 = scmp.ne.s32.totalorder %s28, %s29
    %p43 = scmp.eq.s32.totalorder %s21, 1
    %p44 = por %p42, %p43
    %p46 = scmp.ne.s32.totalorder %s29, %s45
    %p47 = scmp.eq.s32.totalorder %s21, 0
    %p48 = por %p46, %p47
    %s50 = sadd.s32 %s49, 1
    %p53 = scmp.eq.s32.totalorder %s15, 1
    %p54 = scmp.ne.s32.totalorder %s49, %s51
    %p55 = scmp.eq.s32.totalorder %s15, 0
    %p56 = por %p54, %p55
    %p57 = scmp.ne.s32.totalorder %s49, %s51
    %p58 = scmp.eq.s32.totalorder %s20, 1
    %p59 = por %p57, %p58
    %p60 = scmp.ne.s32.totalorder %s51, %s52
    %p61 = scmp.eq.s32.totalorder %s20, 0
    %p62 = por %p60, %p61
    %p63 = scmp.ne.s32.totalorder %s51, %s52
    %p64 = scmp.eq.s32.totalorder %s21, 1
    %p65 = por %p63, %p64
    %p67 = scmp.ne.s32.totalorder %s52, %s66
    %p68 = scmp.eq.s32.totalorder %s21, 0
    %p69 = por %p67, %p68
    %s71 = sadd.s32 %s70, 1
    %p74 = scmp.eq.s32.totalorder %s15, 1
    %p75 = scmp.ne.s32.totalorder %s70, %s72
    %p76 = scmp.eq.s32.totalorder %s15, 0
    %p77 = por %p75, %p76
    %p78 = scmp.ne.s32.totalorder %s70, %s72
    %p79 = scmp.eq.s32.totalorder %s20, 1
    %p80 = por %p78, %p79
    %p81 = scmp.ne.s32.totalorder %s72, %s73
    %p82 = scmp.eq.s32.totalorder %s20, 0
    %p83 = por %p81, %p82
    %p84 = scmp.ne.s32.totalorder %s72, %s73
    %p85 = scmp.eq.s32.totalorder %s21, 1
    %p86 = por %p84, %p85
    %p88 = scmp.ne.s32.totalorder %s73, %s87
    %p89 = scmp.eq.s32.totalorder %s21, 0
    %p90 = por %p88, %p89
    %s92 = sadd.s32 %s91, 1
    %p95 = scmp.eq.s32.totalorder %s15, 1
    %p96 = scmp.ne.s32.totalorder %s91, %s93
    %p97 = scmp.eq.s32.totalorder %s15, 0
    %p98 = por %p96, %p97
    %p99 = scmp.ne.s32.totalorder %s91, %s93
    %p100 = scmp.eq.s32.totalorder %s20, 1
    %p101 = por %p99, %p100
    %p102 = scmp.ne.s32.totalorder %s93, %s94
    %p103 = scmp.eq.s32.totalorder %s20, 0
    %p104 = por %p102, %p103
    %p105 = scmp.ne.s32.totalorder %s93, %s94
    %p106 = scmp.eq.s32.totalorder %s21, 1
    %p107 = por %p105, %p106
    %p109 = scmp.ne.s32.totalorder %s94, %s108
    %p110 = scmp.eq.s32.totalorder %s21, 0
    %p111 = por %p109, %p110
    %s113 = sadd.s32 %s112, 1
    %p116 = scmp.eq.s32.totalorder %s15, 1
    %p117 = scmp.ne.s32.totalorder %s112, %s114
    %p118 = scmp.eq.s32.totalorder %s15, 0
    %p119 = por %p117, %p118
    %p120 = scmp.ne.s32.totalorder %s112, %s114
    %p121 = scmp.eq.s32.totalorder %s20, 1
    %p122 = por %p120, %p121
    %p123 = scmp.ne.s32.totalorder %s114, %s115
    %p124 = scmp.eq.s32.totalorder %s20, 0
    %p125 = por %p123, %p124
    %p126 = scmp.ne.s32.totalorder %s114, %s115
    %p127 = scmp.eq.s32.totalorder %s21, 1
    %p128 = por %p126, %p127
    %p130 = scmp.ne.s32.totalorder %s115, %s129
    %p131 = scmp.eq.s32.totalorder %s21, 0
    %p132 = por %p130, %p131
    %s134 = sadd.s32 %s133, 1
    %p137 = scmp.eq.s32.totalorder %s15, 1
    %p138 = scmp.ne.s32.totalorder %s133, %s135
    %p139 = scmp.eq.s32.totalorder %s15, 0
    %p140 = por %p138, %p139
    %p141 = scmp.ne.s32.totalorder %s133, %s135
    %p142 = scmp.eq.s32.totalorder %s20, 1
    %p143 = por %p141, %p142
    %p144 = scmp.ne.s32.totalorder %s135, %s136
    %p145 = scmp.eq.s32.totalorder %s20, 0
    %p146 = por %p144, %p145
    %p147 = scmp.ne.s32.totalorder %s135, %s136
    %p148 = scmp.eq.s32.totalorder %s21, 1
    %p149 = por %p147, %p148
    %p151 = scmp.ne.s32.totalorder %s136, %s150
    %p152 = scmp.eq.s32.totalorder %s21, 0
    %p153 = por %p151, %p152
    %s155 = sadd.s32 %s154, 1
    %p158 = scmp.eq.s32.totalorder %s15, 1
    %p159 = scmp.ne.s32.totalorder %s154, %s156
    %p160 = scmp.eq.s32.totalorder %s15, 0
    %p161 = por %p159, %p160
    %p162 = scmp.ne.s32.totalorder %s154, %s156
    %p163 = scmp.eq.s32.totalorder %s20, 1
    %p164 = por %p162, %p163
    %p165 = scmp.ne.s32.totalorder %s156, %s157
    %p166 = scmp.eq.s32.totalorder %s20, 0
    %p167 = por %p165, %p166
    %p168 = scmp.ne.s32.totalorder %s156, %s157
    %p169 = scmp.eq.s32.totalorder %s21, 1
    %p170 = por %p168, %p169
    %p172 = scmp.ne.s32.totalorder %s157, %s171
    %p173 = scmp.eq.s32.totalorder %s21, 0
    %p174 = por %p172, %p173
    %s176 = sadd.s32 %s175, 1
    %p179 = scmp.eq.s32.totalorder %s15, 1
    %p180 = scmp.ne.s32.totalorder %s175, %s177
    %p181 = scmp.eq.s32.totalorder %s15, 0
    %p182 = por %p180, %p181
    %p183 = scmp.ne.s32.totalorder %s175, %s177
    %p184 = scmp.eq.s32.totalorder %s20, 1
    %p185 = por %p183, %p184
    %p186 = scmp.ne.s32.totalorder %s177, %s178
    %p187 = scmp.eq.s32.totalorder %s20, 0
    %p188 = por %p186, %p187
    %p189 = scmp.ne.s32.totalorder %s177, %s178
    %p190 = scmp.eq.s32.totalorder %s21, 1
    %p191 = por %p189, %p190
    %p193 = scmp.ne.s32.totalorder %s178, %s192
    %p194 = scmp.eq.s32.totalorder %s21, 0
    %p195 = por %p193, %p194
    %s197 = sadd.s32 %s196, 1
    %p200 = scmp.eq.s32.totalorder %s15, 1
    %p201 = scmp.ne.s32.totalorder %s196, %s198
    %p202 = scmp.eq.s32.totalorder %s15, 0
    %p203 = por %p201, %p202
    %p204 = scmp.ne.s32.totalorder %s196, %s198
    %p205 = scmp.eq.s32.totalorder %s20, 1
    %p206 = por %p204, %p205
    %p207 = scmp.ne.s32.totalorder %s198, %s199
    %p208 = scmp.eq.s32.totalorder %s20, 0
    %p209 = por %p207, %p208
    %p210 = scmp.ne.s32.totalorder %s198, %s199
    %p211 = scmp.eq.s32.totalorder %s21, 1
    %p212 = por %p210, %p211
    %p214 = scmp.ne.s32.totalorder %s199, %s213
    %p215 = scmp.eq.s32.totalorder %s21, 0
    %p216 = por %p214, %p215
    %s217 = ssub.s32 %s15, %s22
    %p218 = scmp.eq.s32.totalorder %s217, 0
    %s220 = sadd.s32 %s219, 1
    %s221 = scalar_select %p218, %s219, %s220
    %p224 = pneg %p218
    %p225 = scmp.eq.s32.totalorder %s15, 1
    %p226 = por %p224, %p225
    %p227 = scmp.ne.s32.totalorder %s219, %s222
    %p228 = scmp.eq.s32.totalorder %s15, 0
    %p229 = por %p227, %p228
    %p230 = scmp.ne.s32.totalorder %s219, %s222
    %p231 = scmp.eq.s32.totalorder %s20, 1
    %p232 = por %p230, %p231
    %p233 = scmp.ne.s32.totalorder %s222, %s223
    %p234 = scmp.eq.s32.totalorder %s20, 0
    %p235 = por %p233, %p234
    %p236 = scmp.ne.s32.totalorder %s222, %s223
    %p237 = scmp.eq.s32.totalorder %s21, 1
    %p238 = por %p236, %p237
    %p240 = scmp.ne.s32.totalorder %s223, %s239
    %p241 = scmp.eq.s32.totalorder %s21, 0
    %p242 = por %p240, %p241
    %p243 = scmp.le.s32.totalorder 1, %s15
    %p244 = scmp.lt.s32.totalorder %s15, 3
    %p245 = pnand %p243, %p244
    %p246 = pneg %p245
    // Predicated region
    $region9: #{odenet_forward.1} parent=5 // pred_check
      _
    $region10: #{odenet_forward.1} parent=5 // pred_check_branch
      %248 = sbr.rel (%p245) target = $region12
    $region11: #{odenet_forward.1} parent=5 // pred_region
      %s249 = ssub.s32 %s15, 1
      // Predicated region
      $region13: #{odenet_forward.1} parent=11 // pred_check
        %p250 = pneg %p62
      $region14: #{odenet_forward.1} parent=11 // pred_check_branch
        %252 = sbr.rel (%p250) target = $region16
      $region15: #{odenet_forward.1} parent=11 // pred_region
        _
      $region16: #{odenet_forward.1} parent=11 // pred_fallthru
        _
      // Predicated region
      $region17: #{odenet_forward.1} parent=11 // pred_check
        %p253 = pneg %p83
      $region18: #{odenet_forward.1} parent=11 // pred_check_branch
        %255 = sbr.rel (%p253) target = $region20
      $region19: #{odenet_forward.1} parent=11 // pred_region
        _
      $region20: #{odenet_forward.1} parent=11 // pred_fallthru
        _
      // Predicated region
      $region21: #{odenet_forward.1} parent=11 // pred_check
        %p256 = pneg %p104
      $region22: #{odenet_forward.1} parent=11 // pred_check_branch
        %258 = sbr.rel (%p256) target = $region24
      $region23: #{odenet_forward.1} parent=11 // pred_region
        _
      $region24: #{odenet_forward.1} parent=11 // pred_fallthru
        _
      // Predicated region
      $region25: #{odenet_forward.1} parent=11 // pred_check
        %p259 = pneg %p125
      $region26: #{odenet_forward.1} parent=11 // pred_check_branch
        %261 = sbr.rel (%p259) target = $region28
      $region27: #{odenet_forward.1} parent=11 // pred_region
        _
      $region28: #{odenet_forward.1} parent=11 // pred_fallthru
        _
      // Predicated region
      $region29: #{odenet_forward.1} parent=11 // pred_check
        %p262 = pneg %p146
      $region30: #{odenet_forward.1} parent=11 // pred_check_branch
        %264 = sbr.rel (%p262) target = $region32
      $region31: #{odenet_forward.1} parent=11 // pred_region
        _
      $region32: #{odenet_forward.1} parent=11 // pred_fallthru
        _
      // Predicated region
      $region33: #{odenet_forward.1} parent=11 // pred_check
        %p265 = pneg %p167
      $region34: #{odenet_forward.1} parent=11 // pred_check_branch
        %267 = sbr.rel (%p265) target = $region36
      $region35: #{odenet_forward.1} parent=11 // pred_region
        _
      $region36: #{odenet_forward.1} parent=11 // pred_fallthru
        _
      // Predicated region
      $region37: #{odenet_forward.1} parent=11 // pred_check
        %p268 = pneg %p188
      $region38: #{odenet_forward.1} parent=11 // pred_check_branch
        %270 = sbr.rel (%p268) target = $region40
      $region39: #{odenet_forward.1} parent=11 // pred_region
        _
      $region40: #{odenet_forward.1} parent=11 // pred_fallthru
        _
      // Predicated region
      $region41: #{odenet_forward.1} parent=11 // pred_check
        %p271 = pneg %p209
      $region42: #{odenet_forward.1} parent=11 // pred_check_branch
        %273 = sbr.rel (%p271) target = $region44
      $region43: #{odenet_forward.1} parent=11 // pred_region
        _
      $region44: #{odenet_forward.1} parent=11 // pred_fallthru
        _
    $region12: #{odenet_forward.1} parent=5 // pred_fallthru
      _
    %p274 = scmp.lt.s32.totalorder %s15, 2
    // Predicated region
    $region45: #{odenet_forward.1} parent=5 // pred_check
      %p275 = pneg %p274
    $region46: #{odenet_forward.1} parent=5 // pred_check_branch
      %277 = sbr.rel (%p275) target = $region48
    $region47: #{odenet_forward.1} parent=5 // pred_region
      // Predicated region
      $region49: #{odenet_forward.1} parent=47 // pred_check
        %p278 = pneg %p35
      $region50: #{odenet_forward.1} parent=47 // pred_check_branch
        %280 = sbr.rel (%p278) target = $region52
      $region51: #{odenet_forward.1} parent=47 // pred_region
        %s281 = smul.u32 34, %s15
        %p282 = scmp.lt.s32.totalorder %s281, 67
        %s283 = scalar_select %p282, %s281, 67
        %s284 = smul.addr %s283, 4
        %s285 = scalar_lea.vmem %s0, %s284
        %s286 = smul.u32 34, %s15
      $region52: #{odenet_forward.1} parent=47 // pred_fallthru
        _
    $region48: #{odenet_forward.1} parent=5 // pred_fallthru
      _
    %p287 = scmp.le.s32.totalorder 1, %s15
    %p288 = scmp.lt.s32.totalorder %s15, 3
    %p289 = pnand %p287, %p288
    %p290 = pneg %p289
    // Predicated region
    $region53: #{odenet_forward.1} parent=5 // pred_check
      _
    $region54: #{odenet_forward.1} parent=5 // pred_check_branch
      %292 = sbr.rel (%p289) target = $region56
    $region55: #{odenet_forward.1} parent=5 // pred_region
      %s293 = ssub.s32 %s15, 1
      %s294 = smul.u32 34, %s20
      %p295 = scmp.lt.s32.totalorder %s294, 67
      %s296 = scalar_select %p295, %s294, 67
      %s297 = smul.addr %s296, 4
      %s298 = scalar_lea.vmem %s0, %s297
      %p299 = pneg %p41
      %p300 = pneg %p38
      %p301 = pneg %p62
      %p302 = pneg %p59
      %p303 = pneg %p83
      %p304 = pneg %p80
      %p305 = pneg %p104
      %p306 = pneg %p101
      %p307 = pneg %p125
      %p308 = pneg %p122
      %p309 = pneg %p146
      %p310 = pneg %p143
      %p311 = pneg %p167
      %p312 = pneg %p164
      %p313 = pneg %p188
      %p314 = pneg %p185
      %p315 = pneg %p209
      %p316 = pneg %p206
      %p317 = pneg %p235
      %p318 = pneg %p232
      %s319 = smul.u32 34, %s20
      %p320 = scmp.lt.s32.totalorder %s319, 67
      %s321 = scalar_select %p320, %s319, 67
      %s322 = smul.addr %s321, 8
      %s323 = scalar_lea.vmem %s9, %s322
      %s324 = smul.u32 34, %s20
      %p325 = scmp.lt.s32.totalorder %s324, 67
      %s326 = scalar_select %p325, %s324, 67
      %s327 = smul.addr %s326, 4
      %s328 = scalar_lea.vmem %s0, %s327
      %s329 = smul.u32 34, %s20
      %s330 = smul.u32 34, %s20
      %p331 = scmp.lt.s32.totalorder %s330, 67
      %s332 = scalar_select %p331, %s330, 67
      %s333 = smul.addr %s332, 8
      %s334 = scalar_lea.vmem %s9, %s333
      %s335 = smul.u32 34, %s20
      %v337 = vld [vmem:[%s328] sm:$0xf]
      %v338 = vld [vmem:[%s328 + $0x4] sm:$0xf]
      %v339 = vld [vmem:[%s328 + $0x8] sm:$0xf]
      %v340 = vld [vmem:[%s328 + $0xc] sm:$0xf]
      %v341 = vld [vmem:[%s328 + $0x10] sm:$0xf]
      %v342 = vld [vmem:[%s328 + $0x14] sm:$0xf]
      %v343 = vld [vmem:[%s328 + $0x18] sm:$0xf]
      %v344 = vld [vmem:[%s328 + $0x1c] sm:$0xf]
      %v345 = vld [vmem:[%s328 + $0x20] sm:$0xf]
      %v346 = vld [vmem:[%s328 + $0x24] sm:$0xf]
      %v347 = vld [vmem:[%s328 + $0x28] sm:$0xf]
      %v348 = vld [vmem:[%s328 + $0x2c] sm:$0xf]
      %v349 = vld [vmem:[%s328 + $0x30] sm:$0xf]
      %v350 = vld [vmem:[%s328 + $0x34] sm:$0xf]
      %v351 = vld [vmem:[%s328 + $0x38] sm:$0xf]
      %v352 = vld [vmem:[%s328 + $0x3c] sm:$0xf]
      %v353 = vld [vmem:[%s328 + $0x40] sm:$0xf]
      %v354 = vld [vmem:[%s328 + $0x44] sm:$0xf]
      %v355 = vld [vmem:[%s328 + $0x48] sm:$0xf]
      %v356 = vld [vmem:[%s328 + $0x4c] sm:$0xf]
      %v357 = vld [vmem:[%s328 + $0x50] sm:$0xf]
      %v358 = vld [vmem:[%s328 + $0x54] sm:$0xf]
      %v359 = vld [vmem:[%s328 + $0x58] sm:$0xf]
      %v360 = vld [vmem:[%s328 + $0x5c] sm:$0xf]
      %v361 = vld [vmem:[%s328 + $0x60] sm:$0xf]
      %v362 = vld [vmem:[%s328 + $0x64] sm:$0xf]
      %v363 = vld [vmem:[%s328 + $0x68] sm:$0xf]
      %v364 = vld [vmem:[%s328 + $0x6c] sm:$0xf]
      %v365 = vld [vmem:[%s328 + $0x70] sm:$0xf]
      %v366 = vld [vmem:[%s328 + $0x74] sm:$0xf]
      %v367 = vld [vmem:[%s328 + $0x78] sm:$0xf]
      %v368 = vld [vmem:[%s328 + $0x7c] sm:$0xf]
      %v369 = vld [vmem:[%s328 + $0x80] sm:$0xf]
      %v370 = vld [vmem:[%s328 + $0x84] sm:$0xf]
      %v371 = vunpack.c.l.bf16 %v337
      %v372 = vunpack.c.l.bf16 %v338
      %v373 = vunpack.c.l.bf16 %v339
      %v374 = vunpack.c.l.bf16 %v340
      %v375 = vunpack.c.l.bf16 %v341
      %v376 = vunpack.c.l.bf16 %v342
      %v377 = vunpack.c.l.bf16 %v343
      %v378 = vunpack.c.l.bf16 %v344
      %v379 = vunpack.c.l.bf16 %v345
      %v380 = vunpack.c.l.bf16 %v346
      %v381 = vunpack.c.l.bf16 %v347
      %v382 = vunpack.c.l.bf16 %v348
      %v383 = vunpack.c.l.bf16 %v349
      %v384 = vunpack.c.l.bf16 %v350
      %v385 = vunpack.c.l.bf16 %v351
      %v386 = vunpack.c.l.bf16 %v352
      %v387 = vunpack.c.l.bf16 %v353
      %v388 = vunpack.c.l.bf16 %v354
      %v389 = vunpack.c.l.bf16 %v355
      %v390 = vunpack.c.l.bf16 %v356
      %v391 = vunpack.c.l.bf16 %v357
      %v392 = vunpack.c.l.bf16 %v358
      %v393 = vunpack.c.l.bf16 %v359
      %v394 = vunpack.c.l.bf16 %v360
      %v395 = vunpack.c.l.bf16 %v361
      %v396 = vunpack.c.l.bf16 %v362
      %v397 = vunpack.c.l.bf16 %v363
      %v398 = vunpack.c.l.bf16 %v364
      %v399 = vunpack.c.l.bf16 %v365
      %v400 = vunpack.c.l.bf16 %v366
      %v401 = vunpack.c.l.bf16 %v367
      %v402 = vunpack.c.l.bf16 %v368
      %v403 = vunpack.c.l.bf16 %v369
      %v404 = vunpack.c.l.bf16 %v370
      %v405 = vld [vmem:[%s1] sm:$0xf]
      %v406 = vld [vmem:[%s1 + $0x4] sm:$0x1]
      %v407 = vld [vmem:[%s2] sm:$0xff]
      %409 = vset.pattern.permute.xlu0 0
      %410 = vperm.xlu0 %409, %v371
      %v411 = vpop.permute.xlu0 %410
      %414 = vset.pattern.permute.xlu0 0
      %415 = vperm.xlu0 %414, %v372
      %v416 = vpop.permute.xlu0 %415
      %419 = vset.pattern.permute.xlu0 0
      %420 = vperm.xlu0 %419, %v373
      %v421 = vpop.permute.xlu0 %420
      %424 = vset.pattern.permute.xlu0 0
      %425 = vperm.xlu0 %424, %v374
      %v426 = vpop.permute.xlu0 %425
      %429 = vset.pattern.permute.xlu0 0
      %430 = vperm.xlu0 %429, %v375
      %v431 = vpop.permute.xlu0 %430
      %434 = vset.pattern.permute.xlu0 0
      %435 = vperm.xlu0 %434, %v376
      %v436 = vpop.permute.xlu0 %435
      %439 = vset.pattern.permute.xlu0 0
      %440 = vperm.xlu0 %439, %v377
      %v441 = vpop.permute.xlu0 %440
      %444 = vset.pattern.permute.xlu0 0
      %445 = vperm.xlu0 %444, %v378
      %v446 = vpop.permute.xlu0 %445
      %449 = vset.pattern.permute.xlu0 0
      %450 = vperm.xlu0 %449, %v379
      %v451 = vpop.permute.xlu0 %450
      %454 = vset.pattern.permute.xlu0 0
      %455 = vperm.xlu0 %454, %v380
      %v456 = vpop.permute.xlu0 %455
      %459 = vset.pattern.permute.xlu0 0
      %460 = vperm.xlu0 %459, %v381
      %v461 = vpop.permute.xlu0 %460
      %464 = vset.pattern.permute.xlu0 0
      %465 = vperm.xlu0 %464, %v382
      %v466 = vpop.permute.xlu0 %465
      %469 = vset.pattern.permute.xlu0 0
      %470 = vperm.xlu0 %469, %v383
      %v471 = vpop.permute.xlu0 %470
      %474 = vset.pattern.permute.xlu0 0
      %475 = vperm.xlu0 %474, %v384
      %v476 = vpop.permute.xlu0 %475
      %479 = vset.pattern.permute.xlu0 0
      %480 = vperm.xlu0 %479, %v385
      %v481 = vpop.permute.xlu0 %480
      %484 = vset.pattern.permute.xlu0 0
      %485 = vperm.xlu0 %484, %v386
      %v486 = vpop.permute.xlu0 %485
      %489 = vset.pattern.permute.xlu0 0
      %490 = vperm.xlu0 %489, %v387
      %v491 = vpop.permute.xlu0 %490
      %494 = vset.pattern.permute.xlu0 0
      %495 = vperm.xlu0 %494, %v388
      %v496 = vpop.permute.xlu0 %495
      %499 = vset.pattern.permute.xlu0 0
      %500 = vperm.xlu0 %499, %v389
      %v501 = vpop.permute.xlu0 %500
      %504 = vset.pattern.permute.xlu0 0
      %505 = vperm.xlu0 %504, %v390
      %v506 = vpop.permute.xlu0 %505
      %509 = vset.pattern.permute.xlu0 0
      %510 = vperm.xlu0 %509, %v391
      %v511 = vpop.permute.xlu0 %510
      %514 = vset.pattern.permute.xlu0 0
      %515 = vperm.xlu0 %514, %v392
      %v516 = vpop.permute.xlu0 %515
      %519 = vset.pattern.permute.xlu0 0
      %520 = vperm.xlu0 %519, %v393
      %v521 = vpop.permute.xlu0 %520
      %524 = vset.pattern.permute.xlu0 0
      %525 = vperm.xlu0 %524, %v394
      %v526 = vpop.permute.xlu0 %525
      %529 = vset.pattern.permute.xlu0 0
      %530 = vperm.xlu0 %529, %v395
      %v531 = vpop.permute.xlu0 %530
      %534 = vset.pattern.permute.xlu0 0
      %535 = vperm.xlu0 %534, %v396
      %v536 = vpop.permute.xlu0 %535
      %539 = vset.pattern.permute.xlu0 0
      %540 = vperm.xlu0 %539, %v397
      %v541 = vpop.permute.xlu0 %540
      %544 = vset.pattern.permute.xlu0 0
      %545 = vperm.xlu0 %544, %v398
      %v546 = vpop.permute.xlu0 %545
      %549 = vset.pattern.permute.xlu0 0
      %550 = vperm.xlu0 %549, %v399
      %v551 = vpop.permute.xlu0 %550
      %554 = vset.pattern.permute.xlu0 0
      %555 = vperm.xlu0 %554, %v400
      %v556 = vpop.permute.xlu0 %555
      %559 = vset.pattern.permute.xlu0 0
      %560 = vperm.xlu0 %559, %v401
      %v561 = vpop.permute.xlu0 %560
      %564 = vset.pattern.permute.xlu0 0
      %565 = vperm.xlu0 %564, %v402
      %v566 = vpop.permute.xlu0 %565
      %569 = vset.pattern.permute.xlu0 0
      %570 = vperm.xlu0 %569, %v403
      %v571 = vpop.permute.xlu0 %570
      %574 = vset.pattern.permute.xlu0 0
      %575 = vperm.xlu0 %574, %v404
      %v576 = vpop.permute.xlu0 %575
      %v578 = vlaneseq
      %v579 = vshrl.u32 %v578, 7
      %v580 = vsub.s32 1, %v579
      %v581 = vrot.slane %v407, %v580
      %v582 = vmul.f32 %v411, %v581
      %v583 = vmul.f32 %v416, %v581
      %v584 = vmul.f32 %v421, %v581
      %v585 = vmul.f32 %v426, %v581
      %v586 = vmul.f32 %v431, %v581
      %v587 = vmul.f32 %v436, %v581
      %v588 = vmul.f32 %v441, %v581
      %v589 = vmul.f32 %v446, %v581
      %v590 = vmul.f32 %v451, %v581
      %v591 = vmul.f32 %v456, %v581
      %v592 = vmul.f32 %v461, %v581
      %v593 = vmul.f32 %v466, %v581
      %v594 = vmul.f32 %v471, %v581
      %v595 = vmul.f32 %v476, %v581
      %v596 = vmul.f32 %v481, %v581
      %v597 = vmul.f32 %v486, %v581
      %v598 = vmul.f32 %v491, %v581
      %v599 = vmul.f32 %v496, %v581
      %v600 = vmul.f32 %v501, %v581
      %v601 = vmul.f32 %v506, %v581
      %v602 = vmul.f32 %v511, %v581
      %v603 = vmul.f32 %v516, %v581
      %v604 = vmul.f32 %v521, %v581
      %v605 = vmul.f32 %v526, %v581
      %v606 = vmul.f32 %v531, %v581
      %v607 = vmul.f32 %v536, %v581
      %v608 = vmul.f32 %v541, %v581
      %v609 = vmul.f32 %v546, %v581
      %v610 = vmul.f32 %v551, %v581
      %v611 = vmul.f32 %v556, %v581
      %v612 = vmul.f32 %v561, %v581
      %v613 = vmul.f32 %v566, %v581
      %v614 = vmul.f32 %v571, %v581
      %v615 = vmul.f32 %v576, %v581
      %v616 = vlaneseq
      %v617 = vshrl.u32 %v616, 7
      %v618 = vsub.s32 2, %v617
      %v619 = vrot.slane %v407, %v618
      %v620 = vadd.f32 %v582, %v619
      %v621 = vadd.f32 %v583, %v619
      %v622 = vadd.f32 %v584, %v619
      %v623 = vadd.f32 %v585, %v619
      %v624 = vadd.f32 %v586, %v619
      %v625 = vadd.f32 %v587, %v619
      %v626 = vadd.f32 %v588, %v619
      %v627 = vadd.f32 %v589, %v619
      %v628 = vadd.f32 %v590, %v619
      %v629 = vadd.f32 %v591, %v619
      %v630 = vadd.f32 %v592, %v619
      %v631 = vadd.f32 %v593, %v619
      %v632 = vadd.f32 %v594, %v619
      %v633 = vadd.f32 %v595, %v619
      %v634 = vadd.f32 %v596, %v619
      %v635 = vadd.f32 %v597, %v619
      %v636 = vadd.f32 %v598, %v619
      %v637 = vadd.f32 %v599, %v619
      %v638 = vadd.f32 %v600, %v619
      %v639 = vadd.f32 %v601, %v619
      %v640 = vadd.f32 %v602, %v619
      %v641 = vadd.f32 %v603, %v619
      %v642 = vadd.f32 %v604, %v619
      %v643 = vadd.f32 %v605, %v619
      %v644 = vadd.f32 %v606, %v619
      %v645 = vadd.f32 %v607, %v619
      %v646 = vadd.f32 %v608, %v619
      %v647 = vadd.f32 %v609, %v619
      %v648 = vadd.f32 %v610, %v619
      %v649 = vadd.f32 %v611, %v619
      %v650 = vadd.f32 %v612, %v619
      %v651 = vadd.f32 %v613, %v619
      %v652 = vadd.f32 %v614, %v619
      %v653 = vadd.f32 %v615, %v619
      %v654 = vxor.u32 %v620, 2147483648
      %v655 = vxor.u32 %v621, 2147483648
      %v656 = vxor.u32 %v622, 2147483648
      %v657 = vxor.u32 %v623, 2147483648
      %v658 = vxor.u32 %v624, 2147483648
      %v659 = vxor.u32 %v625, 2147483648
      %v660 = vxor.u32 %v626, 2147483648
      %v661 = vxor.u32 %v627, 2147483648
      %v662 = vxor.u32 %v628, 2147483648
      %v663 = vxor.u32 %v629, 2147483648
      %v664 = vxor.u32 %v630, 2147483648
      %v665 = vxor.u32 %v631, 2147483648
      %v666 = vxor.u32 %v632, 2147483648
      %v667 = vxor.u32 %v633, 2147483648
      %v668 = vxor.u32 %v634, 2147483648
      %v669 = vxor.u32 %v635, 2147483648
      %v670 = vxor.u32 %v636, 2147483648
      %v671 = vxor.u32 %v637, 2147483648
      %v672 = vxor.u32 %v638, 2147483648
      %v673 = vxor.u32 %v639, 2147483648
      %v674 = vxor.u32 %v640, 2147483648
      %v675 = vxor.u32 %v641, 2147483648
      %v676 = vxor.u32 %v642, 2147483648
      %v677 = vxor.u32 %v643, 2147483648
      %v678 = vxor.u32 %v644, 2147483648
      %v679 = vxor.u32 %v645, 2147483648
      %v680 = vxor.u32 %v646, 2147483648
      %v681 = vxor.u32 %v647, 2147483648
      %v682 = vxor.u32 %v648, 2147483648
      %v683 = vxor.u32 %v649, 2147483648
      %v684 = vxor.u32 %v650, 2147483648
      %v685 = vxor.u32 %v651, 2147483648
      %v686 = vxor.u32 %v652, 2147483648
      %v687 = vxor.u32 %v653, 2147483648
      %v688 = vmul.f32 %v654, 1.442695
      %v689 = vpow.pop %v688
      %v690 = vmul.f32 %v655, 1.442695
      %v691 = vpow.pop %v690
      %v692 = vmul.f32 %v656, 1.442695
      %v693 = vpow.pop %v692
      %v694 = vmul.f32 %v657, 1.442695
      %v695 = vpow.pop %v694
      %v696 = vmul.f32 %v658, 1.442695
      %v697 = vpow.pop %v696
      %v698 = vmul.f32 %v659, 1.442695
      %v699 = vpow.pop %v698
      %v700 = vmul.f32 %v660, 1.442695
      %v701 = vpow.pop %v700
      %v702 = vmul.f32 %v661, 1.442695
      %v703 = vpow.pop %v702
      %v704 = vmul.f32 %v662, 1.442695
      %v705 = vpow.pop %v704
      %v706 = vmul.f32 %v663, 1.442695
      %v707 = vpow.pop %v706
      %v708 = vmul.f32 %v664, 1.442695
      %v709 = vpow.pop %v708
      %v710 = vmul.f32 %v665, 1.442695
      %v711 = vpow.pop %v710
      %v712 = vmul.f32 %v666, 1.442695
      %v713 = vpow.pop %v712
      %v714 = vmul.f32 %v667, 1.442695
      %v715 = vpow.pop %v714
      %v716 = vmul.f32 %v668, 1.442695
      %v717 = vpow.pop %v716
      %v718 = vmul.f32 %v669, 1.442695
      %v719 = vpow.pop %v718
      %v720 = vmul.f32 %v670, 1.442695
      %v721 = vpow.pop %v720
      %v722 = vmul.f32 %v671, 1.442695
      %v723 = vpow.pop %v722
      %v724 = vmul.f32 %v672, 1.442695
      %v725 = vpow.pop %v724
      %v726 = vmul.f32 %v673, 1.442695
      %v727 = vpow.pop %v726
      %v728 = vmul.f32 %v674, 1.442695
      %v729 = vpow.pop %v728
      %v730 = vmul.f32 %v675, 1.442695
      %v731 = vpow.pop %v730
      %v732 = vmul.f32 %v676, 1.442695
      %v733 = vpow.pop %v732
      %v734 = vmul.f32 %v677, 1.442695
      %v735 = vpow.pop %v734
      %v736 = vmul.f32 %v678, 1.442695
      %v737 = vpow.pop %v736
      %v738 = vmul.f32 %v679, 1.442695
      %v739 = vpow.pop %v738
      %v740 = vmul.f32 %v680, 1.442695
      %v741 = vpow.pop %v740
      %v742 = vmul.f32 %v681, 1.442695
      %v743 = vpow.pop %v742
      %v744 = vmul.f32 %v682, 1.442695
      %v745 = vpow.pop %v744
      %v746 = vmul.f32 %v683, 1.442695
      %v747 = vpow.pop %v746
      %v748 = vmul.f32 %v684, 1.442695
      %v749 = vpow.pop %v748
      %v750 = vmul.f32 %v685, 1.442695
      %v751 = vpow.pop %v750
      %v752 = vmul.f32 %v686, 1.442695
      %v753 = vpow.pop %v752
      %v754 = vmul.f32 %v687, 1.442695
      %v755 = vpow.pop %v754
      %v756 = vadd.f32 %v689, 1.0
      %v757 = vadd.f32 %v691, 1.0
      %v758 = vadd.f32 %v693, 1.0
      %v759 = vadd.f32 %v695, 1.0
      %v760 = vadd.f32 %v697, 1.0
      %v761 = vadd.f32 %v699, 1.0
      %v762 = vadd.f32 %v701, 1.0
      %v763 = vadd.f32 %v703, 1.0
      %v764 = vadd.f32 %v705, 1.0
      %v765 = vadd.f32 %v707, 1.0
      %v766 = vadd.f32 %v709, 1.0
      %v767 = vadd.f32 %v711, 1.0
      %v768 = vadd.f32 %v713, 1.0
      %v769 = vadd.f32 %v715, 1.0
      %v770 = vadd.f32 %v717, 1.0
      %v771 = vadd.f32 %v719, 1.0
      %v772 = vadd.f32 %v721, 1.0
      %v773 = vadd.f32 %v723, 1.0
      %v774 = vadd.f32 %v725, 1.0
      %v775 = vadd.f32 %v727, 1.0
      %v776 = vadd.f32 %v729, 1.0
      %v777 = vadd.f32 %v731, 1.0
      %v778 = vadd.f32 %v733, 1.0
      %v779 = vadd.f32 %v735, 1.0
      %v780 = vadd.f32 %v737, 1.0
      %v781 = vadd.f32 %v739, 1.0
      %v782 = vadd.f32 %v741, 1.0
      %v783 = vadd.f32 %v743, 1.0
      %v784 = vadd.f32 %v745, 1.0
      %v785 = vadd.f32 %v747, 1.0
      %v786 = vadd.f32 %v749, 1.0
      %v787 = vadd.f32 %v751, 1.0
      %v788 = vadd.f32 %v753, 1.0
      %v789 = vadd.f32 %v755, 1.0
      %v790 = vrcp.pop %v756
      %v791 = vmul.f32 1.0, %v790
      %v792 = vrcp.pop %v757
      %v793 = vmul.f32 1.0, %v792
      %v794 = vrcp.pop %v758
      %v795 = vmul.f32 1.0, %v794
      %v796 = vrcp.pop %v759
      %v797 = vmul.f32 1.0, %v796
      %v798 = vrcp.pop %v760
      %v799 = vmul.f32 1.0, %v798
      %v800 = vrcp.pop %v761
      %v801 = vmul.f32 1.0, %v800
      %v802 = vrcp.pop %v762
      %v803 = vmul.f32 1.0, %v802
      %v804 = vrcp.pop %v763
      %v805 = vmul.f32 1.0, %v804
      %v806 = vrcp.pop %v764
      %v807 = vmul.f32 1.0, %v806
      %v808 = vrcp.pop %v765
      %v809 = vmul.f32 1.0, %v808
      %v810 = vrcp.pop %v766
      %v811 = vmul.f32 1.0, %v810
      %v812 = vrcp.pop %v767
      %v813 = vmul.f32 1.0, %v812
      %v814 = vrcp.pop %v768
      %v815 = vmul.f32 1.0, %v814
      %v816 = vrcp.pop %v769
      %v817 = vmul.f32 1.0, %v816
      %v818 = vrcp.pop %v770
      %v819 = vmul.f32 1.0, %v818
      %v820 = vrcp.pop %v771
      %v821 = vmul.f32 1.0, %v820
      %v822 = vrcp.pop %v772
      %v823 = vmul.f32 1.0, %v822
      %v824 = vrcp.pop %v773
      %v825 = vmul.f32 1.0, %v824
      %v826 = vrcp.pop %v774
      %v827 = vmul.f32 1.0, %v826
      %v828 = vrcp.pop %v775
      %v829 = vmul.f32 1.0, %v828
      %v830 = vrcp.pop %v776
      %v831 = vmul.f32 1.0, %v830
      %v832 = vrcp.pop %v777
      %v833 = vmul.f32 1.0, %v832
      %v834 = vrcp.pop %v778
      %v835 = vmul.f32 1.0, %v834
      %v836 = vrcp.pop %v779
      %v837 = vmul.f32 1.0, %v836
      %v838 = vrcp.pop %v780
      %v839 = vmul.f32 1.0, %v838
      %v840 = vrcp.pop %v781
      %v841 = vmul.f32 1.0, %v840
      %v842 = vrcp.pop %v782
      %v843 = vmul.f32 1.0, %v842
      %v844 = vrcp.pop %v783
      %v845 = vmul.f32 1.0, %v844
      %v846 = vrcp.pop %v784
      %v847 = vmul.f32 1.0, %v846
      %v848 = vrcp.pop %v785
      %v849 = vmul.f32 1.0, %v848
      %v850 = vrcp.pop %v786
      %v851 = vmul.f32 1.0, %v850
      %v852 = vrcp.pop %v787
      %v853 = vmul.f32 1.0, %v852
      %v854 = vrcp.pop %v788
      %v855 = vmul.f32 1.0, %v854
      %v856 = vrcp.pop %v789
      %v857 = vmul.f32 1.0, %v856
      %v858 = vlaneseq
      %v859 = vshrl.u32 %v858, 7
      %v860 = vsub.s32 0, %v859
      %v861 = vrot.slane %v407, %v860
      %v862 = vmul.f32 %v861, %v791
      %v863 = vmul.f32 %v861, %v793
      %v864 = vmul.f32 %v861, %v795
      %v865 = vmul.f32 %v861, %v797
      %v866 = vmul.f32 %v861, %v799
      %v867 = vmul.f32 %v861, %v801
      %v868 = vmul.f32 %v861, %v803
      %v869 = vmul.f32 %v861, %v805
      %v870 = vmul.f32 %v861, %v807
      %v871 = vmul.f32 %v861, %v809
      %v872 = vmul.f32 %v861, %v811
      %v873 = vmul.f32 %v861, %v813
      %v874 = vmul.f32 %v861, %v815
      %v875 = vmul.f32 %v861, %v817
      %v876 = vmul.f32 %v861, %v819
      %v877 = vmul.f32 %v861, %v821
      %v878 = vmul.f32 %v861, %v823
      %v879 = vmul.f32 %v861, %v825
      %v880 = vmul.f32 %v861, %v827
      %v881 = vmul.f32 %v861, %v829
      %v882 = vmul.f32 %v861, %v831
      %v883 = vmul.f32 %v861, %v833
      %v884 = vmul.f32 %v861, %v835
      %v885 = vmul.f32 %v861, %v837
      %v886 = vmul.f32 %v861, %v839
      %v887 = vmul.f32 %v861, %v841
      %v888 = vmul.f32 %v861, %v843
      %v889 = vmul.f32 %v861, %v845
      %v890 = vmul.f32 %v861, %v847
      %v891 = vmul.f32 %v861, %v849
      %v892 = vmul.f32 %v861, %v851
      %v893 = vmul.f32 %v861, %v853
      %v894 = vmul.f32 %v861, %v855
      %v895 = vmul.f32 %v861, %v857
      %v896 = vlaneseq
      %v897 = vshrl.u32 %v896, 7
      %v898 = vsub.s32 3, %v897
      %v899 = vrot.slane %v407, %v898
      %v900 = vmul.f32 %v411, %v899
      %v901 = vmul.f32 %v416, %v899
      %v902 = vmul.f32 %v421, %v899
      %v903 = vmul.f32 %v426, %v899
      %v904 = vmul.f32 %v431, %v899
      %v905 = vmul.f32 %v436, %v899
      %v906 = vmul.f32 %v441, %v899
      %v907 = vmul.f32 %v446, %v899
      %v908 = vmul.f32 %v451, %v899
      %v909 = vmul.f32 %v456, %v899
      %v910 = vmul.f32 %v461, %v899
      %v911 = vmul.f32 %v466, %v899
      %v912 = vmul.f32 %v471, %v899
      %v913 = vmul.f32 %v476, %v899
      %v914 = vmul.f32 %v481, %v899
      %v915 = vmul.f32 %v486, %v899
      %v916 = vmul.f32 %v491, %v899
      %v917 = vmul.f32 %v496, %v899
      %v918 = vmul.f32 %v501, %v899
      %v919 = vmul.f32 %v506, %v899
      %v920 = vmul.f32 %v511, %v899
      %v921 = vmul.f32 %v516, %v899
      %v922 = vmul.f32 %v521, %v899
      %v923 = vmul.f32 %v526, %v899
      %v924 = vmul.f32 %v531, %v899
      %v925 = vmul.f32 %v536, %v899
      %v926 = vmul.f32 %v541, %v899
      %v927 = vmul.f32 %v546, %v899
      %v928 = vmul.f32 %v551, %v899
      %v929 = vmul.f32 %v556, %v899
      %v930 = vmul.f32 %v561, %v899
      %v931 = vmul.f32 %v566, %v899
      %v932 = vmul.f32 %v571, %v899
      %v933 = vmul.f32 %v576, %v899
      %v934 = vadd.f32 %v862, %v900
      %v935 = vadd.f32 %v863, %v901
      %v936 = vadd.f32 %v864, %v902
      %v937 = vadd.f32 %v865, %v903
      %v938 = vadd.f32 %v866, %v904
      %v939 = vadd.f32 %v867, %v905
      %v940 = vadd.f32 %v868, %v906
      %v941 = vadd.f32 %v869, %v907
      %v942 = vadd.f32 %v870, %v908
      %v943 = vadd.f32 %v871, %v909
      %v944 = vadd.f32 %v872, %v910
      %v945 = vadd.f32 %v873, %v911
      %v946 = vadd.f32 %v874, %v912
      %v947 = vadd.f32 %v875, %v913
      %v948 = vadd.f32 %v876, %v914
      %v949 = vadd.f32 %v877, %v915
      %v950 = vadd.f32 %v878, %v916
      %v951 = vadd.f32 %v879, %v917
      %v952 = vadd.f32 %v880, %v918
      %v953 = vadd.f32 %v881, %v919
      %v954 = vadd.f32 %v882, %v920
      %v955 = vadd.f32 %v883, %v921
      %v956 = vadd.f32 %v884, %v922
      %v957 = vadd.f32 %v885, %v923
      %v958 = vadd.f32 %v886, %v924
      %v959 = vadd.f32 %v887, %v925
      %v960 = vadd.f32 %v888, %v926
      %v961 = vadd.f32 %v889, %v927
      %v962 = vadd.f32 %v890, %v928
      %v963 = vadd.f32 %v891, %v929
      %v964 = vadd.f32 %v892, %v930
      %v965 = vadd.f32 %v893, %v931
      %v966 = vadd.f32 %v894, %v932
      %v967 = vadd.f32 %v895, %v933
      %v1002 = vunpack.c.l.b16 %v337
      %v1003 = vunpack.c.l.b16 %v338
      %v1004 = vunpack.c.l.b16 %v339
      %v1005 = vunpack.c.l.b16 %v340
      %v1006 = vunpack.c.l.b16 %v341
      %v1007 = vunpack.c.l.b16 %v342
      %v1008 = vunpack.c.l.b16 %v343
      %v1009 = vunpack.c.l.b16 %v344
      %v1010 = vunpack.c.l.b16 %v345
      %v1011 = vunpack.c.l.b16 %v346
      %v1012 = vunpack.c.l.b16 %v347
      %v1013 = vunpack.c.l.b16 %v348
      %v1014 = vunpack.c.l.b16 %v349
      %v1015 = vunpack.c.l.b16 %v350
      %v1016 = vunpack.c.l.b16 %v351
      %v1017 = vunpack.c.l.b16 %v352
      %v1018 = vunpack.c.l.b16 %v353
      %v1019 = vunpack.c.l.b16 %v354
      %v1020 = vunpack.c.l.b16 %v355
      %v1021 = vunpack.c.l.b16 %v356
      %v1022 = vunpack.c.l.b16 %v357
      %v1023 = vunpack.c.l.b16 %v358
      %v1024 = vunpack.c.l.b16 %v359
      %v1025 = vunpack.c.l.b16 %v360
      %v1026 = vunpack.c.l.b16 %v361
      %v1027 = vunpack.c.l.b16 %v362
      %v1028 = vunpack.c.l.b16 %v363
      %v1029 = vunpack.c.l.b16 %v364
      %v1030 = vunpack.c.l.b16 %v365
      %v1031 = vunpack.c.l.b16 %v366
      %v1032 = vunpack.c.l.b16 %v367
      %v1033 = vunpack.c.l.b16 %v368
      %v1034 = vunpack.c.l.b16 %v369
      %v1035 = vunpack.c.l.b16 %v370
      %v1036 = vpack.c.b16 %v1003, %v1002
      %v1037 = vpack.c.b16 %v1005, %v1004
      %v1038 = vpack.c.b16 %v1007, %v1006
      %v1039 = vpack.c.b16 %v1009, %v1008
      %v1040 = vpack.c.b16 %v1011, %v1010
      %v1041 = vpack.c.b16 %v1013, %v1012
      %v1042 = vpack.c.b16 %v1015, %v1014
      %v1043 = vpack.c.b16 %v1017, %v1016
      %v1044 = vpack.c.b16 %v1019, %v1018
      %v1045 = vpack.c.b16 %v1021, %v1020
      %v1046 = vpack.c.b16 %v1023, %v1022
      %v1047 = vpack.c.b16 %v1025, %v1024
      %v1048 = vpack.c.b16 %v1027, %v1026
      %v1049 = vpack.c.b16 %v1029, %v1028
      %v1050 = vpack.c.b16 %v1031, %v1030
      %v1051 = vpack.c.b16 %v1033, %v1032
      %v1052 = vpack.c.b16 %v1035, %v1034
      %v1055 = vunpack.c.l.b16 %v405
      %v1056 = vunpack.c.l.b16 %v406
      %v1057 = vpack.c.b16 %v1056, %v1055
      %vm1058 = vcmask 72704
      %v1060 = vsel %vm1058, %v1036, 0
      %v1063 = vsel %vm1058, %v1037, 0
      %v1066 = vsel %vm1058, %v1038, 0
      %v1069 = vsel %vm1058, %v1039, 0
      %v1072 = vsel %vm1058, %v1040, 0
      %v1075 = vsel %vm1058, %v1041, 0
      %v1078 = vsel %vm1058, %v1042, 0
      %v1081 = vsel %vm1058, %v1043, 0
      %v1084 = vsel %vm1058, %v1044, 0
      %v1087 = vsel %vm1058, %v1045, 0
      %v1090 = vsel %vm1058, %v1046, 0
      %v1093 = vsel %vm1058, %v1047, 0
      %v1096 = vsel %vm1058, %v1048, 0
      %v1099 = vsel %vm1058, %v1049, 0
      %v1102 = vsel %vm1058, %v1050, 0
      %v1105 = vsel %vm1058, %v1051, 0
      %v1108 = vsel %vm1058, %v1052, 0
      %vm1110 = vcmask 1043456
      %vm1111 = vcmask 1044480
      %v1112 = vsel %vm1110, 4294967295, 65535
      %v1113 = vsel %vm1111, %v1112, 0
      %v1115 = vand.u32 %v1057, %v1113
      %1117 = vmatprep.subr.bf16.mxu0 0
      %1118 = vmatpush1.bf16.msra.mxu0 %v1115
      %1119 = vmatprep.subr.bf16.mxu0 0
      %1120 = vmatpush1.bf16.msra.mxu0 0
      %1121 = vmatprep.subr.bf16.mxu0 0
      %1122 = vmatpush1.bf16.msra.mxu0 0
      %1123 = vmatprep.subr.bf16.mxu0 0
      %1124 = vmatpush1.bf16.msra.mxu0 0
      %1125 = vmatprep.subr.bf16.mxu0 0
      %1126 = vmatpush1.bf16.msra.mxu0 0
      %1127 = vmatprep.subr.bf16.mxu0 0
      %1128 = vmatpush1.bf16.msra.mxu0 0
      %1129 = vmatprep.subr.bf16.mxu0 0
      %1130 = vmatpush1.bf16.msra.mxu0 0
      %1131 = vmatprep.subr.bf16.mxu0 0
      %1132 = vmatpush1.bf16.msra.mxu0 0
      %1133 = vmatprep.subr.bf16.mxu0 0
      %1134 = vmatpush1.bf16.msra.mxu0 0
      %1135 = vmatprep.subr.bf16.mxu0 0
      %1136 = vmatpush1.bf16.msra.mxu0 0
      %1137 = vmatprep.subr.bf16.mxu0 0
      %1138 = vmatpush1.bf16.msra.mxu0 0
      %1139 = vmatprep.subr.bf16.mxu0 0
      %1140 = vmatpush1.bf16.msra.mxu0 0
      %1141 = vmatprep.subr.bf16.mxu0 0
      %1142 = vmatpush1.bf16.msra.mxu0 0
      %1143 = vmatprep.subr.bf16.mxu0 0
      %1144 = vmatpush1.bf16.msra.mxu0 0
      %1145 = vmatprep.subr.bf16.mxu0 0
      %1146 = vmatpush1.bf16.msra.mxu0 0
      %1147 = vmatprep.subr.bf16.mxu0 0
      %1148 = vmatpush1.bf16.msra.mxu0 0
      %1149 = vmatprep.mubr.bf16.mxu0 0
      %1150 = vmatmul.mubr.bf16.gmra.mrb[0].mxu0 %v1060
      %v1151 = vpop.f32.mrb[0].mxu0
      %v1152 = vadd.f32 0.0, %v1151
      %v1153 = vpop.f32.mrb[0].mxu0
      %v1154 = vpop.f32.mrb[0].mxu0
      %v1155 = vadd.f32 0.0, %v1154
      %v1156 = vpop.f32.mrb[0].mxu0
      %1157 = vmatprep.mubr.bf16.mxu0 0
      %1158 = vmatmul.mubr.bf16.gmra.mrb[0].mxu0 %v1063
      %v1159 = vpop.f32.mrb[0].mxu0
      %v1160 = vadd.f32 0.0, %v1159
      %v1161 = vpop.f32.mrb[0].mxu0
      %v1162 = vpop.f32.mrb[0].mxu0
      %v1163 = vadd.f32 0.0, %v1162
      %v1164 = vpop.f32.mrb[0].mxu0
      %1165 = vmatprep.mubr.bf16.mxu0 0
      %1166 = vmatmul.mubr.bf16.gmra.mrb[0].mxu0 %v1066
      %v1167 = vpop.f32.mrb[0].mxu0
      %v1168 = vadd.f32 0.0, %v1167
      %v1169 = vpop.f32.mrb[0].mxu0
      %v1170 = vpop.f32.mrb[0].mxu0
      %v1171 = vadd.f32 0.0, %v1170
      %v1172 = vpop.f32.mrb[0].mxu0
      %1173 = vmatprep.mubr.bf16.mxu0 0
      %1174 = vmatmul.mubr.bf16.gmra.mrb[0].mxu0 %v1069
      %v1175 = vpop.f32.mrb[0].mxu0
      %v1176 = vadd.f32 0.0, %v1175
      %v1177 = vpop.f32.mrb[0].mxu0
      %v1178 = vpop.f32.mrb[0].mxu0
      %v1179 = vadd.f32 0.0, %v1178
      %v1180 = vpop.f32.mrb[0].mxu0
      %1181 = vmatprep.mubr.bf16.mxu0 0
      %1182 = vmatmul.mubr.bf16.gmra.mrb[0].mxu0 %v1072
      %v1183 = vpop.f32.mrb[0].mxu0
      %v1184 = vadd.f32 0.0, %v1183
      %v1185 = vpop.f32.mrb[0].mxu0
      %v1186 = vpop.f32.mrb[0].mxu0
      %v1187 = vadd.f32 0.0, %v1186
      %v1188 = vpop.f32.mrb[0].mxu0
      %1189 = vmatprep.mubr.bf16.mxu0 0
      %1190 = vmatmul.mubr.bf16.gmra.mrb[0].mxu0 %v1075
      %v1191 = vpop.f32.mrb[0].mxu0
      %v1192 = vadd.f32 0.0, %v1191
      %v1193 = vpop.f32.mrb[0].mxu0
      %v1194 = vpop.f32.mrb[0].mxu0
      %v1195 = vadd.f32 0.0, %v1194
      %v1196 = vpop.f32.mrb[0].mxu0
      %1197 = vmatprep.mubr.bf16.mxu0 0
      %1198 = vmatmul.mubr.bf16.gmra.mrb[0].mxu0 %v1078
      %v1199 = vpop.f32.mrb[0].mxu0
      %v1200 = vadd.f32 0.0, %v1199
      %v1201 = vpop.f32.mrb[0].mxu0
      %v1202 = vpop.f32.mrb[0].mxu0
      %v1203 = vadd.f32 0.0, %v1202
      %v1204 = vpop.f32.mrb[0].mxu0
      %1205 = vmatprep.mubr.bf16.mxu0 0
      %1206 = vmatmul.mubr.bf16.gmra.mrb[0].mxu0 %v1081
      %v1207 = vpop.f32.mrb[0].mxu0
      %v1208 = vadd.f32 0.0, %v1207
      %v1209 = vpop.f32.mrb[0].mxu0
      %v1210 = vpop.f32.mrb[0].mxu0
      %v1211 = vadd.f32 0.0, %v1210
      %v1212 = vpop.f32.mrb[0].mxu0
      %1213 = vmatprep.mubr.bf16.mxu0 0
      %1214 = vmatmul.mubr.bf16.gmra.mrb[0].mxu0 %v1084
      %v1215 = vpop.f32.mrb[0].mxu0
      %v1216 = vadd.f32 0.0, %v1215
      %v1217 = vpop.f32.mrb[0].mxu0
      %v1218 = vpop.f32.mrb[0].mxu0
      %v1219 = vadd.f32 0.0, %v1218
      %v1220 = vpop.f32.mrb[0].mxu0
      %1221 = vmatprep.mubr.bf16.mxu0 0
      %1222 = vmatmul.mubr.bf16.gmra.mrb[0].mxu0 %v1087
      %v1223 = vpop.f32.mrb[0].mxu0
      %v1224 = vadd.f32 0.0, %v1223
      %v1225 = vpop.f32.mrb[0].mxu0
      %v1226 = vpop.f32.mrb[0].mxu0
      %v1227 = vadd.f32 0.0, %v1226
      %v1228 = vpop.f32.mrb[0].mxu0
      %1229 = vmatprep.mubr.bf16.mxu0 0
      %1230 = vmatmul.mubr.bf16.gmra.mrb[0].mxu0 %v1090
      %v1231 = vpop.f32.mrb[0].mxu0
      %v1232 = vadd.f32 0.0, %v1231
      %v1233 = vpop.f32.mrb[0].mxu0
      %v1234 = vpop.f32.mrb[0].mxu0
      %v1235 = vadd.f32 0.0, %v1234
      %v1236 = vpop.f32.mrb[0].mxu0
      %1237 = vmatprep.mubr.bf16.mxu0 0
      %1238 = vmatmul.mubr.bf16.gmra.mrb[0].mxu0 %v1093
      %v1239 = vpop.f32.mrb[0].mxu0
      %v1240 = vadd.f32 0.0, %v1239
      %v1241 = vpop.f32.mrb[0].mxu0
      %v1242 = vpop.f32.mrb[0].mxu0
      %v1243 = vadd.f32 0.0, %v1242
      %v1244 = vpop.f32.mrb[0].mxu0
      %1245 = vmatprep.mubr.bf16.mxu0 0
      %1246 = vmatmul.mubr.bf16.gmra.mrb[0].mxu0 %v1096
      %v1247 = vpop.f32.mrb[0].mxu0
      %v1248 = vadd.f32 0.0, %v1247
      %v1249 = vpop.f32.mrb[0].mxu0
      %v1250 = vpop.f32.mrb[0].mxu0
      %v1251 = vadd.f32 0.0, %v1250
      %v1252 = vpop.f32.mrb[0].mxu0
      %1253 = vmatprep.mubr.bf16.mxu0 0
      %1254 = vmatmul.mubr.bf16.gmra.mrb[0].mxu0 %v1099
      %v1255 = vpop.f32.mrb[0].mxu0
      %v1256 = vadd.f32 0.0, %v1255
      %v1257 = vpop.f32.mrb[0].mxu0
      %v1258 = vpop.f32.mrb[0].mxu0
      %v1259 = vadd.f32 0.0, %v1258
      %v1260 = vpop.f32.mrb[0].mxu0
      %1261 = vmatprep.mubr.bf16.mxu0 0
      %1262 = vmatmul.mubr.bf16.gmra.mrb[0].mxu0 %v1102
      %v1263 = vpop.f32.mrb[0].mxu0
      %v1264 = vadd.f32 0.0, %v1263
      %v1265 = vpop.f32.mrb[0].mxu0
      %v1266 = vpop.f32.mrb[0].mxu0
      %v1267 = vadd.f32 0.0, %v1266
      %v1268 = vpop.f32.mrb[0].mxu0
      %1269 = vmatprep.mubr.bf16.mxu0 0
      %1270 = vmatmul.mubr.bf16.gmra.mrb[0].mxu0 %v1105
      %v1271 = vpop.f32.mrb[0].mxu0
      %v1272 = vadd.f32 0.0, %v1271
      %v1273 = vpop.f32.mrb[0].mxu0
      %v1274 = vpop.f32.mrb[0].mxu0
      %v1275 = vadd.f32 0.0, %v1274
      %v1276 = vpop.f32.mrb[0].mxu0
      %1277 = vmatprep.mubr.bf16.mxu0 0
      %1278 = vmatmul.mubr.bf16.gmra.mrb[0].mxu0 %v1108
      %v1279 = vpop.f32.mrb[0].mxu0
      %v1280 = vadd.f32 0.0, %v1279
      %v1281 = vpop.f32.mrb[0].mxu0
      %v1282 = vpop.f32.mrb[0].mxu0
      %v1283 = vadd.f32 0.0, %v1282
      %v1284 = vpop.f32.mrb[0].mxu0
      %1285 = vdwg.mxu0
      %v1286 = vmul.f32 %v1152, %v791
      %v1287 = vmul.f32 %v1155, %v793
      %v1288 = vmul.f32 %v1160, %v795
      %v1289 = vmul.f32 %v1163, %v797
      %v1290 = vmul.f32 %v1168, %v799
      %v1291 = vmul.f32 %v1171, %v801
      %v1292 = vmul.f32 %v1176, %v803
      %v1293 = vmul.f32 %v1179, %v805
      %v1294 = vmul.f32 %v1184, %v807
      %v1295 = vmul.f32 %v1187, %v809
      %v1296 = vmul.f32 %v1192, %v811
      %v1297 = vmul.f32 %v1195, %v813
      %v1298 = vmul.f32 %v1200, %v815
      %v1299 = vmul.f32 %v1203, %v817
      %v1300 = vmul.f32 %v1208, %v819
      %v1301 = vmul.f32 %v1211, %v821
      %v1302 = vmul.f32 %v1216, %v823
      %v1303 = vmul.f32 %v1219, %v825
      %v1304 = vmul.f32 %v1224, %v827
      %v1305 = vmul.f32 %v1227, %v829
      %v1306 = vmul.f32 %v1232, %v831
      %v1307 = vmul.f32 %v1235, %v833
      %v1308 = vmul.f32 %v1240, %v835
      %v1309 = vmul.f32 %v1243, %v837
      %v1310 = vmul.f32 %v1248, %v839
      %v1311 = vmul.f32 %v1251, %v841
      %v1312 = vmul.f32 %v1256, %v843
      %v1313 = vmul.f32 %v1259, %v845
      %v1314 = vmul.f32 %v1264, %v847
      %v1315 = vmul.f32 %v1267, %v849
      %v1316 = vmul.f32 %v1272, %v851
      %v1317 = vmul.f32 %v1275, %v853
      %v1318 = vmul.f32 %v1280, %v855
      %v1319 = vmul.f32 %v1283, %v857
      %v1320 = vadd.f32 %v1286, %v934
      %v1321 = vadd.f32 %v1287, %v935
      %v1322 = vadd.f32 %v1288, %v936
      %v1323 = vadd.f32 %v1289, %v937
      %v1324 = vadd.f32 %v1290, %v938
      %v1325 = vadd.f32 %v1291, %v939
      %v1326 = vadd.f32 %v1292, %v940
      %v1327 = vadd.f32 %v1293, %v941
      %v1328 = vadd.f32 %v1294, %v942
      %v1329 = vadd.f32 %v1295, %v943
      %v1330 = vadd.f32 %v1296, %v944
      %v1331 = vadd.f32 %v1297, %v945
      %v1332 = vadd.f32 %v1298, %v946
      %v1333 = vadd.f32 %v1299, %v947
      %v1334 = vadd.f32 %v1300, %v948
      %v1335 = vadd.f32 %v1301, %v949
      %v1336 = vadd.f32 %v1302, %v950
      %v1337 = vadd.f32 %v1303, %v951
      %v1338 = vadd.f32 %v1304, %v952
      %v1339 = vadd.f32 %v1305, %v953
      %v1340 = vadd.f32 %v1306, %v954
      %v1341 = vadd.f32 %v1307, %v955
      %v1342 = vadd.f32 %v1308, %v956
      %v1343 = vadd.f32 %v1309, %v957
      %v1344 = vadd.f32 %v1310, %v958
      %v1345 = vadd.f32 %v1311, %v959
      %v1346 = vadd.f32 %v1312, %v960
      %v1347 = vadd.f32 %v1313, %v961
      %v1348 = vadd.f32 %v1314, %v962
      %v1349 = vadd.f32 %v1315, %v963
      %v1350 = vadd.f32 %v1316, %v964
      %v1351 = vadd.f32 %v1317, %v965
      %v1352 = vadd.f32 %v1318, %v966
      %v1353 = vadd.f32 %v1319, %v967
      %vm1354 = vcmp.gt.f32.partialorder %v1320, 20.0
      %vm1355 = vcmp.gt.f32.partialorder %v1321, 20.0
      %vm1356 = vcmp.gt.f32.partialorder %v1322, 20.0
      %vm1357 = vcmp.gt.f32.partialorder %v1323, 20.0
      %vm1358 = vcmp.gt.f32.partialorder %v1324, 20.0
      %vm1359 = vcmp.gt.f32.partialorder %v1325, 20.0
      %vm1360 = vcmp.gt.f32.partialorder %v1326, 20.0
      %vm1361 = vcmp.gt.f32.partialorder %v1327, 20.0
      %vm1362 = vcmp.gt.f32.partialorder %v1328, 20.0
      %vm1363 = vcmp.gt.f32.partialorder %v1329, 20.0
      %vm1364 = vcmp.gt.f32.partialorder %v1330, 20.0
      %vm1365 = vcmp.gt.f32.partialorder %v1331, 20.0
      %vm1366 = vcmp.gt.f32.partialorder %v1332, 20.0
      %vm1367 = vcmp.gt.f32.partialorder %v1333, 20.0
      %vm1368 = vcmp.gt.f32.partialorder %v1334, 20.0
      %vm1369 = vcmp.gt.f32.partialorder %v1335, 20.0
      %vm1370 = vcmp.gt.f32.partialorder %v1336, 20.0
      %vm1371 = vcmp.gt.f32.partialorder %v1337, 20.0
      %vm1372 = vcmp.gt.f32.partialorder %v1338, 20.0
      %vm1373 = vcmp.gt.f32.partialorder %v1339, 20.0
      %vm1374 = vcmp.gt.f32.partialorder %v1340, 20.0
      %vm1375 = vcmp.gt.f32.partialorder %v1341, 20.0
      %vm1376 = vcmp.gt.f32.partialorder %v1342, 20.0
      %vm1377 = vcmp.gt.f32.partialorder %v1343, 20.0
      %vm1378 = vcmp.gt.f32.partialorder %v1344, 20.0
      %vm1379 = vcmp.gt.f32.partialorder %v1345, 20.0
      %vm1380 = vcmp.gt.f32.partialorder %v1346, 20.0
      %vm1381 = vcmp.gt.f32.partialorder %v1347, 20.0
      %vm1382 = vcmp.gt.f32.partialorder %v1348, 20.0
      %vm1383 = vcmp.gt.f32.partialorder %v1349, 20.0
      %vm1384 = vcmp.gt.f32.partialorder %v1350, 20.0
      %vm1385 = vcmp.gt.f32.partialorder %v1351, 20.0
      %vm1386 = vcmp.gt.f32.partialorder %v1352, 20.0
      %vm1387 = vcmp.gt.f32.partialorder %v1353, 20.0
      %v1388 = vmin.f32 %v1320, 20.0
      %v1389 = vmin.f32 %v1321, 20.0
      %v1390 = vmin.f32 %v1322, 20.0
      %v1391 = vmin.f32 %v1323, 20.0
      %v1392 = vmin.f32 %v1324, 20.0
      %v1393 = vmin.f32 %v1325, 20.0
      %v1394 = vmin.f32 %v1326, 20.0
      %v1395 = vmin.f32 %v1327, 20.0
      %v1396 = vmin.f32 %v1328, 20.0
      %v1397 = vmin.f32 %v1329, 20.0
      %v1398 = vmin.f32 %v1330, 20.0
      %v1399 = vmin.f32 %v1331, 20.0
      %v1400 = vmin.f32 %v1332, 20.0
      %v1401 = vmin.f32 %v1333, 20.0
      %v1402 = vmin.f32 %v1334, 20.0
      %v1403 = vmin.f32 %v1335, 20.0
      %v1404 = vmin.f32 %v1336, 20.0
      %v1405 = vmin.f32 %v1337, 20.0
      %v1406 = vmin.f32 %v1338, 20.0
      %v1407 = vmin.f32 %v1339, 20.0
      %v1408 = vmin.f32 %v1340, 20.0
      %v1409 = vmin.f32 %v1341, 20.0
      %v1410 = vmin.f32 %v1342, 20.0
      %v1411 = vmin.f32 %v1343, 20.0
      %v1412 = vmin.f32 %v1344, 20.0
      %v1413 = vmin.f32 %v1345, 20.0
      %v1414 = vmin.f32 %v1346, 20.0
      %v1415 = vmin.f32 %v1347, 20.0
      %v1416 = vmin.f32 %v1348, 20.0
      %v1417 = vmin.f32 %v1349, 20.0
      %v1418 = vmin.f32 %v1350, 20.0
      %v1419 = vmin.f32 %v1351, 20.0
      %v1420 = vmin.f32 %v1352, 20.0
      %v1421 = vmin.f32 %v1353, 20.0
      %v1422 = vmul.f32 %v1388, 1.442695
      %v1423 = vpow.pop %v1422
      %v1424 = vmul.f32 %v1389, 1.442695
      %v1425 = vpow.pop %v1424
      %v1426 = vmul.f32 %v1390, 1.442695
      %v1427 = vpow.pop %v1426
      %v1428 = vmul.f32 %v1391, 1.442695
      %v1429 = vpow.pop %v1428
      %v1430 = vmul.f32 %v1392, 1.442695
      %v1431 = vpow.pop %v1430
      %v1432 = vmul.f32 %v1393, 1.442695
      %v1433 = vpow.pop %v1432
      %v1434 = vmul.f32 %v1394, 1.442695
      %v1435 = vpow.pop %v1434
      %v1436 = vmul.f32 %v1395, 1.442695
      %v1437 = vpow.pop %v1436
      %v1438 = vmul.f32 %v1396, 1.442695
      %v1439 = vpow.pop %v1438
      %v1440 = vmul.f32 %v1397, 1.442695
      %v1441 = vpow.pop %v1440
      %v1442 = vmul.f32 %v1398, 1.442695
      %v1443 = vpow.pop %v1442
      %v1444 = vmul.f32 %v1399, 1.442695
      %v1445 = vpow.pop %v1444
      %v1446 = vmul.f32 %v1400, 1.442695
      %v1447 = vpow.pop %v1446
      %v1448 = vmul.f32 %v1401, 1.442695
      %v1449 = vpow.pop %v1448
      %v1450 = vmul.f32 %v1402, 1.442695
      %v1451 = vpow.pop %v1450
      %v1452 = vmul.f32 %v1403, 1.442695
      %v1453 = vpow.pop %v1452
      %v1454 = vmul.f32 %v1404, 1.442695
      %v1455 = vpow.pop %v1454
      %v1456 = vmul.f32 %v1405, 1.442695
      %v1457 = vpow.pop %v1456
      %v1458 = vmul.f32 %v1406, 1.442695
      %v1459 = vpow.pop %v1458
      %v1460 = vmul.f32 %v1407, 1.442695
      %v1461 = vpow.pop %v1460
      %v1462 = vmul.f32 %v1408, 1.442695
      %v1463 = vpow.pop %v1462
      %v1464 = vmul.f32 %v1409, 1.442695
      %v1465 = vpow.pop %v1464
      %v1466 = vmul.f32 %v1410, 1.442695
      %v1467 = vpow.pop %v1466
      %v1468 = vmul.f32 %v1411, 1.442695
      %v1469 = vpow.pop %v1468
      %v1470 = vmul.f32 %v1412, 1.442695
      %v1471 = vpow.pop %v1470
      %v1472 = vmul.f32 %v1413, 1.442695
      %v1473 = vpow.pop %v1472
      %v1474 = vmul.f32 %v1414, 1.442695
      %v1475 = vpow.pop %v1474
      %v1476 = vmul.f32 %v1415, 1.442695
      %v1477 = vpow.pop %v1476
      %v1478 = vmul.f32 %v1416, 1.442695
      %v1479 = vpow.pop %v1478
      %v1480 = vmul.f32 %v1417, 1.442695
      %v1481 = vpow.pop %v1480
      %v1482 = vmul.f32 %v1418, 1.442695
      %v1483 = vpow.pop %v1482
      %v1484 = vmul.f32 %v1419, 1.442695
      %v1485 = vpow.pop %v1484
      %v1486 = vmul.f32 %v1420, 1.442695
      %v1487 = vpow.pop %v1486
      %v1488 = vmul.f32 %v1421, 1.442695
      %v1489 = vpow.pop %v1488
      %v1490 = vadd.f32 %v1423, 1.0
      %v1491 = vlog2.pop %v1490
      %v1492 = vmul.f32 %v1491, 0.6931472
      %v1493 = vmul.f32 -0.5, %v1423
      %v1494 = vadd.f32 %v1493, 1.0
      %v1495 = vmul.f32 %v1494, %v1423
      %v1496 = vand.u32 2147483647, %v1423
      %vm1497 = vcmp.lt.f32.partialorder %v1496, 0.0004427343
      %v1498 = vsel %vm1497, %v1495, %v1492
      %v1499 = vadd.f32 %v1425, 1.0
      %v1500 = vlog2.pop %v1499
      %v1501 = vmul.f32 %v1500, 0.6931472
      %v1502 = vmul.f32 -0.5, %v1425
      %v1503 = vadd.f32 %v1502, 1.0
      %v1504 = vmul.f32 %v1503, %v1425
      %v1505 = vand.u32 2147483647, %v1425
      %vm1506 = vcmp.lt.f32.partialorder %v1505, 0.0004427343
      %v1507 = vsel %vm1506, %v1504, %v1501
      %v1508 = vadd.f32 %v1427, 1.0
      %v1509 = vlog2.pop %v1508
      %v1510 = vmul.f32 %v1509, 0.6931472
      %v1511 = vmul.f32 -0.5, %v1427
      %v1512 = vadd.f32 %v1511, 1.0
      %v1513 = vmul.f32 %v1512, %v1427
      %v1514 = vand.u32 2147483647, %v1427
      %vm1515 = vcmp.lt.f32.partialorder %v1514, 0.0004427343
      %v1516 = vsel %vm1515, %v1513, %v1510
      %v1517 = vadd.f32 %v1429, 1.0
      %v1518 = vlog2.pop %v1517
      %v1519 = vmul.f32 %v1518, 0.6931472
      %v1520 = vmul.f32 -0.5, %v1429
      %v1521 = vadd.f32 %v1520, 1.0
      %v1522 = vmul.f32 %v1521, %v1429
      %v1523 = vand.u32 2147483647, %v1429
      %vm1524 = vcmp.lt.f32.partialorder %v1523, 0.0004427343
      %v1525 = vsel %vm1524, %v1522, %v1519
      %v1526 = vadd.f32 %v1431, 1.0
      %v1527 = vlog2.pop %v1526
      %v1528 = vmul.f32 %v1527, 0.6931472
      %v1529 = vmul.f32 -0.5, %v1431
      %v1530 = vadd.f32 %v1529, 1.0
      %v1531 = vmul.f32 %v1530, %v1431
      %v1532 = vand.u32 2147483647, %v1431
      %vm1533 = vcmp.lt.f32.partialorder %v1532, 0.0004427343
      %v1534 = vsel %vm1533, %v1531, %v1528
      %v1535 = vadd.f32 %v1433, 1.0
      %v1536 = vlog2.pop %v1535
      %v1537 = vmul.f32 %v1536, 0.6931472
      %v1538 = vmul.f32 -0.5, %v1433
      %v1539 = vadd.f32 %v1538, 1.0
      %v1540 = vmul.f32 %v1539, %v1433
      %v1541 = vand.u32 2147483647, %v1433
      %vm1542 = vcmp.lt.f32.partialorder %v1541, 0.0004427343
      %v1543 = vsel %vm1542, %v1540, %v1537
      %v1544 = vadd.f32 %v1435, 1.0
      %v1545 = vlog2.pop %v1544
      %v1546 = vmul.f32 %v1545, 0.6931472
      %v1547 = vmul.f32 -0.5, %v1435
      %v1548 = vadd.f32 %v1547, 1.0
      %v1549 = vmul.f32 %v1548, %v1435
      %v1550 = vand.u32 2147483647, %v1435
      %vm1551 = vcmp.lt.f32.partialorder %v1550, 0.0004427343
      %v1552 = vsel %vm1551, %v1549, %v1546
      %v1553 = vadd.f32 %v1437, 1.0
      %v1554 = vlog2.pop %v1553
      %v1555 = vmul.f32 %v1554, 0.6931472
      %v1556 = vmul.f32 -0.5, %v1437
      %v1557 = vadd.f32 %v1556, 1.0
      %v1558 = vmul.f32 %v1557, %v1437
      %v1559 = vand.u32 2147483647, %v1437
      %vm1560 = vcmp.lt.f32.partialorder %v1559, 0.0004427343
      %v1561 = vsel %vm1560, %v1558, %v1555
      %v1562 = vadd.f32 %v1439, 1.0
      %v1563 = vlog2.pop %v1562
      %v1564 = vmul.f32 %v1563, 0.6931472
      %v1565 = vmul.f32 -0.5, %v1439
      %v1566 = vadd.f32 %v1565, 1.0
      %v1567 = vmul.f32 %v1566, %v1439
      %v1568 = vand.u32 2147483647, %v1439
      %vm1569 = vcmp.lt.f32.partialorder %v1568, 0.0004427343
      %v1570 = vsel %vm1569, %v1567, %v1564
      %v1571 = vadd.f32 %v1441, 1.0
      %v1572 = vlog2.pop %v1571
      %v1573 = vmul.f32 %v1572, 0.6931472
      %v1574 = vmul.f32 -0.5, %v1441
      %v1575 = vadd.f32 %v1574, 1.0
      %v1576 = vmul.f32 %v1575, %v1441
      %v1577 = vand.u32 2147483647, %v1441
      %vm1578 = vcmp.lt.f32.partialorder %v1577, 0.0004427343
      %v1579 = vsel %vm1578, %v1576, %v1573
      %v1580 = vadd.f32 %v1443, 1.0
      %v1581 = vlog2.pop %v1580
      %v1582 = vmul.f32 %v1581, 0.6931472
      %v1583 = vmul.f32 -0.5, %v1443
      %v1584 = vadd.f32 %v1583, 1.0
      %v1585 = vmul.f32 %v1584, %v1443
      %v1586 = vand.u32 2147483647, %v1443
      %vm1587 = vcmp.lt.f32.partialorder %v1586, 0.0004427343
      %v1588 = vsel %vm1587, %v1585, %v1582
      %v1589 = vadd.f32 %v1445, 1.0
      %v1590 = vlog2.pop %v1589
      %v1591 = vmul.f32 %v1590, 0.6931472
      %v1592 = vmul.f32 -0.5, %v1445
      %v1593 = vadd.f32 %v1592, 1.0
      %v1594 = vmul.f32 %v1593, %v1445
      %v1595 = vand.u32 2147483647, %v1445
      %vm1596 = vcmp.lt.f32.partialorder %v1595, 0.0004427343
      %v1597 = vsel %vm1596, %v1594, %v1591
      %v1598 = vadd.f32 %v1447, 1.0
      %v1599 = vlog2.pop %v1598
      %v1600 = vmul.f32 %v1599, 0.6931472
      %v1601 = vmul.f32 -0.5, %v1447
      %v1602 = vadd.f32 %v1601, 1.0
      %v1603 = vmul.f32 %v1602, %v1447
      %v1604 = vand.u32 2147483647, %v1447
      %vm1605 = vcmp.lt.f32.partialorder %v1604, 0.0004427343
      %v1606 = vsel %vm1605, %v1603, %v1600
      %v1607 = vadd.f32 %v1449, 1.0
      %v1608 = vlog2.pop %v1607
      %v1609 = vmul.f32 %v1608, 0.6931472
      %v1610 = vmul.f32 -0.5, %v1449
      %v1611 = vadd.f32 %v1610, 1.0
      %v1612 = vmul.f32 %v1611, %v1449
      %v1613 = vand.u32 2147483647, %v1449
      %vm1614 = vcmp.lt.f32.partialorder %v1613, 0.0004427343
      %v1615 = vsel %vm1614, %v1612, %v1609
      %v1616 = vadd.f32 %v1451, 1.0
      %v1617 = vlog2.pop %v1616
      %v1618 = vmul.f32 %v1617, 0.6931472
      %v1619 = vmul.f32 -0.5, %v1451
      %v1620 = vadd.f32 %v1619, 1.0
      %v1621 = vmul.f32 %v1620, %v1451
      %v1622 = vand.u32 2147483647, %v1451
      %vm1623 = vcmp.lt.f32.partialorder %v1622, 0.0004427343
      %v1624 = vsel %vm1623, %v1621, %v1618
      %v1625 = vadd.f32 %v1453, 1.0
      %v1626 = vlog2.pop %v1625
      %v1627 = vmul.f32 %v1626, 0.6931472
      %v1628 = vmul.f32 -0.5, %v1453
      %v1629 = vadd.f32 %v1628, 1.0
      %v1630 = vmul.f32 %v1629, %v1453
      %v1631 = vand.u32 2147483647, %v1453
      %vm1632 = vcmp.lt.f32.partialorder %v1631, 0.0004427343
      %v1633 = vsel %vm1632, %v1630, %v1627
      %v1634 = vadd.f32 %v1455, 1.0
      %v1635 = vlog2.pop %v1634
      %v1636 = vmul.f32 %v1635, 0.6931472
      %v1637 = vmul.f32 -0.5, %v1455
      %v1638 = vadd.f32 %v1637, 1.0
      %v1639 = vmul.f32 %v1638, %v1455
      %v1640 = vand.u32 2147483647, %v1455
      %vm1641 = vcmp.lt.f32.partialorder %v1640, 0.0004427343
      %v1642 = vsel %vm1641, %v1639, %v1636
      %v1643 = vadd.f32 %v1457, 1.0
      %v1644 = vlog2.pop %v1643
      %v1645 = vmul.f32 %v1644, 0.6931472
      %v1646 = vmul.f32 -0.5, %v1457
      %v1647 = vadd.f32 %v1646, 1.0
      %v1648 = vmul.f32 %v1647, %v1457
      %v1649 = vand.u32 2147483647, %v1457
      %vm1650 = vcmp.lt.f32.partialorder %v1649, 0.0004427343
      %v1651 = vsel %vm1650, %v1648, %v1645
      %v1652 = vadd.f32 %v1459, 1.0
      %v1653 = vlog2.pop %v1652
      %v1654 = vmul.f32 %v1653, 0.6931472
      %v1655 = vmul.f32 -0.5, %v1459
      %v1656 = vadd.f32 %v1655, 1.0
      %v1657 = vmul.f32 %v1656, %v1459
      %v1658 = vand.u32 2147483647, %v1459
      %vm1659 = vcmp.lt.f32.partialorder %v1658, 0.0004427343
      %v1660 = vsel %vm1659, %v1657, %v1654
      %v1661 = vadd.f32 %v1461, 1.0
      %v1662 = vlog2.pop %v1661
      %v1663 = vmul.f32 %v1662, 0.6931472
      %v1664 = vmul.f32 -0.5, %v1461
      %v1665 = vadd.f32 %v1664, 1.0
      %v1666 = vmul.f32 %v1665, %v1461
      %v1667 = vand.u32 2147483647, %v1461
      %vm1668 = vcmp.lt.f32.partialorder %v1667, 0.0004427343
      %v1669 = vsel %vm1668, %v1666, %v1663
      %v1670 = vadd.f32 %v1463, 1.0
      %v1671 = vlog2.pop %v1670
      %v1672 = vmul.f32 %v1671, 0.6931472
      %v1673 = vmul.f32 -0.5, %v1463
      %v1674 = vadd.f32 %v1673, 1.0
      %v1675 = vmul.f32 %v1674, %v1463
      %v1676 = vand.u32 2147483647, %v1463
      %vm1677 = vcmp.lt.f32.partialorder %v1676, 0.0004427343
      %v1678 = vsel %vm1677, %v1675, %v1672
      %v1679 = vadd.f32 %v1465, 1.0
      %v1680 = vlog2.pop %v1679
      %v1681 = vmul.f32 %v1680, 0.6931472
      %v1682 = vmul.f32 -0.5, %v1465
      %v1683 = vadd.f32 %v1682, 1.0
      %v1684 = vmul.f32 %v1683, %v1465
      %v1685 = vand.u32 2147483647, %v1465
      %vm1686 = vcmp.lt.f32.partialorder %v1685, 0.0004427343
      %v1687 = vsel %vm1686, %v1684, %v1681
      %v1688 = vadd.f32 %v1467, 1.0
      %v1689 = vlog2.pop %v1688
      %v1690 = vmul.f32 %v1689, 0.6931472
      %v1691 = vmul.f32 -0.5, %v1467
      %v1692 = vadd.f32 %v1691, 1.0
      %v1693 = vmul.f32 %v1692, %v1467
      %v1694 = vand.u32 2147483647, %v1467
      %vm1695 = vcmp.lt.f32.partialorder %v1694, 0.0004427343
      %v1696 = vsel %vm1695, %v1693, %v1690
      %v1697 = vadd.f32 %v1469, 1.0
      %v1698 = vlog2.pop %v1697
      %v1699 = vmul.f32 %v1698, 0.6931472
      %v1700 = vmul.f32 -0.5, %v1469
      %v1701 = vadd.f32 %v1700, 1.0
      %v1702 = vmul.f32 %v1701, %v1469
      %v1703 = vand.u32 2147483647, %v1469
      %vm1704 = vcmp.lt.f32.partialorder %v1703, 0.0004427343
      %v1705 = vsel %vm1704, %v1702, %v1699
      %v1706 = vadd.f32 %v1471, 1.0
      %v1707 = vlog2.pop %v1706
      %v1708 = vmul.f32 %v1707, 0.6931472
      %v1709 = vmul.f32 -0.5, %v1471
      %v1710 = vadd.f32 %v1709, 1.0
      %v1711 = vmul.f32 %v1710, %v1471
      %v1712 = vand.u32 2147483647, %v1471
      %vm1713 = vcmp.lt.f32.partialorder %v1712, 0.0004427343
      %v1714 = vsel %vm1713, %v1711, %v1708
      %v1715 = vadd.f32 %v1473, 1.0
      %v1716 = vlog2.pop %v1715
      %v1717 = vmul.f32 %v1716, 0.6931472
      %v1718 = vmul.f32 -0.5, %v1473
      %v1719 = vadd.f32 %v1718, 1.0
      %v1720 = vmul.f32 %v1719, %v1473
      %v1721 = vand.u32 2147483647, %v1473
      %vm1722 = vcmp.lt.f32.partialorder %v1721, 0.0004427343
      %v1723 = vsel %vm1722, %v1720, %v1717
      %v1724 = vadd.f32 %v1475, 1.0
      %v1725 = vlog2.pop %v1724
      %v1726 = vmul.f32 %v1725, 0.6931472
      %v1727 = vmul.f32 -0.5, %v1475
      %v1728 = vadd.f32 %v1727, 1.0
      %v1729 = vmul.f32 %v1728, %v1475
      %v1730 = vand.u32 2147483647, %v1475
      %vm1731 = vcmp.lt.f32.partialorder %v1730, 0.0004427343
      %v1732 = vsel %vm1731, %v1729, %v1726
      %v1733 = vadd.f32 %v1477, 1.0
      %v1734 = vlog2.pop %v1733
      %v1735 = vmul.f32 %v1734, 0.6931472
      %v1736 = vmul.f32 -0.5, %v1477
      %v1737 = vadd.f32 %v1736, 1.0
      %v1738 = vmul.f32 %v1737, %v1477
      %v1739 = vand.u32 2147483647, %v1477
      %vm1740 = vcmp.lt.f32.partialorder %v1739, 0.0004427343
      %v1741 = vsel %vm1740, %v1738, %v1735
      %v1742 = vadd.f32 %v1479, 1.0
      %v1743 = vlog2.pop %v1742
      %v1744 = vmul.f32 %v1743, 0.6931472
      %v1745 = vmul.f32 -0.5, %v1479
      %v1746 = vadd.f32 %v1745, 1.0
      %v1747 = vmul.f32 %v1746, %v1479
      %v1748 = vand.u32 2147483647, %v1479
      %vm1749 = vcmp.lt.f32.partialorder %v1748, 0.0004427343
      %v1750 = vsel %vm1749, %v1747, %v1744
      %v1751 = vadd.f32 %v1481, 1.0
      %v1752 = vlog2.pop %v1751
      %v1753 = vmul.f32 %v1752, 0.6931472
      %v1754 = vmul.f32 -0.5, %v1481
      %v1755 = vadd.f32 %v1754, 1.0
      %v1756 = vmul.f32 %v1755, %v1481
      %v1757 = vand.u32 2147483647, %v1481
      %vm1758 = vcmp.lt.f32.partialorder %v1757, 0.0004427343
      %v1759 = vsel %vm1758, %v1756, %v1753
      %v1760 = vadd.f32 %v1483, 1.0
      %v1761 = vlog2.pop %v1760
      %v1762 = vmul.f32 %v1761, 0.6931472
      %v1763 = vmul.f32 -0.5, %v1483
      %v1764 = vadd.f32 %v1763, 1.0
      %v1765 = vmul.f32 %v1764, %v1483
      %v1766 = vand.u32 2147483647, %v1483
      %vm1767 = vcmp.lt.f32.partialorder %v1766, 0.0004427343
      %v1768 = vsel %vm1767, %v1765, %v1762
      %v1769 = vadd.f32 %v1485, 1.0
      %v1770 = vlog2.pop %v1769
      %v1771 = vmul.f32 %v1770, 0.6931472
      %v1772 = vmul.f32 -0.5, %v1485
      %v1773 = vadd.f32 %v1772, 1.0
      %v1774 = vmul.f32 %v1773, %v1485
      %v1775 = vand.u32 2147483647, %v1485
      %vm1776 = vcmp.lt.f32.partialorder %v1775, 0.0004427343
      %v1777 = vsel %vm1776, %v1774, %v1771
      %v1778 = vadd.f32 %v1487, 1.0
      %v1779 = vlog2.pop %v1778
      %v1780 = vmul.f32 %v1779, 0.6931472
      %v1781 = vmul.f32 -0.5, %v1487
      %v1782 = vadd.f32 %v1781, 1.0
      %v1783 = vmul.f32 %v1782, %v1487
      %v1784 = vand.u32 2147483647, %v1487
      %vm1785 = vcmp.lt.f32.partialorder %v1784, 0.0004427343
      %v1786 = vsel %vm1785, %v1783, %v1780
      %v1787 = vadd.f32 %v1489, 1.0
      %v1788 = vlog2.pop %v1787
      %v1789 = vmul.f32 %v1788, 0.6931472
      %v1790 = vmul.f32 -0.5, %v1489
      %v1791 = vadd.f32 %v1790, 1.0
      %v1792 = vmul.f32 %v1791, %v1489
      %v1793 = vand.u32 2147483647, %v1489
      %vm1794 = vcmp.lt.f32.partialorder %v1793, 0.0004427343
      %v1795 = vsel %vm1794, %v1792, %v1789
      %v1796 = vsel %vm1354, %v1320, %v1498
      %v1797 = vsel %vm1355, %v1321, %v1507
      %v1798 = vsel %vm1356, %v1322, %v1516
      %v1799 = vsel %vm1357, %v1323, %v1525
      %v1800 = vsel %vm1358, %v1324, %v1534
      %v1801 = vsel %vm1359, %v1325, %v1543
      %v1802 = vsel %vm1360, %v1326, %v1552
      %v1803 = vsel %vm1361, %v1327, %v1561
      %v1804 = vsel %vm1362, %v1328, %v1570
      %v1805 = vsel %vm1363, %v1329, %v1579
      %v1806 = vsel %vm1364, %v1330, %v1588
      %v1807 = vsel %vm1365, %v1331, %v1597
      %v1808 = vsel %vm1366, %v1332, %v1606
      %v1809 = vsel %vm1367, %v1333, %v1615
      %v1810 = vsel %vm1368, %v1334, %v1624
      %v1811 = vsel %vm1369, %v1335, %v1633
      %v1812 = vsel %vm1370, %v1336, %v1642
      %v1813 = vsel %vm1371, %v1337, %v1651
      %v1814 = vsel %vm1372, %v1338, %v1660
      %v1815 = vsel %vm1373, %v1339, %v1669
      %v1816 = vsel %vm1374, %v1340, %v1678
      %v1817 = vsel %vm1375, %v1341, %v1687
      %v1818 = vsel %vm1376, %v1342, %v1696
      %v1819 = vsel %vm1377, %v1343, %v1705
      %v1820 = vsel %vm1378, %v1344, %v1714
      %v1821 = vsel %vm1379, %v1345, %v1723
      %v1822 = vsel %vm1380, %v1346, %v1732
      %v1823 = vsel %vm1381, %v1347, %v1741
      %v1824 = vsel %vm1382, %v1348, %v1750
      %v1825 = vsel %vm1383, %v1349, %v1759
      %v1826 = vsel %vm1384, %v1350, %v1768
      %v1827 = vsel %vm1385, %v1351, %v1777
      %v1828 = vsel %vm1386, %v1352, %v1786
      %v1829 = vsel %vm1387, %v1353, %v1795
      %v1830 = vld [vmem:[%s3] sm:$0xf]
      %v1831 = vld [vmem:[%s3 + $0x4] sm:$0xf]
      %v1832 = vld [vmem:[%s3 + $0x8] sm:$0xf]
      %v1833 = vld [vmem:[%s3 + $0xc] sm:$0xf]
      %v1834 = vld [vmem:[%s4] sm:$0xff]
      %v1835 = vlaneseq
      %v1836 = vshrl.u32 %v1835, 7
      %v1837 = vsub.s32 1, %v1836
      %v1838 = vrot.slane %v1834, %v1837
      %v1839 = vmul.f32 %v411, %v1838
      %v1840 = vmul.f32 %v416, %v1838
      %v1841 = vmul.f32 %v421, %v1838
      %v1842 = vmul.f32 %v426, %v1838
      %v1843 = vmul.f32 %v431, %v1838
      %v1844 = vmul.f32 %v436, %v1838
      %v1845 = vmul.f32 %v441, %v1838
      %v1846 = vmul.f32 %v446, %v1838
      %v1847 = vmul.f32 %v451, %v1838
      %v1848 = vmul.f32 %v456, %v1838
      %v1849 = vmul.f32 %v461, %v1838
      %v1850 = vmul.f32 %v466, %v1838
      %v1851 = vmul.f32 %v471, %v1838
      %v1852 = vmul.f32 %v476, %v1838
      %v1853 = vmul.f32 %v481, %v1838
      %v1854 = vmul.f32 %v486, %v1838
      %v1855 = vmul.f32 %v491, %v1838
      %v1856 = vmul.f32 %v496, %v1838
      %v1857 = vmul.f32 %v501, %v1838
      %v1858 = vmul.f32 %v506, %v1838
      %v1859 = vmul.f32 %v511, %v1838
      %v1860 = vmul.f32 %v516, %v1838
      %v1861 = vmul.f32 %v521, %v1838
      %v1862 = vmul.f32 %v526, %v1838
      %v1863 = vmul.f32 %v531, %v1838
      %v1864 = vmul.f32 %v536, %v1838
      %v1865 = vmul.f32 %v541, %v1838
      %v1866 = vmul.f32 %v546, %v1838
      %v1867 = vmul.f32 %v551, %v1838
      %v1868 = vmul.f32 %v556, %v1838
      %v1869 = vmul.f32 %v561, %v1838
      %v1870 = vmul.f32 %v566, %v1838
      %v1871 = vmul.f32 %v571, %v1838
      %v1872 = vmul.f32 %v576, %v1838
      %v1873 = vlaneseq
      %v1874 = vshrl.u32 %v1873, 7
      %v1875 = vsub.s32 2, %v1874
      %v1876 = vrot.slane %v1834, %v1875
      %v1877 = vadd.f32 %v1839, %v1876
      %v1878 = vadd.f32 %v1840, %v1876
      %v1879 = vadd.f32 %v1841, %v1876
      %v1880 = vadd.f32 %v1842, %v1876
      %v1881 = vadd.f32 %v1843, %v1876
      %v1882 = vadd.f32 %v1844, %v1876
      %v1883 = vadd.f32 %v1845, %v1876
      %v1884 = vadd.f32 %v1846, %v1876
      %v1885 = vadd.f32 %v1847, %v1876
      %v1886 = vadd.f32 %v1848, %v1876
      %v1887 = vadd.f32 %v1849, %v1876
      %v1888 = vadd.f32 %v1850, %v1876
      %v1889 = vadd.f32 %v1851, %v1876
      %v1890 = vadd.f32 %v1852, %v1876
      %v1891 = vadd.f32 %v1853, %v1876
      %v1892 = vadd.f32 %v1854, %v1876
      %v1893 = vadd.f32 %v1855, %v1876
      %v1894 = vadd.f32 %v1856, %v1876
      %v1895 = vadd.f32 %v1857, %v1876
      %v1896 = vadd.f32 %v1858, %v1876
      %v1897 = vadd.f32 %v1859, %v1876
      %v1898 = vadd.f32 %v1860, %v1876
      %v1899 = vadd.f32 %v1861, %v1876
      %v1900 = vadd.f32 %v1862, %v1876
      %v1901 = vadd.f32 %v1863, %v1876
      %v1902 = vadd.f32 %v1864, %v1876
      %v1903 = vadd.f32 %v1865, %v1876
      %v1904 = vadd.f32 %v1866, %v1876
      %v1905 = vadd.f32 %v1867, %v1876
      %v1906 = vadd.f32 %v1868, %v1876
      %v1907 = vadd.f32 %v1869, %v1876
      %v1908 = vadd.f32 %v1870, %v1876
      %v1909 = vadd.f32 %v1871, %v1876
      %v1910 = vadd.f32 %v1872, %v1876
      %v1911 = vxor.u32 %v1877, 2147483648
      %v1912 = vxor.u32 %v1878, 2147483648
      %v1913 = vxor.u32 %v1879, 2147483648
      %v1914 = vxor.u32 %v1880, 2147483648
      %v1915 = vxor.u32 %v1881, 2147483648
      %v1916 = vxor.u32 %v1882, 2147483648
      %v1917 = vxor.u32 %v1883, 2147483648
      %v1918 = vxor.u32 %v1884, 2147483648
      %v1919 = vxor.u32 %v1885, 2147483648
      %v1920 = vxor.u32 %v1886, 2147483648
      %v1921 = vxor.u32 %v1887, 2147483648
      %v1922 = vxor.u32 %v1888, 2147483648
      %v1923 = vxor.u32 %v1889, 2147483648
      %v1924 = vxor.u32 %v1890, 2147483648
      %v1925 = vxor.u32 %v1891, 2147483648
      %v1926 = vxor.u32 %v1892, 2147483648
      %v1927 = vxor.u32 %v1893, 2147483648
      %v1928 = vxor.u32 %v1894, 2147483648
      %v1929 = vxor.u32 %v1895, 2147483648
      %v1930 = vxor.u32 %v1896, 2147483648
      %v1931 = vxor.u32 %v1897, 2147483648
      %v1932 = vxor.u32 %v1898, 2147483648
      %v1933 = vxor.u32 %v1899, 2147483648
      %v1934 = vxor.u32 %v1900, 2147483648
      %v1935 = vxor.u32 %v1901, 2147483648
      %v1936 = vxor.u32 %v1902, 2147483648
      %v1937 = vxor.u32 %v1903, 2147483648
      %v1938 = vxor.u32 %v1904, 2147483648
      %v1939 = vxor.u32 %v1905, 2147483648
      %v1940 = vxor.u32 %v1906, 2147483648
      %v1941 = vxor.u32 %v1907, 2147483648
      %v1942 = vxor.u32 %v1908, 2147483648
      %v1943 = vxor.u32 %v1909, 2147483648
      %v1944 = vxor.u32 %v1910, 2147483648
      %v1945 = vmul.f32 %v1911, 1.442695
      %v1946 = vpow.pop %v1945
      %v1947 = vmul.f32 %v1912, 1.442695
      %v1948 = vpow.pop %v1947
      %v1949 = vmul.f32 %v1913, 1.442695
      %v1950 = vpow.pop %v1949
      %v1951 = vmul.f32 %v1914, 1.442695
      %v1952 = vpow.pop %v1951
      %v1953 = vmul.f32 %v1915, 1.442695
      %v1954 = vpow.pop %v1953
      %v1955 = vmul.f32 %v1916, 1.442695
      %v1956 = vpow.pop %v1955
      %v1957 = vmul.f32 %v1917, 1.442695
      %v1958 = vpow.pop %v1957
      %v1959 = vmul.f32 %v1918, 1.442695
      %v1960 = vpow.pop %v1959
      %v1961 = vmul.f32 %v1919, 1.442695
      %v1962 = vpow.pop %v1961
      %v1963 = vmul.f32 %v1920, 1.442695
      %v1964 = vpow.pop %v1963
      %v1965 = vmul.f32 %v1921, 1.442695
      %v1966 = vpow.pop %v1965
      %v1967 = vmul.f32 %v1922, 1.442695
      %v1968 = vpow.pop %v1967
      %v1969 = vmul.f32 %v1923, 1.442695
      %v1970 = vpow.pop %v1969
      %v1971 = vmul.f32 %v1924, 1.442695
      %v1972 = vpow.pop %v1971
      %v1973 = vmul.f32 %v1925, 1.442695
      %v1974 = vpow.pop %v1973
      %v1975 = vmul.f32 %v1926, 1.442695
      %v1976 = vpow.pop %v1975
      %v1977 = vmul.f32 %v1927, 1.442695
      %v1978 = vpow.pop %v1977
      %v1979 = vmul.f32 %v1928, 1.442695
      %v1980 = vpow.pop %v1979
      %v1981 = vmul.f32 %v1929, 1.442695
      %v1982 = vpow.pop %v1981
      %v1983 = vmul.f32 %v1930, 1.442695
      %v1984 = vpow.pop %v1983
      %v1985 = vmul.f32 %v1931, 1.442695
      %v1986 = vpow.pop %v1985
      %v1987 = vmul.f32 %v1932, 1.442695
      %v1988 = vpow.pop %v1987
      %v1989 = vmul.f32 %v1933, 1.442695
      %v1990 = vpow.pop %v1989
      %v1991 = vmul.f32 %v1934, 1.442695
      %v1992 = vpow.pop %v1991
      %v1993 = vmul.f32 %v1935, 1.442695
      %v1994 = vpow.pop %v1993
      %v1995 = vmul.f32 %v1936, 1.442695
      %v1996 = vpow.pop %v1995
      %v1997 = vmul.f32 %v1937, 1.442695
      %v1998 = vpow.pop %v1997
      %v1999 = vmul.f32 %v1938, 1.442695
      %v2000 = vpow.pop %v1999
      %v2001 = vmul.f32 %v1939, 1.442695
      %v2002 = vpow.pop %v2001
      %v2003 = vmul.f32 %v1940, 1.442695
      %v2004 = vpow.pop %v2003
      %v2005 = vmul.f32 %v1941, 1.442695
      %v2006 = vpow.pop %v2005
      %v2007 = vmul.f32 %v1942, 1.442695
      %v2008 = vpow.pop %v2007
      %v2009 = vmul.f32 %v1943, 1.442695
      %v2010 = vpow.pop %v2009
      %v2011 = vmul.f32 %v1944, 1.442695
      %v2012 = vpow.pop %v2011
      %v2013 = vadd.f32 %v1946, 1.0
      %v2014 = vadd.f32 %v1948, 1.0
      %v2015 = vadd.f32 %v1950, 1.0
      %v2016 = vadd.f32 %v1952, 1.0
      %v2017 = vadd.f32 %v1954, 1.0
      %v2018 = vadd.f32 %v1956, 1.0
      %v2019 = vadd.f32 %v1958, 1.0
      %v2020 = vadd.f32 %v1960, 1.0
      %v2021 = vadd.f32 %v1962, 1.0
      %v2022 = vadd.f32 %v1964, 1.0
      %v2023 = vadd.f32 %v1966, 1.0
      %v2024 = vadd.f32 %v1968, 1.0
      %v2025 = vadd.f32 %v1970, 1.0
      %v2026 = vadd.f32 %v1972, 1.0
      %v2027 = vadd.f32 %v1974, 1.0
      %v2028 = vadd.f32 %v1976, 1.0
      %v2029 = vadd.f32 %v1978, 1.0
      %v2030 = vadd.f32 %v1980, 1.0
      %v2031 = vadd.f32 %v1982, 1.0
      %v2032 = vadd.f32 %v1984, 1.0
      %v2033 = vadd.f32 %v1986, 1.0
      %v2034 = vadd.f32 %v1988, 1.0
      %v2035 = vadd.f32 %v1990, 1.0
      %v2036 = vadd.f32 %v1992, 1.0
      %v2037 = vadd.f32 %v1994, 1.0
      %v2038 = vadd.f32 %v1996, 1.0
      %v2039 = vadd.f32 %v1998, 1.0
      %v2040 = vadd.f32 %v2000, 1.0
      %v2041 = vadd.f32 %v2002, 1.0
      %v2042 = vadd.f32 %v2004, 1.0
      %v2043 = vadd.f32 %v2006, 1.0
      %v2044 = vadd.f32 %v2008, 1.0
      %v2045 = vadd.f32 %v2010, 1.0
      %v2046 = vadd.f32 %v2012, 1.0
      %v2047 = vrcp.pop %v2013
      %v2048 = vmul.f32 1.0, %v2047
      %v2049 = vrcp.pop %v2014
      %v2050 = vmul.f32 1.0, %v2049
      %v2051 = vrcp.pop %v2015
      %v2052 = vmul.f32 1.0, %v2051
      %v2053 = vrcp.pop %v2016
      %v2054 = vmul.f32 1.0, %v2053
      %v2055 = vrcp.pop %v2017
      %v2056 = vmul.f32 1.0, %v2055
      %v2057 = vrcp.pop %v2018
      %v2058 = vmul.f32 1.0, %v2057
      %v2059 = vrcp.pop %v2019
      %v2060 = vmul.f32 1.0, %v2059
      %v2061 = vrcp.pop %v2020
      %v2062 = vmul.f32 1.0, %v2061
      %v2063 = vrcp.pop %v2021
      %v2064 = vmul.f32 1.0, %v2063
      %v2065 = vrcp.pop %v2022
      %v2066 = vmul.f32 1.0, %v2065
      %v2067 = vrcp.pop %v2023
      %v2068 = vmul.f32 1.0, %v2067
      %v2069 = vrcp.pop %v2024
      %v2070 = vmul.f32 1.0, %v2069
      %v2071 = vrcp.pop %v2025
      %v2072 = vmul.f32 1.0, %v2071
      %v2073 = vrcp.pop %v2026
      %v2074 = vmul.f32 1.0, %v2073
      %v2075 = vrcp.pop %v2027
      %v2076 = vmul.f32 1.0, %v2075
      %v2077 = vrcp.pop %v2028
      %v2078 = vmul.f32 1.0, %v2077
      %v2079 = vrcp.pop %v2029
      %v2080 = vmul.f32 1.0, %v2079
      %v2081 = vrcp.pop %v2030
      %v2082 = vmul.f32 1.0, %v2081
      %v2083 = vrcp.pop %v2031
      %v2084 = vmul.f32 1.0, %v2083
      %v2085 = vrcp.pop %v2032
      %v2086 = vmul.f32 1.0, %v2085
      %v2087 = vrcp.pop %v2033
      %v2088 = vmul.f32 1.0, %v2087
      %v2089 = vrcp.pop %v2034
      %v2090 = vmul.f32 1.0, %v2089
      %v2091 = vrcp.pop %v2035
      %v2092 = vmul.f32 1.0, %v2091
      %v2093 = vrcp.pop %v2036
      %v2094 = vmul.f32 1.0, %v2093
      %v2095 = vrcp.pop %v2037
      %v2096 = vmul.f32 1.0, %v2095
      %v2097 = vrcp.pop %v2038
      %v2098 = vmul.f32 1.0, %v2097
      %v2099 = vrcp.pop %v2039
      %v2100 = vmul.f32 1.0, %v2099
      %v2101 = vrcp.pop %v2040
      %v2102 = vmul.f32 1.0, %v2101
      %v2103 = vrcp.pop %v2041
      %v2104 = vmul.f32 1.0, %v2103
      %v2105 = vrcp.pop %v2042
      %v2106 = vmul.f32 1.0, %v2105
      %v2107 = vrcp.pop %v2043
      %v2108 = vmul.f32 1.0, %v2107
      %v2109 = vrcp.pop %v2044
      %v2110 = vmul.f32 1.0, %v2109
      %v2111 = vrcp.pop %v2045
      %v2112 = vmul.f32 1.0, %v2111
      %v2113 = vrcp.pop %v2046
      %v2114 = vmul.f32 1.0, %v2113
      %v2115 = vlaneseq
      %v2116 = vshrl.u32 %v2115, 7
      %v2117 = vsub.s32 0, %v2116
      %v2118 = vrot.slane %v1834, %v2117
      %v2119 = vmul.f32 %v2118, %v2048
      %v2120 = vmul.f32 %v2118, %v2050
      %v2121 = vmul.f32 %v2118, %v2052
      %v2122 = vmul.f32 %v2118, %v2054
      %v2123 = vmul.f32 %v2118, %v2056
      %v2124 = vmul.f32 %v2118, %v2058
      %v2125 = vmul.f32 %v2118, %v2060
      %v2126 = vmul.f32 %v2118, %v2062
      %v2127 = vmul.f32 %v2118, %v2064
      %v2128 = vmul.f32 %v2118, %v2066
      %v2129 = vmul.f32 %v2118, %v2068
      %v2130 = vmul.f32 %v2118, %v2070
      %v2131 = vmul.f32 %v2118, %v2072
      %v2132 = vmul.f32 %v2118, %v2074
      %v2133 = vmul.f32 %v2118, %v2076
      %v2134 = vmul.f32 %v2118, %v2078
      %v2135 = vmul.f32 %v2118, %v2080
      %v2136 = vmul.f32 %v2118, %v2082
      %v2137 = vmul.f32 %v2118, %v2084
      %v2138 = vmul.f32 %v2118, %v2086
      %v2139 = vmul.f32 %v2118, %v2088
      %v2140 = vmul.f32 %v2118, %v2090
      %v2141 = vmul.f32 %v2118, %v2092
      %v2142 = vmul.f32 %v2118, %v2094
      %v2143 = vmul.f32 %v2118, %v2096
      %v2144 = vmul.f32 %v2118, %v2098
      %v2145 = vmul.f32 %v2118, %v2100
      %v2146 = vmul.f32 %v2118, %v2102
      %v2147 = vmul.f32 %v2118, %v2104
      %v2148 = vmul.f32 %v2118, %v2106
      %v2149 = vmul.f32 %v2118, %v2108
      %v2150 = vmul.f32 %v2118, %v2110
      %v2151 = vmul.f32 %v2118, %v2112
      %v2152 = vmul.f32 %v2118, %v2114
      %v2153 = vlaneseq
      %v2154 = vshrl.u32 %v2153, 7
      %v2155 = vsub.s32 3, %v2154
      %v2156 = vrot.slane %v1834, %v2155
      %v2157 = vmul.f32 %v411, %v2156
      %v2158 = vmul.f32 %v416, %v2156
      %v2159 = vmul.f32 %v421, %v2156
      %v2160 = vmul.f32 %v426, %v2156
      %v2161 = vmul.f32 %v431, %v2156
      %v2162 = vmul.f32 %v436, %v2156
      %v2163 = vmul.f32 %v441, %v2156
      %v2164 = vmul.f32 %v446, %v2156
      %v2165 = vmul.f32 %v451, %v2156
      %v2166 = vmul.f32 %v456, %v2156
      %v2167 = vmul.f32 %v461, %v2156
      %v2168 = vmul.f32 %v466, %v2156
      %v2169 = vmul.f32 %v471, %v2156
      %v2170 = vmul.f32 %v476, %v2156
      %v2171 = vmul.f32 %v481, %v2156
      %v2172 = vmul.f32 %v486, %v2156
      %v2173 = vmul.f32 %v491, %v2156
      %v2174 = vmul.f32 %v496, %v2156
      %v2175 = vmul.f32 %v501, %v2156
      %v2176 = vmul.f32 %v506, %v2156
      %v2177 = vmul.f32 %v511, %v2156
      %v2178 = vmul.f32 %v516, %v2156
      %v2179 = vmul.f32 %v521, %v2156
      %v2180 = vmul.f32 %v526, %v2156
      %v2181 = vmul.f32 %v531, %v2156
      %v2182 = vmul.f32 %v536, %v2156
      %v2183 = vmul.f32 %v541, %v2156
      %v2184 = vmul.f32 %v546, %v2156
      %v2185 = vmul.f32 %v551, %v2156
      %v2186 = vmul.f32 %v556, %v2156
      %v2187 = vmul.f32 %v561, %v2156
      %v2188 = vmul.f32 %v566, %v2156
      %v2189 = vmul.f32 %v571, %v2156
      %v2190 = vmul.f32 %v576, %v2156
      %v2191 = vadd.f32 %v2119, %v2157
      %v2192 = vadd.f32 %v2120, %v2158
      %v2193 = vadd.f32 %v2121, %v2159
      %v2194 = vadd.f32 %v2122, %v2160
      %v2195 = vadd.f32 %v2123, %v2161
      %v2196 = vadd.f32 %v2124, %v2162
      %v2197 = vadd.f32 %v2125, %v2163
      %v2198 = vadd.f32 %v2126, %v2164
      %v2199 = vadd.f32 %v2127, %v2165
      %v2200 = vadd.f32 %v2128, %v2166
      %v2201 = vadd.f32 %v2129, %v2167
      %v2202 = vadd.f32 %v2130, %v2168
      %v2203 = vadd.f32 %v2131, %v2169
      %v2204 = vadd.f32 %v2132, %v2170
      %v2205 = vadd.f32 %v2133, %v2171
      %v2206 = vadd.f32 %v2134, %v2172
      %v2207 = vadd.f32 %v2135, %v2173
      %v2208 = vadd.f32 %v2136, %v2174
      %v2209 = vadd.f32 %v2137, %v2175
      %v2210 = vadd.f32 %v2138, %v2176
      %v2211 = vadd.f32 %v2139, %v2177
      %v2212 = vadd.f32 %v2140, %v2178
      %v2213 = vadd.f32 %v2141, %v2179
      %v2214 = vadd.f32 %v2142, %v2180
      %v2215 = vadd.f32 %v2143, %v2181
      %v2216 = vadd.f32 %v2144, %v2182
      %v2217 = vadd.f32 %v2145, %v2183
      %v2218 = vadd.f32 %v2146, %v2184
      %v2219 = vadd.f32 %v2147, %v2185
      %v2220 = vadd.f32 %v2148, %v2186
      %v2221 = vadd.f32 %v2149, %v2187
      %v2222 = vadd.f32 %v2150, %v2188
      %v2223 = vadd.f32 %v2151, %v2189
      %v2224 = vadd.f32 %v2152, %v2190
      %v2225 = vpack.c.bf16 %v1797, %v1796
      %v2226 = vpack.c.bf16 %v1799, %v1798
      %v2227 = vpack.c.bf16 %v1801, %v1800
      %v2228 = vpack.c.bf16 %v1803, %v1802
      %v2229 = vpack.c.bf16 %v1805, %v1804
      %v2230 = vpack.c.bf16 %v1807, %v1806
      %v2231 = vpack.c.bf16 %v1809, %v1808
      %v2232 = vpack.c.bf16 %v1811, %v1810
      %v2233 = vpack.c.bf16 %v1813, %v1812
      %v2234 = vpack.c.bf16 %v1815, %v1814
      %v2235 = vpack.c.bf16 %v1817, %v1816
      %v2236 = vpack.c.bf16 %v1819, %v1818
      %v2237 = vpack.c.bf16 %v1821, %v1820
      %v2238 = vpack.c.bf16 %v1823, %v1822
      %v2239 = vpack.c.bf16 %v1825, %v1824
      %v2240 = vpack.c.bf16 %v1827, %v1826
      %v2241 = vpack.c.bf16 %v1829, %v1828
      %v2246 = vunpack.c.l.b16 %v1830
      %v2247 = vunpack.c.l.b16 %v1831
      %v2248 = vunpack.c.l.b16 %v1832
      %v2249 = vunpack.c.l.b16 %v1833
      %v2250 = vpack.c.b16 %v2247, %v2246
      %v2251 = vpack.c.b16 %v2249, %v2248
      %vm2254 = vcmask 261120
      %v2256 = vsel %vm2254, %v2225, 0
      %v2259 = vsel %vm2254, %v2226, 0
      %v2262 = vsel %vm2254, %v2227, 0
      %v2265 = vsel %vm2254, %v2228, 0
      %v2268 = vsel %vm2254, %v2229, 0
      %v2271 = vsel %vm2254, %v2230, 0
      %v2274 = vsel %vm2254, %v2231, 0
      %v2277 = vsel %vm2254, %v2232, 0
      %v2280 = vsel %vm2254, %v2233, 0
      %v2283 = vsel %vm2254, %v2234, 0
      %v2286 = vsel %vm2254, %v2235, 0
      %v2289 = vsel %vm2254, %v2236, 0
      %v2292 = vsel %vm2254, %v2237, 0
      %v2295 = vsel %vm2254, %v2238, 0
      %v2298 = vsel %vm2254, %v2239, 0
      %v2301 = vsel %vm2254, %v2240, 0
      %v2304 = vsel %vm2254, %v2241, 0
      %2306 = vmatprep.subr.bf16.mxu0 0
      %2307 = vmatpush1.bf16.msra.mxu0 %v2250
      %2308 = vmatprep.subr.bf16.mxu0 0
      %2309 = vmatpush1.bf16.msra.mxu0 %v2251
      %2310 = vmatprep.subr.bf16.mxu0 0
      %2311 = vmatpush1.bf16.msra.mxu0 0
      %2312 = vmatprep.subr.bf16.mxu0 0
      %2313 = vmatpush1.bf16.msra.mxu0 0
      %2314 = vmatprep.subr.bf16.mxu0 0
      %2315 = vmatpush1.bf16.msra.mxu0 0
      %2316 = vmatprep.subr.bf16.mxu0 0
      %2317 = vmatpush1.bf16.msra.mxu0 0
      %2318 = vmatprep.subr.bf16.mxu0 0
      %2319 = vmatpush1.bf16.msra.mxu0 0
      %2320 = vmatprep.subr.bf16.mxu0 0
      %2321 = vmatpush1.bf16.msra.mxu0 0
      %2322 = vmatprep.subr.bf16.mxu0 0
      %2323 = vmatpush1.bf16.msra.mxu0 0
      %2324 = vmatprep.subr.bf16.mxu0 0
      %2325 = vmatpush1.bf16.msra.mxu0 0
      %2326 = vmatprep.subr.bf16.mxu0 0
      %2327 = vmatpush1.bf16.msra.mxu0 0
      %2328 = vmatprep.subr.bf16.mxu0 0
      %2329 = vmatpush1.bf16.msra.mxu0 0
      %2330 = vmatprep.subr.bf16.mxu0 0
      %2331 = vmatpush1.bf16.msra.mxu0 0
      %2332 = vmatprep.subr.bf16.mxu0 0
      %2333 = vmatpush1.bf16.msra.mxu0 0
      %2334 = vmatprep.subr.bf16.mxu0 0
      %2335 = vmatpush1.bf16.msra.mxu0 0
      %2336 = vmatprep.subr.bf16.mxu0 0
      %2337 = vmatpush1.bf16.msra.mxu0 0
      %2338 = vmatprep.mubr.bf16.mxu0 0
      %2339 = vmatmul.mubr.bf16.gmra.mrb[0].mxu0 %v2256
      %v2340 = vpop.f32.mrb[0].mxu0
      %v2341 = vadd.f32 0.0, %v2340
      %v2342 = vpop.f32.mrb[0].mxu0
      %v2343 = vpop.f32.mrb[0].mxu0
      %v2344 = vadd.f32 0.0, %v2343
      %v2345 = vpop.f32.mrb[0].mxu0
      %2346 = vmatprep.mubr.bf16.mxu0 0
      %2347 = vmatmul.mubr.bf16.gmra.mrb[0].mxu0 %v2259
      %v2348 = vpop.f32.mrb[0].mxu0
      %v2349 = vadd.f32 0.0, %v2348
      %v2350 = vpop.f32.mrb[0].mxu0
      %v2351 = vpop.f32.mrb[0].mxu0
      %v2352 = vadd.f32 0.0, %v2351
      %v2353 = vpop.f32.mrb[0].mxu0
      %2354 = vmatprep.mubr.bf16.mxu0 0
      %2355 = vmatmul.mubr.bf16.gmra.mrb[0].mxu0 %v2262
      %v2356 = vpop.f32.mrb[0].mxu0
      %v2357 = vadd.f32 0.0, %v2356
      %v2358 = vpop.f32.mrb[0].mxu0
      %v2359 = vpop.f32.mrb[0].mxu0
      %v2360 = vadd.f32 0.0, %v2359
      %v2361 = vpop.f32.mrb[0].mxu0
      %2362 = vmatprep.mubr.bf16.mxu0 0
      %2363 = vmatmul.mubr.bf16.gmra.mrb[0].mxu0 %v2265
      %v2364 = vpop.f32.mrb[0].mxu0
      %v2365 = vadd.f32 0.0, %v2364
      %v2366 = vpop.f32.mrb[0].mxu0
      %v2367 = vpop.f32.mrb[0].mxu0
      %v2368 = vadd.f32 0.0, %v2367
      %v2369 = vpop.f32.mrb[0].mxu0
      %2370 = vmatprep.mubr.bf16.mxu0 0
      %2371 = vmatmul.mubr.bf16.gmra.mrb[0].mxu0 %v2268
      %v2372 = vpop.f32.mrb[0].mxu0
      %v2373 = vadd.f32 0.0, %v2372
      %v2374 = vpop.f32.mrb[0].mxu0
      %v2375 = vpop.f32.mrb[0].mxu0
      %v2376 = vadd.f32 0.0, %v2375
      %v2377 = vpop.f32.mrb[0].mxu0
      %2378 = vmatprep.mubr.bf16.mxu0 0
      %2379 = vmatmul.mubr.bf16.gmra.mrb[0].mxu0 %v2271
      %v2380 = vpop.f32.mrb[0].mxu0
      %v2381 = vadd.f32 0.0, %v2380
      %v2382 = vpop.f32.mrb[0].mxu0
      %v2383 = vpop.f32.mrb[0].mxu0
      %v2384 = vadd.f32 0.0, %v2383
      %v2385 = vpop.f32.mrb[0].mxu0
      %2386 = vmatprep.mubr.bf16.mxu0 0
      %2387 = vmatmul.mubr.bf16.gmra.mrb[0].mxu0 %v2274
      %v2388 = vpop.f32.mrb[0].mxu0
      %v2389 = vadd.f32 0.0, %v2388
      %v2390 = vpop.f32.mrb[0].mxu0
      %v2391 = vpop.f32.mrb[0].mxu0
      %v2392 = vadd.f32 0.0, %v2391
      %v2393 = vpop.f32.mrb[0].mxu0
      %2394 = vmatprep.mubr.bf16.mxu0 0
      %2395 = vmatmul.mubr.bf16.gmra.mrb[0].mxu0 %v2277
      %v2396 = vpop.f32.mrb[0].mxu0
      %v2397 = vadd.f32 0.0, %v2396
      %v2398 = vpop.f32.mrb[0].mxu0
      %v2399 = vpop.f32.mrb[0].mxu0
      %v2400 = vadd.f32 0.0, %v2399
      %v2401 = vpop.f32.mrb[0].mxu0
      %2402 = vmatprep.mubr.bf16.mxu0 0
      %2403 = vmatmul.mubr.bf16.gmra.mrb[0].mxu0 %v2280
      %v2404 = vpop.f32.mrb[0].mxu0
      %v2405 = vadd.f32 0.0, %v2404
      %v2406 = vpop.f32.mrb[0].mxu0
      %v2407 = vpop.f32.mrb[0].mxu0
      %v2408 = vadd.f32 0.0, %v2407
      %v2409 = vpop.f32.mrb[0].mxu0
      %2410 = vmatprep.mubr.bf16.mxu0 0
      %2411 = vmatmul.mubr.bf16.gmra.mrb[0].mxu0 %v2283
      %v2412 = vpop.f32.mrb[0].mxu0
      %v2413 = vadd.f32 0.0, %v2412
      %v2414 = vpop.f32.mrb[0].mxu0
      %v2415 = vpop.f32.mrb[0].mxu0
      %v2416 = vadd.f32 0.0, %v2415
      %v2417 = vpop.f32.mrb[0].mxu0
      %2418 = vmatprep.mubr.bf16.mxu0 0
      %2419 = vmatmul.mubr.bf16.gmra.mrb[0].mxu0 %v2286
      %v2420 = vpop.f32.mrb[0].mxu0
      %v2421 = vadd.f32 0.0, %v2420
      %v2422 = vpop.f32.mrb[0].mxu0
      %v2423 = vpop.f32.mrb[0].mxu0
      %v2424 = vadd.f32 0.0, %v2423
      %v2425 = vpop.f32.mrb[0].mxu0
      %2426 = vmatprep.mubr.bf16.mxu0 0
      %2427 = vmatmul.mubr.bf16.gmra.mrb[0].mxu0 %v2289
      %v2428 = vpop.f32.mrb[0].mxu0
      %v2429 = vadd.f32 0.0, %v2428
      %v2430 = vpop.f32.mrb[0].mxu0
      %v2431 = vpop.f32.mrb[0].mxu0
      %v2432 = vadd.f32 0.0, %v2431
      %v2433 = vpop.f32.mrb[0].mxu0
      %2434 = vmatprep.mubr.bf16.mxu0 0
      %2435 = vmatmul.mubr.bf16.gmra.mrb[0].mxu0 %v2292
      %v2436 = vpop.f32.mrb[0].mxu0
      %v2437 = vadd.f32 0.0, %v2436
      %v2438 = vpop.f32.mrb[0].mxu0
      %v2439 = vpop.f32.mrb[0].mxu0
      %v2440 = vadd.f32 0.0, %v2439
      %v2441 = vpop.f32.mrb[0].mxu0
      %2442 = vmatprep.mubr.bf16.mxu0 0
      %2443 = vmatmul.mubr.bf16.gmra.mrb[0].mxu0 %v2295
      %v2444 = vpop.f32.mrb[0].mxu0
      %v2445 = vadd.f32 0.0, %v2444
      %v2446 = vpop.f32.mrb[0].mxu0
      %v2447 = vpop.f32.mrb[0].mxu0
      %v2448 = vadd.f32 0.0, %v2447
      %v2449 = vpop.f32.mrb[0].mxu0
      %2450 = vmatprep.mubr.bf16.mxu0 0
      %2451 = vmatmul.mubr.bf16.gmra.mrb[0].mxu0 %v2298
      %v2452 = vpop.f32.mrb[0].mxu0
      %v2453 = vadd.f32 0.0, %v2452
      %v2454 = vpop.f32.mrb[0].mxu0
      %v2455 = vpop.f32.mrb[0].mxu0
      %v2456 = vadd.f32 0.0, %v2455
      %v2457 = vpop.f32.mrb[0].mxu0
      %2458 = vmatprep.mubr.bf16.mxu0 0
      %2459 = vmatmul.mubr.bf16.gmra.mrb[0].mxu0 %v2301
      %v2460 = vpop.f32.mrb[0].mxu0
      %v2461 = vadd.f32 0.0, %v2460
      %v2462 = vpop.f32.mrb[0].mxu0
      %v2463 = vpop.f32.mrb[0].mxu0
      %v2464 = vadd.f32 0.0, %v2463
      %v2465 = vpop.f32.mrb[0].mxu0
      %2466 = vmatprep.mubr.bf16.mxu0 0
      %2467 = vmatmul.mubr.bf16.gmra.mrb[0].mxu0 %v2304
      %v2468 = vpop.f32.mrb[0].mxu0
      %v2469 = vadd.f32 0.0, %v2468
      %v2470 = vpop.f32.mrb[0].mxu0
      %v2471 = vpop.f32.mrb[0].mxu0
      %v2472 = vadd.f32 0.0, %v2471
      %v2473 = vpop.f32.mrb[0].mxu0
      %2474 = vdwg.mxu0
      %v2475 = vmul.f32 %v2341, %v2048
      %v2476 = vmul.f32 %v2344, %v2050
      %v2477 = vmul.f32 %v2349, %v2052
      %v2478 = vmul.f32 %v2352, %v2054
      %v2479 = vmul.f32 %v2357, %v2056
      %v2480 = vmul.f32 %v2360, %v2058
      %v2481 = vmul.f32 %v2365, %v2060
      %v2482 = vmul.f32 %v2368, %v2062
      %v2483 = vmul.f32 %v2373, %v2064
      %v2484 = vmul.f32 %v2376, %v2066
      %v2485 = vmul.f32 %v2381, %v2068
      %v2486 = vmul.f32 %v2384, %v2070
      %v2487 = vmul.f32 %v2389, %v2072
      %v2488 = vmul.f32 %v2392, %v2074
      %v2489 = vmul.f32 %v2397, %v2076
      %v2490 = vmul.f32 %v2400, %v2078
      %v2491 = vmul.f32 %v2405, %v2080
      %v2492 = vmul.f32 %v2408, %v2082
      %v2493 = vmul.f32 %v2413, %v2084
      %v2494 = vmul.f32 %v2416, %v2086
      %v2495 = vmul.f32 %v2421, %v2088
      %v2496 = vmul.f32 %v2424, %v2090
      %v2497 = vmul.f32 %v2429, %v2092
      %v2498 = vmul.f32 %v2432, %v2094
      %v2499 = vmul.f32 %v2437, %v2096
      %v2500 = vmul.f32 %v2440, %v2098
      %v2501 = vmul.f32 %v2445, %v2100
      %v2502 = vmul.f32 %v2448, %v2102
      %v2503 = vmul.f32 %v2453, %v2104
      %v2504 = vmul.f32 %v2456, %v2106
      %v2505 = vmul.f32 %v2461, %v2108
      %v2506 = vmul.f32 %v2464, %v2110
      %v2507 = vmul.f32 %v2469, %v2112
      %v2508 = vmul.f32 %v2472, %v2114
      %v2509 = vadd.f32 %v2475, %v2191
      %v2510 = vadd.f32 %v2476, %v2192
      %v2511 = vadd.f32 %v2477, %v2193
      %v2512 = vadd.f32 %v2478, %v2194
      %v2513 = vadd.f32 %v2479, %v2195
      %v2514 = vadd.f32 %v2480, %v2196
      %v2515 = vadd.f32 %v2481, %v2197
      %v2516 = vadd.f32 %v2482, %v2198
      %v2517 = vadd.f32 %v2483, %v2199
      %v2518 = vadd.f32 %v2484, %v2200
      %v2519 = vadd.f32 %v2485, %v2201
      %v2520 = vadd.f32 %v2486, %v2202
      %v2521 = vadd.f32 %v2487, %v2203
      %v2522 = vadd.f32 %v2488, %v2204
      %v2523 = vadd.f32 %v2489, %v2205
      %v2524 = vadd.f32 %v2490, %v2206
      %v2525 = vadd.f32 %v2491, %v2207
      %v2526 = vadd.f32 %v2492, %v2208
      %v2527 = vadd.f32 %v2493, %v2209
      %v2528 = vadd.f32 %v2494, %v2210
      %v2529 = vadd.f32 %v2495, %v2211
      %v2530 = vadd.f32 %v2496, %v2212
      %v2531 = vadd.f32 %v2497, %v2213
      %v2532 = vadd.f32 %v2498, %v2214
      %v2533 = vadd.f32 %v2499, %v2215
      %v2534 = vadd.f32 %v2500, %v2216
      %v2535 = vadd.f32 %v2501, %v2217
      %v2536 = vadd.f32 %v2502, %v2218
      %v2537 = vadd.f32 %v2503, %v2219
      %v2538 = vadd.f32 %v2504, %v2220
      %v2539 = vadd.f32 %v2505, %v2221
      %v2540 = vadd.f32 %v2506, %v2222
      %v2541 = vadd.f32 %v2507, %v2223
      %v2542 = vadd.f32 %v2508, %v2224
      %vm2543 = vcmp.gt.f32.partialorder %v2509, 20.0
      %vm2544 = vcmp.gt.f32.partialorder %v2510, 20.0
      %vm2545 = vcmp.gt.f32.partialorder %v2511, 20.0
      %vm2546 = vcmp.gt.f32.partialorder %v2512, 20.0
      %vm2547 = vcmp.gt.f32.partialorder %v2513, 20.0
      %vm2548 = vcmp.gt.f32.partialorder %v2514, 20.0
      %vm2549 = vcmp.gt.f32.partialorder %v2515, 20.0
      %vm2550 = vcmp.gt.f32.partialorder %v2516, 20.0
      %vm2551 = vcmp.gt.f32.partialorder %v2517, 20.0
      %vm2552 = vcmp.gt.f32.partialorder %v2518, 20.0
      %vm2553 = vcmp.gt.f32.partialorder %v2519, 20.0
      %vm2554 = vcmp.gt.f32.partialorder %v2520, 20.0
      %vm2555 = vcmp.gt.f32.partialorder %v2521, 20.0
      %vm2556 = vcmp.gt.f32.partialorder %v2522, 20.0
      %vm2557 = vcmp.gt.f32.partialorder %v2523, 20.0
      %vm2558 = vcmp.gt.f32.partialorder %v2524, 20.0
      %vm2559 = vcmp.gt.f32.partialorder %v2525, 20.0
      %vm2560 = vcmp.gt.f32.partialorder %v2526, 20.0
      %vm2561 = vcmp.gt.f32.partialorder %v2527, 20.0
      %vm2562 = vcmp.gt.f32.partialorder %v2528, 20.0
      %vm2563 = vcmp.gt.f32.partialorder %v2529, 20.0
      %vm2564 = vcmp.gt.f32.partialorder %v2530, 20.0
      %vm2565 = vcmp.gt.f32.partialorder %v2531, 20.0
      %vm2566 = vcmp.gt.f32.partialorder %v2532, 20.0
      %vm2567 = vcmp.gt.f32.partialorder %v2533, 20.0
      %vm2568 = vcmp.gt.f32.partialorder %v2534, 20.0
      %vm2569 = vcmp.gt.f32.partialorder %v2535, 20.0
      %vm2570 = vcmp.gt.f32.partialorder %v2536, 20.0
      %vm2571 = vcmp.gt.f32.partialorder %v2537, 20.0
      %vm2572 = vcmp.gt.f32.partialorder %v2538, 20.0
      %vm2573 = vcmp.gt.f32.partialorder %v2539, 20.0
      %vm2574 = vcmp.gt.f32.partialorder %v2540, 20.0
      %vm2575 = vcmp.gt.f32.partialorder %v2541, 20.0
      %vm2576 = vcmp.gt.f32.partialorder %v2542, 20.0
      %v2577 = vmin.f32 %v2509, 20.0
      %v2578 = vmin.f32 %v2510, 20.0
      %v2579 = vmin.f32 %v2511, 20.0
      %v2580 = vmin.f32 %v2512, 20.0
      %v2581 = vmin.f32 %v2513, 20.0
      %v2582 = vmin.f32 %v2514, 20.0
      %v2583 = vmin.f32 %v2515, 20.0
      %v2584 = vmin.f32 %v2516, 20.0
      %v2585 = vmin.f32 %v2517, 20.0
      %v2586 = vmin.f32 %v2518, 20.0
      %v2587 = vmin.f32 %v2519, 20.0
      %v2588 = vmin.f32 %v2520, 20.0
      %v2589 = vmin.f32 %v2521, 20.0
      %v2590 = vmin.f32 %v2522, 20.0
      %v2591 = vmin.f32 %v2523, 20.0
      %v2592 = vmin.f32 %v2524, 20.0
      %v2593 = vmin.f32 %v2525, 20.0
      %v2594 = vmin.f32 %v2526, 20.0
      %v2595 = vmin.f32 %v2527, 20.0
      %v2596 = vmin.f32 %v2528, 20.0
      %v2597 = vmin.f32 %v2529, 20.0
      %v2598 = vmin.f32 %v2530, 20.0
      %v2599 = vmin.f32 %v2531, 20.0
      %v2600 = vmin.f32 %v2532, 20.0
      %v2601 = vmin.f32 %v2533, 20.0
      %v2602 = vmin.f32 %v2534, 20.0
      %v2603 = vmin.f32 %v2535, 20.0
      %v2604 = vmin.f32 %v2536, 20.0
      %v2605 = vmin.f32 %v2537, 20.0
      %v2606 = vmin.f32 %v2538, 20.0
      %v2607 = vmin.f32 %v2539, 20.0
      %v2608 = vmin.f32 %v2540, 20.0
      %v2609 = vmin.f32 %v2541, 20.0
      %v2610 = vmin.f32 %v2542, 20.0
      %v2611 = vmul.f32 %v2577, 1.442695
      %v2612 = vpow.pop %v2611
      %v2613 = vmul.f32 %v2578, 1.442695
      %v2614 = vpow.pop %v2613
      %v2615 = vmul.f32 %v2579, 1.442695
      %v2616 = vpow.pop %v2615
      %v2617 = vmul.f32 %v2580, 1.442695
      %v2618 = vpow.pop %v2617
      %v2619 = vmul.f32 %v2581, 1.442695
      %v2620 = vpow.pop %v2619
      %v2621 = vmul.f32 %v2582, 1.442695
      %v2622 = vpow.pop %v2621
      %v2623 = vmul.f32 %v2583, 1.442695
      %v2624 = vpow.pop %v2623
      %v2625 = vmul.f32 %v2584, 1.442695
      %v2626 = vpow.pop %v2625
      %v2627 = vmul.f32 %v2585, 1.442695
      %v2628 = vpow.pop %v2627
      %v2629 = vmul.f32 %v2586, 1.442695
      %v2630 = vpow.pop %v2629
      %v2631 = vmul.f32 %v2587, 1.442695
      %v2632 = vpow.pop %v2631
      %v2633 = vmul.f32 %v2588, 1.442695
      %v2634 = vpow.pop %v2633
      %v2635 = vmul.f32 %v2589, 1.442695
      %v2636 = vpow.pop %v2635
      %v2637 = vmul.f32 %v2590, 1.442695
      %v2638 = vpow.pop %v2637
      %v2639 = vmul.f32 %v2591, 1.442695
      %v2640 = vpow.pop %v2639
      %v2641 = vmul.f32 %v2592, 1.442695
      %v2642 = vpow.pop %v2641
      %v2643 = vmul.f32 %v2593, 1.442695
      %v2644 = vpow.pop %v2643
      %v2645 = vmul.f32 %v2594, 1.442695
      %v2646 = vpow.pop %v2645
      %v2647 = vmul.f32 %v2595, 1.442695
      %v2648 = vpow.pop %v2647
      %v2649 = vmul.f32 %v2596, 1.442695
      %v2650 = vpow.pop %v2649
      %v2651 = vmul.f32 %v2597, 1.442695
      %v2652 = vpow.pop %v2651
      %v2653 = vmul.f32 %v2598, 1.442695
      %v2654 = vpow.pop %v2653
      %v2655 = vmul.f32 %v2599, 1.442695
      %v2656 = vpow.pop %v2655
      %v2657 = vmul.f32 %v2600, 1.442695
      %v2658 = vpow.pop %v2657
      %v2659 = vmul.f32 %v2601, 1.442695
      %v2660 = vpow.pop %v2659
      %v2661 = vmul.f32 %v2602, 1.442695
      %v2662 = vpow.pop %v2661
      %v2663 = vmul.f32 %v2603, 1.442695
      %v2664 = vpow.pop %v2663
      %v2665 = vmul.f32 %v2604, 1.442695
      %v2666 = vpow.pop %v2665
      %v2667 = vmul.f32 %v2605, 1.442695
      %v2668 = vpow.pop %v2667
      %v2669 = vmul.f32 %v2606, 1.442695
      %v2670 = vpow.pop %v2669
      %v2671 = vmul.f32 %v2607, 1.442695
      %v2672 = vpow.pop %v2671
      %v2673 = vmul.f32 %v2608, 1.442695
      %v2674 = vpow.pop %v2673
      %v2675 = vmul.f32 %v2609, 1.442695
      %v2676 = vpow.pop %v2675
      %v2677 = vmul.f32 %v2610, 1.442695
      %v2678 = vpow.pop %v2677
      %v2679 = vadd.f32 %v2612, 1.0
      %v2680 = vlog2.pop %v2679
      %v2681 = vmul.f32 %v2680, 0.6931472
      %v2682 = vmul.f32 -0.5, %v2612
      %v2683 = vadd.f32 %v2682, 1.0
      %v2684 = vmul.f32 %v2683, %v2612
      %v2685 = vand.u32 2147483647, %v2612
      %vm2686 = vcmp.lt.f32.partialorder %v2685, 0.0004427343
      %v2687 = vsel %vm2686, %v2684, %v2681
      %v2688 = vadd.f32 %v2614, 1.0
      %v2689 = vlog2.pop %v2688
      %v2690 = vmul.f32 %v2689, 0.6931472
      %v2691 = vmul.f32 -0.5, %v2614
      %v2692 = vadd.f32 %v2691, 1.0
      %v2693 = vmul.f32 %v2692, %v2614
      %v2694 = vand.u32 2147483647, %v2614
      %vm2695 = vcmp.lt.f32.partialorder %v2694, 0.0004427343
      %v2696 = vsel %vm2695, %v2693, %v2690
      %v2697 = vadd.f32 %v2616, 1.0
      %v2698 = vlog2.pop %v2697
      %v2699 = vmul.f32 %v2698, 0.6931472
      %v2700 = vmul.f32 -0.5, %v2616
      %v2701 = vadd.f32 %v2700, 1.0
      %v2702 = vmul.f32 %v2701, %v2616
      %v2703 = vand.u32 2147483647, %v2616
      %vm2704 = vcmp.lt.f32.partialorder %v2703, 0.0004427343
      %v2705 = vsel %vm2704, %v2702, %v2699
      %v2706 = vadd.f32 %v2618, 1.0
      %v2707 = vlog2.pop %v2706
      %v2708 = vmul.f32 %v2707, 0.6931472
      %v2709 = vmul.f32 -0.5, %v2618
      %v2710 = vadd.f32 %v2709, 1.0
      %v2711 = vmul.f32 %v2710, %v2618
      %v2712 = vand.u32 2147483647, %v2618
      %vm2713 = vcmp.lt.f32.partialorder %v2712, 0.0004427343
      %v2714 = vsel %vm2713, %v2711, %v2708
      %v2715 = vadd.f32 %v2620, 1.0
      %v2716 = vlog2.pop %v2715
      %v2717 = vmul.f32 %v2716, 0.6931472
      %v2718 = vmul.f32 -0.5, %v2620
      %v2719 = vadd.f32 %v2718, 1.0
      %v2720 = vmul.f32 %v2719, %v2620
      %v2721 = vand.u32 2147483647, %v2620
      %vm2722 = vcmp.lt.f32.partialorder %v2721, 0.0004427343
      %v2723 = vsel %vm2722, %v2720, %v2717
      %v2724 = vadd.f32 %v2622, 1.0
      %v2725 = vlog2.pop %v2724
      %v2726 = vmul.f32 %v2725, 0.6931472
      %v2727 = vmul.f32 -0.5, %v2622
      %v2728 = vadd.f32 %v2727, 1.0
      %v2729 = vmul.f32 %v2728, %v2622
      %v2730 = vand.u32 2147483647, %v2622
      %vm2731 = vcmp.lt.f32.partialorder %v2730, 0.0004427343
      %v2732 = vsel %vm2731, %v2729, %v2726
      %v2733 = vadd.f32 %v2624, 1.0
      %v2734 = vlog2.pop %v2733
      %v2735 = vmul.f32 %v2734, 0.6931472
      %v2736 = vmul.f32 -0.5, %v2624
      %v2737 = vadd.f32 %v2736, 1.0
      %v2738 = vmul.f32 %v2737, %v2624
      %v2739 = vand.u32 2147483647, %v2624
      %vm2740 = vcmp.lt.f32.partialorder %v2739, 0.0004427343
      %v2741 = vsel %vm2740, %v2738, %v2735
      %v2742 = vadd.f32 %v2626, 1.0
      %v2743 = vlog2.pop %v2742
      %v2744 = vmul.f32 %v2743, 0.6931472
      %v2745 = vmul.f32 -0.5, %v2626
      %v2746 = vadd.f32 %v2745, 1.0
      %v2747 = vmul.f32 %v2746, %v2626
      %v2748 = vand.u32 2147483647, %v2626
      %vm2749 = vcmp.lt.f32.partialorder %v2748, 0.0004427343
      %v2750 = vsel %vm2749, %v2747, %v2744
      %v2751 = vadd.f32 %v2628, 1.0
      %v2752 = vlog2.pop %v2751
      %v2753 = vmul.f32 %v2752, 0.6931472
      %v2754 = vmul.f32 -0.5, %v2628
      %v2755 = vadd.f32 %v2754, 1.0
      %v2756 = vmul.f32 %v2755, %v2628
      %v2757 = vand.u32 2147483647, %v2628
      %vm2758 = vcmp.lt.f32.partialorder %v2757, 0.0004427343
      %v2759 = vsel %vm2758, %v2756, %v2753
      %v2760 = vadd.f32 %v2630, 1.0
      %v2761 = vlog2.pop %v2760
      %v2762 = vmul.f32 %v2761, 0.6931472
      %v2763 = vmul.f32 -0.5, %v2630
      %v2764 = vadd.f32 %v2763, 1.0
      %v2765 = vmul.f32 %v2764, %v2630
      %v2766 = vand.u32 2147483647, %v2630
      %vm2767 = vcmp.lt.f32.partialorder %v2766, 0.0004427343
      %v2768 = vsel %vm2767, %v2765, %v2762
      %v2769 = vadd.f32 %v2632, 1.0
      %v2770 = vlog2.pop %v2769
      %v2771 = vmul.f32 %v2770, 0.6931472
      %v2772 = vmul.f32 -0.5, %v2632
      %v2773 = vadd.f32 %v2772, 1.0
      %v2774 = vmul.f32 %v2773, %v2632
      %v2775 = vand.u32 2147483647, %v2632
      %vm2776 = vcmp.lt.f32.partialorder %v2775, 0.0004427343
      %v2777 = vsel %vm2776, %v2774, %v2771
      %v2778 = vadd.f32 %v2634, 1.0
      %v2779 = vlog2.pop %v2778
      %v2780 = vmul.f32 %v2779, 0.6931472
      %v2781 = vmul.f32 -0.5, %v2634
      %v2782 = vadd.f32 %v2781, 1.0
      %v2783 = vmul.f32 %v2782, %v2634
      %v2784 = vand.u32 2147483647, %v2634
      %vm2785 = vcmp.lt.f32.partialorder %v2784, 0.0004427343
      %v2786 = vsel %vm2785, %v2783, %v2780
      %v2787 = vadd.f32 %v2636, 1.0
      %v2788 = vlog2.pop %v2787
      %v2789 = vmul.f32 %v2788, 0.6931472
      %v2790 = vmul.f32 -0.5, %v2636
      %v2791 = vadd.f32 %v2790, 1.0
      %v2792 = vmul.f32 %v2791, %v2636
      %v2793 = vand.u32 2147483647, %v2636
      %vm2794 = vcmp.lt.f32.partialorder %v2793, 0.0004427343
      %v2795 = vsel %vm2794, %v2792, %v2789
      %v2796 = vadd.f32 %v2638, 1.0
      %v2797 = vlog2.pop %v2796
      %v2798 = vmul.f32 %v2797, 0.6931472
      %v2799 = vmul.f32 -0.5, %v2638
      %v2800 = vadd.f32 %v2799, 1.0
      %v2801 = vmul.f32 %v2800, %v2638
      %v2802 = vand.u32 2147483647, %v2638
      %vm2803 = vcmp.lt.f32.partialorder %v2802, 0.0004427343
      %v2804 = vsel %vm2803, %v2801, %v2798
      %v2805 = vadd.f32 %v2640, 1.0
      %v2806 = vlog2.pop %v2805
      %v2807 = vmul.f32 %v2806, 0.6931472
      %v2808 = vmul.f32 -0.5, %v2640
      %v2809 = vadd.f32 %v2808, 1.0
      %v2810 = vmul.f32 %v2809, %v2640
      %v2811 = vand.u32 2147483647, %v2640
      %vm2812 = vcmp.lt.f32.partialorder %v2811, 0.0004427343
      %v2813 = vsel %vm2812, %v2810, %v2807
      %v2814 = vadd.f32 %v2642, 1.0
      %v2815 = vlog2.pop %v2814
      %v2816 = vmul.f32 %v2815, 0.6931472
      %v2817 = vmul.f32 -0.5, %v2642
      %v2818 = vadd.f32 %v2817, 1.0
      %v2819 = vmul.f32 %v2818, %v2642
      %v2820 = vand.u32 2147483647, %v2642
      %vm2821 = vcmp.lt.f32.partialorder %v2820, 0.0004427343
      %v2822 = vsel %vm2821, %v2819, %v2816
      %v2823 = vadd.f32 %v2644, 1.0
      %v2824 = vlog2.pop %v2823
      %v2825 = vmul.f32 %v2824, 0.6931472
      %v2826 = vmul.f32 -0.5, %v2644
      %v2827 = vadd.f32 %v2826, 1.0
      %v2828 = vmul.f32 %v2827, %v2644
      %v2829 = vand.u32 2147483647, %v2644
      %vm2830 = vcmp.lt.f32.partialorder %v2829, 0.0004427343
      %v2831 = vsel %vm2830, %v2828, %v2825
      %v2832 = vadd.f32 %v2646, 1.0
      %v2833 = vlog2.pop %v2832
      %v2834 = vmul.f32 %v2833, 0.6931472
      %v2835 = vmul.f32 -0.5, %v2646
      %v2836 = vadd.f32 %v2835, 1.0
      %v2837 = vmul.f32 %v2836, %v2646
      %v2838 = vand.u32 2147483647, %v2646
      %vm2839 = vcmp.lt.f32.partialorder %v2838, 0.0004427343
      %v2840 = vsel %vm2839, %v2837, %v2834
      %v2841 = vadd.f32 %v2648, 1.0
      %v2842 = vlog2.pop %v2841
      %v2843 = vmul.f32 %v2842, 0.6931472
      %v2844 = vmul.f32 -0.5, %v2648
      %v2845 = vadd.f32 %v2844, 1.0
      %v2846 = vmul.f32 %v2845, %v2648
      %v2847 = vand.u32 2147483647, %v2648
      %vm2848 = vcmp.lt.f32.partialorder %v2847, 0.0004427343
      %v2849 = vsel %vm2848, %v2846, %v2843
      %v2850 = vadd.f32 %v2650, 1.0
      %v2851 = vlog2.pop %v2850
      %v2852 = vmul.f32 %v2851, 0.6931472
      %v2853 = vmul.f32 -0.5, %v2650
      %v2854 = vadd.f32 %v2853, 1.0
      %v2855 = vmul.f32 %v2854, %v2650
      %v2856 = vand.u32 2147483647, %v2650
      %vm2857 = vcmp.lt.f32.partialorder %v2856, 0.0004427343
      %v2858 = vsel %vm2857, %v2855, %v2852
      %v2859 = vadd.f32 %v2652, 1.0
      %v2860 = vlog2.pop %v2859
      %v2861 = vmul.f32 %v2860, 0.6931472
      %v2862 = vmul.f32 -0.5, %v2652
      %v2863 = vadd.f32 %v2862, 1.0
      %v2864 = vmul.f32 %v2863, %v2652
      %v2865 = vand.u32 2147483647, %v2652
      %vm2866 = vcmp.lt.f32.partialorder %v2865, 0.0004427343
      %v2867 = vsel %vm2866, %v2864, %v2861
      %v2868 = vadd.f32 %v2654, 1.0
      %v2869 = vlog2.pop %v2868
      %v2870 = vmul.f32 %v2869, 0.6931472
      %v2871 = vmul.f32 -0.5, %v2654
      %v2872 = vadd.f32 %v2871, 1.0
      %v2873 = vmul.f32 %v2872, %v2654
      %v2874 = vand.u32 2147483647, %v2654
      %vm2875 = vcmp.lt.f32.partialorder %v2874, 0.0004427343
      %v2876 = vsel %vm2875, %v2873, %v2870
      %v2877 = vadd.f32 %v2656, 1.0
      %v2878 = vlog2.pop %v2877
      %v2879 = vmul.f32 %v2878, 0.6931472
      %v2880 = vmul.f32 -0.5, %v2656
      %v2881 = vadd.f32 %v2880, 1.0
      %v2882 = vmul.f32 %v2881, %v2656
      %v2883 = vand.u32 2147483647, %v2656
      %vm2884 = vcmp.lt.f32.partialorder %v2883, 0.0004427343
      %v2885 = vsel %vm2884, %v2882, %v2879
      %v2886 = vadd.f32 %v2658, 1.0
      %v2887 = vlog2.pop %v2886
      %v2888 = vmul.f32 %v2887, 0.6931472
      %v2889 = vmul.f32 -0.5, %v2658
      %v2890 = vadd.f32 %v2889, 1.0
      %v2891 = vmul.f32 %v2890, %v2658
      %v2892 = vand.u32 2147483647, %v2658
      %vm2893 = vcmp.lt.f32.partialorder %v2892, 0.0004427343
      %v2894 = vsel %vm2893, %v2891, %v2888
      %v2895 = vadd.f32 %v2660, 1.0
      %v2896 = vlog2.pop %v2895
      %v2897 = vmul.f32 %v2896, 0.6931472
      %v2898 = vmul.f32 -0.5, %v2660
      %v2899 = vadd.f32 %v2898, 1.0
      %v2900 = vmul.f32 %v2899, %v2660
      %v2901 = vand.u32 2147483647, %v2660
      %vm2902 = vcmp.lt.f32.partialorder %v2901, 0.0004427343
      %v2903 = vsel %vm2902, %v2900, %v2897
      %v2904 = vadd.f32 %v2662, 1.0
      %v2905 = vlog2.pop %v2904
      %v2906 = vmul.f32 %v2905, 0.6931472
      %v2907 = vmul.f32 -0.5, %v2662
      %v2908 = vadd.f32 %v2907, 1.0
      %v2909 = vmul.f32 %v2908, %v2662
      %v2910 = vand.u32 2147483647, %v2662
      %vm2911 = vcmp.lt.f32.partialorder %v2910, 0.0004427343
      %v2912 = vsel %vm2911, %v2909, %v2906
      %v2913 = vadd.f32 %v2664, 1.0
      %v2914 = vlog2.pop %v2913
      %v2915 = vmul.f32 %v2914, 0.6931472
      %v2916 = vmul.f32 -0.5, %v2664
      %v2917 = vadd.f32 %v2916, 1.0
      %v2918 = vmul.f32 %v2917, %v2664
      %v2919 = vand.u32 2147483647, %v2664
      %vm2920 = vcmp.lt.f32.partialorder %v2919, 0.0004427343
      %v2921 = vsel %vm2920, %v2918, %v2915
      %v2922 = vadd.f32 %v2666, 1.0
      %v2923 = vlog2.pop %v2922
      %v2924 = vmul.f32 %v2923, 0.6931472
      %v2925 = vmul.f32 -0.5, %v2666
      %v2926 = vadd.f32 %v2925, 1.0
      %v2927 = vmul.f32 %v2926, %v2666
      %v2928 = vand.u32 2147483647, %v2666
      %vm2929 = vcmp.lt.f32.partialorder %v2928, 0.0004427343
      %v2930 = vsel %vm2929, %v2927, %v2924
      %v2931 = vadd.f32 %v2668, 1.0
      %v2932 = vlog2.pop %v2931
      %v2933 = vmul.f32 %v2932, 0.6931472
      %v2934 = vmul.f32 -0.5, %v2668
      %v2935 = vadd.f32 %v2934, 1.0
      %v2936 = vmul.f32 %v2935, %v2668
      %v2937 = vand.u32 2147483647, %v2668
      %vm2938 = vcmp.lt.f32.partialorder %v2937, 0.0004427343
      %v2939 = vsel %vm2938, %v2936, %v2933
      %v2940 = vadd.f32 %v2670, 1.0
      %v2941 = vlog2.pop %v2940
      %v2942 = vmul.f32 %v2941, 0.6931472
      %v2943 = vmul.f32 -0.5, %v2670
      %v2944 = vadd.f32 %v2943, 1.0
      %v2945 = vmul.f32 %v2944, %v2670
      %v2946 = vand.u32 2147483647, %v2670
      %vm2947 = vcmp.lt.f32.partialorder %v2946, 0.0004427343
      %v2948 = vsel %vm2947, %v2945, %v2942
      %v2949 = vadd.f32 %v2672, 1.0
      %v2950 = vlog2.pop %v2949
      %v2951 = vmul.f32 %v2950, 0.6931472
      %v2952 = vmul.f32 -0.5, %v2672
      %v2953 = vadd.f32 %v2952, 1.0
      %v2954 = vmul.f32 %v2953, %v2672
      %v2955 = vand.u32 2147483647, %v2672
      %vm2956 = vcmp.lt.f32.partialorder %v2955, 0.0004427343
      %v2957 = vsel %vm2956, %v2954, %v2951
      %v2958 = vadd.f32 %v2674, 1.0
      %v2959 = vlog2.pop %v2958
      %v2960 = vmul.f32 %v2959, 0.6931472
      %v2961 = vmul.f32 -0.5, %v2674
      %v2962 = vadd.f32 %v2961, 1.0
      %v2963 = vmul.f32 %v2962, %v2674
      %v2964 = vand.u32 2147483647, %v2674
      %vm2965 = vcmp.lt.f32.partialorder %v2964, 0.0004427343
      %v2966 = vsel %vm2965, %v2963, %v2960
      %v2967 = vadd.f32 %v2676, 1.0
      %v2968 = vlog2.pop %v2967
      %v2969 = vmul.f32 %v2968, 0.6931472
      %v2970 = vmul.f32 -0.5, %v2676
      %v2971 = vadd.f32 %v2970, 1.0
      %v2972 = vmul.f32 %v2971, %v2676
      %v2973 = vand.u32 2147483647, %v2676
      %vm2974 = vcmp.lt.f32.partialorder %v2973, 0.0004427343
      %v2975 = vsel %vm2974, %v2972, %v2969
      %v2976 = vadd.f32 %v2678, 1.0
      %v2977 = vlog2.pop %v2976
      %v2978 = vmul.f32 %v2977, 0.6931472
      %v2979 = vmul.f32 -0.5, %v2678
      %v2980 = vadd.f32 %v2979, 1.0
      %v2981 = vmul.f32 %v2980, %v2678
      %v2982 = vand.u32 2147483647, %v2678
      %vm2983 = vcmp.lt.f32.partialorder %v2982, 0.0004427343
      %v2984 = vsel %vm2983, %v2981, %v2978
      %v2985 = vsel %vm2543, %v2509, %v2687
      %v2986 = vsel %vm2544, %v2510, %v2696
      %v2987 = vsel %vm2545, %v2511, %v2705
      %v2988 = vsel %vm2546, %v2512, %v2714
      %v2989 = vsel %vm2547, %v2513, %v2723
      %v2990 = vsel %vm2548, %v2514, %v2732
      %v2991 = vsel %vm2549, %v2515, %v2741
      %v2992 = vsel %vm2550, %v2516, %v2750
      %v2993 = vsel %vm2551, %v2517, %v2759
      %v2994 = vsel %vm2552, %v2518, %v2768
      %v2995 = vsel %vm2553, %v2519, %v2777
      %v2996 = vsel %vm2554, %v2520, %v2786
      %v2997 = vsel %vm2555, %v2521, %v2795
      %v2998 = vsel %vm2556, %v2522, %v2804
      %v2999 = vsel %vm2557, %v2523, %v2813
      %v3000 = vsel %vm2558, %v2524, %v2822
      %v3001 = vsel %vm2559, %v2525, %v2831
      %v3002 = vsel %vm2560, %v2526, %v2840
      %v3003 = vsel %vm2561, %v2527, %v2849
      %v3004 = vsel %vm2562, %v2528, %v2858
      %v3005 = vsel %vm2563, %v2529, %v2867
      %v3006 = vsel %vm2564, %v2530, %v2876
      %v3007 = vsel %vm2565, %v2531, %v2885
      %v3008 = vsel %vm2566, %v2532, %v2894
      %v3009 = vsel %vm2567, %v2533, %v2903
      %v3010 = vsel %vm2568, %v2534, %v2912
      %v3011 = vsel %vm2569, %v2535, %v2921
      %v3012 = vsel %vm2570, %v2536, %v2930
      %v3013 = vsel %vm2571, %v2537, %v2939
      %v3014 = vsel %vm2572, %v2538, %v2948
      %v3015 = vsel %vm2573, %v2539, %v2957
      %v3016 = vsel %vm2574, %v2540, %v2966
      %v3017 = vsel %vm2575, %v2541, %v2975
      %v3018 = vsel %vm2576, %v2542, %v2984
      %v3019 = vld [vmem:[%s5] sm:$0xf]
      %v3020 = vld [vmem:[%s5 + $0x4] sm:$0xf]
      %v3021 = vld [vmem:[%s5 + $0x8] sm:$0xf]
      %v3022 = vld [vmem:[%s5 + $0xc] sm:$0xf]
      %v3023 = vld [vmem:[%s6] sm:$0xff]
      %v3024 = vlaneseq
      %v3025 = vshrl.u32 %v3024, 7
      %v3026 = vsub.s32 1, %v3025
      %v3027 = vrot.slane %v3023, %v3026
      %v3028 = vmul.f32 %v411, %v3027
      %v3029 = vmul.f32 %v416, %v3027
      %v3030 = vmul.f32 %v421, %v3027
      %v3031 = vmul.f32 %v426, %v3027
      %v3032 = vmul.f32 %v431, %v3027
      %v3033 = vmul.f32 %v436, %v3027
      %v3034 = vmul.f32 %v441, %v3027
      %v3035 = vmul.f32 %v446, %v3027
      %v3036 = vmul.f32 %v451, %v3027
      %v3037 = vmul.f32 %v456, %v3027
      %v3038 = vmul.f32 %v461, %v3027
      %v3039 = vmul.f32 %v466, %v3027
      %v3040 = vmul.f32 %v471, %v3027
      %v3041 = vmul.f32 %v476, %v3027
      %v3042 = vmul.f32 %v481, %v3027
      %v3043 = vmul.f32 %v486, %v3027
      %v3044 = vmul.f32 %v491, %v3027
      %v3045 = vmul.f32 %v496, %v3027
      %v3046 = vmul.f32 %v501, %v3027
      %v3047 = vmul.f32 %v506, %v3027
      %v3048 = vmul.f32 %v511, %v3027
      %v3049 = vmul.f32 %v516, %v3027
      %v3050 = vmul.f32 %v521, %v3027
      %v3051 = vmul.f32 %v526, %v3027
      %v3052 = vmul.f32 %v531, %v3027
      %v3053 = vmul.f32 %v536, %v3027
      %v3054 = vmul.f32 %v541, %v3027
      %v3055 = vmul.f32 %v546, %v3027
      %v3056 = vmul.f32 %v551, %v3027
      %v3057 = vmul.f32 %v556, %v3027
      %v3058 = vmul.f32 %v561, %v3027
      %v3059 = vmul.f32 %v566, %v3027
      %v3060 = vmul.f32 %v571, %v3027
      %v3061 = vmul.f32 %v576, %v3027
      %v3062 = vlaneseq
      %v3063 = vshrl.u32 %v3062, 7
      %v3064 = vsub.s32 2, %v3063
      %v3065 = vrot.slane %v3023, %v3064
      %v3066 = vadd.f32 %v3028, %v3065
      %v3067 = vadd.f32 %v3029, %v3065
      %v3068 = vadd.f32 %v3030, %v3065
      %v3069 = vadd.f32 %v3031, %v3065
      %v3070 = vadd.f32 %v3032, %v3065
      %v3071 = vadd.f32 %v3033, %v3065
      %v3072 = vadd.f32 %v3034, %v3065
      %v3073 = vadd.f32 %v3035, %v3065
      %v3074 = vadd.f32 %v3036, %v3065
      %v3075 = vadd.f32 %v3037, %v3065
      %v3076 = vadd.f32 %v3038, %v3065
      %v3077 = vadd.f32 %v3039, %v3065
      %v3078 = vadd.f32 %v3040, %v3065
      %v3079 = vadd.f32 %v3041, %v3065
      %v3080 = vadd.f32 %v3042, %v3065
      %v3081 = vadd.f32 %v3043, %v3065
      %v3082 = vadd.f32 %v3044, %v3065
      %v3083 = vadd.f32 %v3045, %v3065
      %v3084 = vadd.f32 %v3046, %v3065
      %v3085 = vadd.f32 %v3047, %v3065
      %v3086 = vadd.f32 %v3048, %v3065
      %v3087 = vadd.f32 %v3049, %v3065
      %v3088 = vadd.f32 %v3050, %v3065
      %v3089 = vadd.f32 %v3051, %v3065
      %v3090 = vadd.f32 %v3052, %v3065
      %v3091 = vadd.f32 %v3053, %v3065
      %v3092 = vadd.f32 %v3054, %v3065
      %v3093 = vadd.f32 %v3055, %v3065
      %v3094 = vadd.f32 %v3056, %v3065
      %v3095 = vadd.f32 %v3057, %v3065
      %v3096 = vadd.f32 %v3058, %v3065
      %v3097 = vadd.f32 %v3059, %v3065
      %v3098 = vadd.f32 %v3060, %v3065
      %v3099 = vadd.f32 %v3061, %v3065
      %v3100 = vxor.u32 %v3066, 2147483648
      %v3101 = vxor.u32 %v3067, 2147483648
      %v3102 = vxor.u32 %v3068, 2147483648
      %v3103 = vxor.u32 %v3069, 2147483648
      %v3104 = vxor.u32 %v3070, 2147483648
      %v3105 = vxor.u32 %v3071, 2147483648
      %v3106 = vxor.u32 %v3072, 2147483648
      %v3107 = vxor.u32 %v3073, 2147483648
      %v3108 = vxor.u32 %v3074, 2147483648
      %v3109 = vxor.u32 %v3075, 2147483648
      %v3110 = vxor.u32 %v3076, 2147483648
      %v3111 = vxor.u32 %v3077, 2147483648
      %v3112 = vxor.u32 %v3078, 2147483648
      %v3113 = vxor.u32 %v3079, 2147483648
      %v3114 = vxor.u32 %v3080, 2147483648
      %v3115 = vxor.u32 %v3081, 2147483648
      %v3116 = vxor.u32 %v3082, 2147483648
      %v3117 = vxor.u32 %v3083, 2147483648
      %v3118 = vxor.u32 %v3084, 2147483648
      %v3119 = vxor.u32 %v3085, 2147483648
      %v3120 = vxor.u32 %v3086, 2147483648
      %v3121 = vxor.u32 %v3087, 2147483648
      %v3122 = vxor.u32 %v3088, 2147483648
      %v3123 = vxor.u32 %v3089, 2147483648
      %v3124 = vxor.u32 %v3090, 2147483648
      %v3125 = vxor.u32 %v3091, 2147483648
      %v3126 = vxor.u32 %v3092, 2147483648
      %v3127 = vxor.u32 %v3093, 2147483648
      %v3128 = vxor.u32 %v3094, 2147483648
      %v3129 = vxor.u32 %v3095, 2147483648
      %v3130 = vxor.u32 %v3096, 2147483648
      %v3131 = vxor.u32 %v3097, 2147483648
      %v3132 = vxor.u32 %v3098, 2147483648
      %v3133 = vxor.u32 %v3099, 2147483648
      %v3134 = vmul.f32 %v3100, 1.442695
      %v3135 = vpow.pop %v3134
      %v3136 = vmul.f32 %v3101, 1.442695
      %v3137 = vpow.pop %v3136
      %v3138 = vmul.f32 %v3102, 1.442695
      %v3139 = vpow.pop %v3138
      %v3140 = vmul.f32 %v3103, 1.442695
      %v3141 = vpow.pop %v3140
      %v3142 = vmul.f32 %v3104, 1.442695
      %v3143 = vpow.pop %v3142
      %v3144 = vmul.f32 %v3105, 1.442695
      %v3145 = vpow.pop %v3144
      %v3146 = vmul.f32 %v3106, 1.442695
      %v3147 = vpow.pop %v3146
      %v3148 = vmul.f32 %v3107, 1.442695
      %v3149 = vpow.pop %v3148
      %v3150 = vmul.f32 %v3108, 1.442695
      %v3151 = vpow.pop %v3150
      %v3152 = vmul.f32 %v3109, 1.442695
      %v3153 = vpow.pop %v3152
      %v3154 = vmul.f32 %v3110, 1.442695
      %v3155 = vpow.pop %v3154
      %v3156 = vmul.f32 %v3111, 1.442695
      %v3157 = vpow.pop %v3156
      %v3158 = vmul.f32 %v3112, 1.442695
      %v3159 = vpow.pop %v3158
      %v3160 = vmul.f32 %v3113, 1.442695
      %v3161 = vpow.pop %v3160
      %v3162 = vmul.f32 %v3114, 1.442695
      %v3163 = vpow.pop %v3162
      %v3164 = vmul.f32 %v3115, 1.442695
      %v3165 = vpow.pop %v3164
      %v3166 = vmul.f32 %v3116, 1.442695
      %v3167 = vpow.pop %v3166
      %v3168 = vmul.f32 %v3117, 1.442695
      %v3169 = vpow.pop %v3168
      %v3170 = vmul.f32 %v3118, 1.442695
      %v3171 = vpow.pop %v3170
      %v3172 = vmul.f32 %v3119, 1.442695
      %v3173 = vpow.pop %v3172
      %v3174 = vmul.f32 %v3120, 1.442695
      %v3175 = vpow.pop %v3174
      %v3176 = vmul.f32 %v3121, 1.442695
      %v3177 = vpow.pop %v3176
      %v3178 = vmul.f32 %v3122, 1.442695
      %v3179 = vpow.pop %v3178
      %v3180 = vmul.f32 %v3123, 1.442695
      %v3181 = vpow.pop %v3180
      %v3182 = vmul.f32 %v3124, 1.442695
      %v3183 = vpow.pop %v3182
      %v3184 = vmul.f32 %v3125, 1.442695
      %v3185 = vpow.pop %v3184
      %v3186 = vmul.f32 %v3126, 1.442695
      %v3187 = vpow.pop %v3186
      %v3188 = vmul.f32 %v3127, 1.442695
      %v3189 = vpow.pop %v3188
      %v3190 = vmul.f32 %v3128, 1.442695
      %v3191 = vpow.pop %v3190
      %v3192 = vmul.f32 %v3129, 1.442695
      %v3193 = vpow.pop %v3192
      %v3194 = vmul.f32 %v3130, 1.442695
      %v3195 = vpow.pop %v3194
      %v3196 = vmul.f32 %v3131, 1.442695
      %v3197 = vpow.pop %v3196
      %v3198 = vmul.f32 %v3132, 1.442695
      %v3199 = vpow.pop %v3198
      %v3200 = vmul.f32 %v3133, 1.442695
      %v3201 = vpow.pop %v3200
      %v3202 = vadd.f32 %v3135, 1.0
      %v3203 = vadd.f32 %v3137, 1.0
      %v3204 = vadd.f32 %v3139, 1.0
      %v3205 = vadd.f32 %v3141, 1.0
      %v3206 = vadd.f32 %v3143, 1.0
      %v3207 = vadd.f32 %v3145, 1.0
      %v3208 = vadd.f32 %v3147, 1.0
      %v3209 = vadd.f32 %v3149, 1.0
      %v3210 = vadd.f32 %v3151, 1.0
      %v3211 = vadd.f32 %v3153, 1.0
      %v3212 = vadd.f32 %v3155, 1.0
      %v3213 = vadd.f32 %v3157, 1.0
      %v3214 = vadd.f32 %v3159, 1.0
      %v3215 = vadd.f32 %v3161, 1.0
      %v3216 = vadd.f32 %v3163, 1.0
      %v3217 = vadd.f32 %v3165, 1.0
      %v3218 = vadd.f32 %v3167, 1.0
      %v3219 = vadd.f32 %v3169, 1.0
      %v3220 = vadd.f32 %v3171, 1.0
      %v3221 = vadd.f32 %v3173, 1.0
      %v3222 = vadd.f32 %v3175, 1.0
      %v3223 = vadd.f32 %v3177, 1.0
      %v3224 = vadd.f32 %v3179, 1.0
      %v3225 = vadd.f32 %v3181, 1.0
      %v3226 = vadd.f32 %v3183, 1.0
      %v3227 = vadd.f32 %v3185, 1.0
      %v3228 = vadd.f32 %v3187, 1.0
      %v3229 = vadd.f32 %v3189, 1.0
      %v3230 = vadd.f32 %v3191, 1.0
      %v3231 = vadd.f32 %v3193, 1.0
      %v3232 = vadd.f32 %v3195, 1.0
      %v3233 = vadd.f32 %v3197, 1.0
      %v3234 = vadd.f32 %v3199, 1.0
      %v3235 = vadd.f32 %v3201, 1.0
      %v3236 = vrcp.pop %v3202
      %v3237 = vmul.f32 1.0, %v3236
      %v3238 = vrcp.pop %v3203
      %v3239 = vmul.f32 1.0, %v3238
      %v3240 = vrcp.pop %v3204
      %v3241 = vmul.f32 1.0, %v3240
      %v3242 = vrcp.pop %v3205
      %v3243 = vmul.f32 1.0, %v3242
      %v3244 = vrcp.pop %v3206
      %v3245 = vmul.f32 1.0, %v3244
      %v3246 = vrcp.pop %v3207
      %v3247 = vmul.f32 1.0, %v3246
      %v3248 = vrcp.pop %v3208
      %v3249 = vmul.f32 1.0, %v3248
      %v3250 = vrcp.pop %v3209
      %v3251 = vmul.f32 1.0, %v3250
      %v3252 = vrcp.pop %v3210
      %v3253 = vmul.f32 1.0, %v3252
      %v3254 = vrcp.pop %v3211
      %v3255 = vmul.f32 1.0, %v3254
      %v3256 = vrcp.pop %v3212
      %v3257 = vmul.f32 1.0, %v3256
      %v3258 = vrcp.pop %v3213
      %v3259 = vmul.f32 1.0, %v3258
      %v3260 = vrcp.pop %v3214
      %v3261 = vmul.f32 1.0, %v3260
      %v3262 = vrcp.pop %v3215
      %v3263 = vmul.f32 1.0, %v3262
      %v3264 = vrcp.pop %v3216
      %v3265 = vmul.f32 1.0, %v3264
      %v3266 = vrcp.pop %v3217
      %v3267 = vmul.f32 1.0, %v3266
      %v3268 = vrcp.pop %v3218
      %v3269 = vmul.f32 1.0, %v3268
      %v3270 = vrcp.pop %v3219
      %v3271 = vmul.f32 1.0, %v3270
      %v3272 = vrcp.pop %v3220
      %v3273 = vmul.f32 1.0, %v3272
      %v3274 = vrcp.pop %v3221
      %v3275 = vmul.f32 1.0, %v3274
      %v3276 = vrcp.pop %v3222
      %v3277 = vmul.f32 1.0, %v3276
      %v3278 = vrcp.pop %v3223
      %v3279 = vmul.f32 1.0, %v3278
      %v3280 = vrcp.pop %v3224
      %v3281 = vmul.f32 1.0, %v3280
      %v3282 = vrcp.pop %v3225
      %v3283 = vmul.f32 1.0, %v3282
      %v3284 = vrcp.pop %v3226
      %v3285 = vmul.f32 1.0, %v3284
      %v3286 = vrcp.pop %v3227
      %v3287 = vmul.f32 1.0, %v3286
      %v3288 = vrcp.pop %v3228
      %v3289 = vmul.f32 1.0, %v3288
      %v3290 = vrcp.pop %v3229
      %v3291 = vmul.f32 1.0, %v3290
      %v3292 = vrcp.pop %v3230
      %v3293 = vmul.f32 1.0, %v3292
      %v3294 = vrcp.pop %v3231
      %v3295 = vmul.f32 1.0, %v3294
      %v3296 = vrcp.pop %v3232
      %v3297 = vmul.f32 1.0, %v3296
      %v3298 = vrcp.pop %v3233
      %v3299 = vmul.f32 1.0, %v3298
      %v3300 = vrcp.pop %v3234
      %v3301 = vmul.f32 1.0, %v3300
      %v3302 = vrcp.pop %v3235
      %v3303 = vmul.f32 1.0, %v3302
      %v3304 = vlaneseq
      %v3305 = vshrl.u32 %v3304, 7
      %v3306 = vsub.s32 0, %v3305
      %v3307 = vrot.slane %v3023, %v3306
      %v3308 = vmul.f32 %v3307, %v3237
      %v3309 = vmul.f32 %v3307, %v3239
      %v3310 = vmul.f32 %v3307, %v3241
      %v3311 = vmul.f32 %v3307, %v3243
      %v3312 = vmul.f32 %v3307, %v3245
      %v3313 = vmul.f32 %v3307, %v3247
      %v3314 = vmul.f32 %v3307, %v3249
      %v3315 = vmul.f32 %v3307, %v3251
      %v3316 = vmul.f32 %v3307, %v3253
      %v3317 = vmul.f32 %v3307, %v3255
      %v3318 = vmul.f32 %v3307, %v3257
      %v3319 = vmul.f32 %v3307, %v3259
      %v3320 = vmul.f32 %v3307, %v3261
      %v3321 = vmul.f32 %v3307, %v3263
      %v3322 = vmul.f32 %v3307, %v3265
      %v3323 = vmul.f32 %v3307, %v3267
      %v3324 = vmul.f32 %v3307, %v3269
      %v3325 = vmul.f32 %v3307, %v3271
      %v3326 = vmul.f32 %v3307, %v3273
      %v3327 = vmul.f32 %v3307, %v3275
      %v3328 = vmul.f32 %v3307, %v3277
      %v3329 = vmul.f32 %v3307, %v3279
      %v3330 = vmul.f32 %v3307, %v3281
      %v3331 = vmul.f32 %v3307, %v3283
      %v3332 = vmul.f32 %v3307, %v3285
      %v3333 = vmul.f32 %v3307, %v3287
      %v3334 = vmul.f32 %v3307, %v3289
      %v3335 = vmul.f32 %v3307, %v3291
      %v3336 = vmul.f32 %v3307, %v3293
      %v3337 = vmul.f32 %v3307, %v3295
      %v3338 = vmul.f32 %v3307, %v3297
      %v3339 = vmul.f32 %v3307, %v3299
      %v3340 = vmul.f32 %v3307, %v3301
      %v3341 = vmul.f32 %v3307, %v3303
      %v3342 = vlaneseq
      %v3343 = vshrl.u32 %v3342, 7
      %v3344 = vsub.s32 3, %v3343
      %v3345 = vrot.slane %v3023, %v3344
      %v3346 = vmul.f32 %v411, %v3345
      %v3347 = vmul.f32 %v416, %v3345
      %v3348 = vmul.f32 %v421, %v3345
      %v3349 = vmul.f32 %v426, %v3345
      %v3350 = vmul.f32 %v431, %v3345
      %v3351 = vmul.f32 %v436, %v3345
      %v3352 = vmul.f32 %v441, %v3345
      %v3353 = vmul.f32 %v446, %v3345
      %v3354 = vmul.f32 %v451, %v3345
      %v3355 = vmul.f32 %v456, %v3345
      %v3356 = vmul.f32 %v461, %v3345
      %v3357 = vmul.f32 %v466, %v3345
      %v3358 = vmul.f32 %v471, %v3345
      %v3359 = vmul.f32 %v476, %v3345
      %v3360 = vmul.f32 %v481, %v3345
      %v3361 = vmul.f32 %v486, %v3345
      %v3362 = vmul.f32 %v491, %v3345
      %v3363 = vmul.f32 %v496, %v3345
      %v3364 = vmul.f32 %v501, %v3345
      %v3365 = vmul.f32 %v506, %v3345
      %v3366 = vmul.f32 %v511, %v3345
      %v3367 = vmul.f32 %v516, %v3345
      %v3368 = vmul.f32 %v521, %v3345
      %v3369 = vmul.f32 %v526, %v3345
      %v3370 = vmul.f32 %v531, %v3345
      %v3371 = vmul.f32 %v536, %v3345
      %v3372 = vmul.f32 %v541, %v3345
      %v3373 = vmul.f32 %v546, %v3345
      %v3374 = vmul.f32 %v551, %v3345
      %v3375 = vmul.f32 %v556, %v3345
      %v3376 = vmul.f32 %v561, %v3345
      %v3377 = vmul.f32 %v566, %v3345
      %v3378 = vmul.f32 %v571, %v3345
      %v3379 = vmul.f32 %v576, %v3345
      %v3380 = vadd.f32 %v3308, %v3346
      %v3381 = vadd.f32 %v3309, %v3347
      %v3382 = vadd.f32 %v3310, %v3348
      %v3383 = vadd.f32 %v3311, %v3349
      %v3384 = vadd.f32 %v3312, %v3350
      %v3385 = vadd.f32 %v3313, %v3351
      %v3386 = vadd.f32 %v3314, %v3352
      %v3387 = vadd.f32 %v3315, %v3353
      %v3388 = vadd.f32 %v3316, %v3354
      %v3389 = vadd.f32 %v3317, %v3355
      %v3390 = vadd.f32 %v3318, %v3356
      %v3391 = vadd.f32 %v3319, %v3357
      %v3392 = vadd.f32 %v3320, %v3358
      %v3393 = vadd.f32 %v3321, %v3359
      %v3394 = vadd.f32 %v3322, %v3360
      %v3395 = vadd.f32 %v3323, %v3361
      %v3396 = vadd.f32 %v3324, %v3362
      %v3397 = vadd.f32 %v3325, %v3363
      %v3398 = vadd.f32 %v3326, %v3364
      %v3399 = vadd.f32 %v3327, %v3365
      %v3400 = vadd.f32 %v3328, %v3366
      %v3401 = vadd.f32 %v3329, %v3367
      %v3402 = vadd.f32 %v3330, %v3368
      %v3403 = vadd.f32 %v3331, %v3369
      %v3404 = vadd.f32 %v3332, %v3370
      %v3405 = vadd.f32 %v3333, %v3371
      %v3406 = vadd.f32 %v3334, %v3372
      %v3407 = vadd.f32 %v3335, %v3373
      %v3408 = vadd.f32 %v3336, %v3374
      %v3409 = vadd.f32 %v3337, %v3375
      %v3410 = vadd.f32 %v3338, %v3376
      %v3411 = vadd.f32 %v3339, %v3377
      %v3412 = vadd.f32 %v3340, %v3378
      %v3413 = vadd.f32 %v3341, %v3379
      %v3414 = vpack.c.bf16 %v2986, %v2985
      %v3415 = vpack.c.bf16 %v2988, %v2987
      %v3416 = vpack.c.bf16 %v2990, %v2989
      %v3417 = vpack.c.bf16 %v2992, %v2991
      %v3418 = vpack.c.bf16 %v2994, %v2993
      %v3419 = vpack.c.bf16 %v2996, %v2995
      %v3420 = vpack.c.bf16 %v2998, %v2997
      %v3421 = vpack.c.bf16 %v3000, %v2999
      %v3422 = vpack.c.bf16 %v3002, %v3001
      %v3423 = vpack.c.bf16 %v3004, %v3003
      %v3424 = vpack.c.bf16 %v3006, %v3005
      %v3425 = vpack.c.bf16 %v3008, %v3007
      %v3426 = vpack.c.bf16 %v3010, %v3009
      %v3427 = vpack.c.bf16 %v3012, %v3011
      %v3428 = vpack.c.bf16 %v3014, %v3013
      %v3429 = vpack.c.bf16 %v3016, %v3015
      %v3430 = vpack.c.bf16 %v3018, %v3017
      %v3435 = vunpack.c.l.b16 %v3019
      %v3436 = vunpack.c.l.b16 %v3020
      %v3437 = vunpack.c.l.b16 %v3021
      %v3438 = vunpack.c.l.b16 %v3022
      %v3439 = vpack.c.b16 %v3436, %v3435
      %v3440 = vpack.c.b16 %v3438, %v3437
      %v3444 = vsel %vm2254, %v3414, 0
      %v3447 = vsel %vm2254, %v3415, 0
      %v3450 = vsel %vm2254, %v3416, 0
      %v3453 = vsel %vm2254, %v3417, 0
      %v3456 = vsel %vm2254, %v3418, 0
      %v3459 = vsel %vm2254, %v3419, 0
      %v3462 = vsel %vm2254, %v3420, 0
      %v3465 = vsel %vm2254, %v3421, 0
      %v3468 = vsel %vm2254, %v3422, 0
      %v3471 = vsel %vm2254, %v3423, 0
      %v3474 = vsel %vm2254, %v3424, 0
      %v3477 = vsel %vm2254, %v3425, 0
      %v3480 = vsel %vm2254, %v3426, 0
      %v3483 = vsel %vm2254, %v3427, 0
      %v3486 = vsel %vm2254, %v3428, 0
      %v3489 = vsel %vm2254, %v3429, 0
      %v3492 = vsel %vm2254, %v3430, 0
      %3494 = vmatprep.subr.bf16.mxu0 0
      %3495 = vmatpush1.bf16.msra.mxu0 %v3439
      %3496 = vmatprep.subr.bf16.mxu0 0
      %3497 = vmatpush1.bf16.msra.mxu0 %v3440
      %3498 = vmatprep.subr.bf16.mxu0 0
      %3499 = vmatpush1.bf16.msra.mxu0 0
      %3500 = vmatprep.subr.bf16.mxu0 0
      %3501 = vmatpush1.bf16.msra.mxu0 0
      %3502 = vmatprep.subr.bf16.mxu0 0
      %3503 = vmatpush1.bf16.msra.mxu0 0
      %3504 = vmatprep.subr.bf16.mxu0 0
      %3505 = vmatpush1.bf16.msra.mxu0 0
      %3506 = vmatprep.subr.bf16.mxu0 0
      %3507 = vmatpush1.bf16.msra.mxu0 0
      %3508 = vmatprep.subr.bf16.mxu0 0
      %3509 = vmatpush1.bf16.msra.mxu0 0
      %3510 = vmatprep.subr.bf16.mxu0 0
      %3511 = vmatpush1.bf16.msra.mxu0 0
      %3512 = vmatprep.subr.bf16.mxu0 0
      %3513 = vmatpush1.bf16.msra.mxu0 0
      %3514 = vmatprep.subr.bf16.mxu0 0
      %3515 = vmatpush1.bf16.msra.mxu0 0
      %3516 = vmatprep.subr.bf16.mxu0 0
      %3517 = vmatpush1.bf16.msra.mxu0 0
      %3518 = vmatprep.subr.bf16.mxu0 0
      %3519 = vmatpush1.bf16.msra.mxu0 0
      %3520 = vmatprep.subr.bf16.mxu0 0
      %3521 = vmatpush1.bf16.msra.mxu0 0
      %3522 = vmatprep.subr.bf16.mxu0 0
      %3523 = vmatpush1.bf16.msra.mxu0 0
      %3524 = vmatprep.subr.bf16.mxu0 0
      %3525 = vmatpush1.bf16.msra.mxu0 0
      %3526 = vmatprep.mubr.bf16.mxu0 0
      %3527 = vmatmul.mubr.bf16.gmra.mrb[0].mxu0 %v3444
      %v3528 = vpop.f32.mrb[0].mxu0
      %v3529 = vadd.f32 0.0, %v3528
      %v3530 = vpop.f32.mrb[0].mxu0
      %v3531 = vpop.f32.mrb[0].mxu0
      %v3532 = vadd.f32 0.0, %v3531
      %v3533 = vpop.f32.mrb[0].mxu0
      %3534 = vmatprep.mubr.bf16.mxu0 0
      %3535 = vmatmul.mubr.bf16.gmra.mrb[0].mxu0 %v3447
      %v3536 = vpop.f32.mrb[0].mxu0
      %v3537 = vadd.f32 0.0, %v3536
      %v3538 = vpop.f32.mrb[0].mxu0
      %v3539 = vpop.f32.mrb[0].mxu0
      %v3540 = vadd.f32 0.0, %v3539
      %v3541 = vpop.f32.mrb[0].mxu0
      %3542 = vmatprep.mubr.bf16.mxu0 0
      %3543 = vmatmul.mubr.bf16.gmra.mrb[0].mxu0 %v3450
      %v3544 = vpop.f32.mrb[0].mxu0
      %v3545 = vadd.f32 0.0, %v3544
      %v3546 = vpop.f32.mrb[0].mxu0
      %v3547 = vpop.f32.mrb[0].mxu0
      %v3548 = vadd.f32 0.0, %v3547
      %v3549 = vpop.f32.mrb[0].mxu0
      %3550 = vmatprep.mubr.bf16.mxu0 0
      %3551 = vmatmul.mubr.bf16.gmra.mrb[0].mxu0 %v3453
      %v3552 = vpop.f32.mrb[0].mxu0
      %v3553 = vadd.f32 0.0, %v3552
      %v3554 = vpop.f32.mrb[0].mxu0
      %v3555 = vpop.f32.mrb[0].mxu0
      %v3556 = vadd.f32 0.0, %v3555
      %v3557 = vpop.f32.mrb[0].mxu0
      %3558 = vmatprep.mubr.bf16.mxu0 0
      %3559 = vmatmul.mubr.bf16.gmra.mrb[0].mxu0 %v3456
      %v3560 = vpop.f32.mrb[0].mxu0
      %v3561 = vadd.f32 0.0, %v3560
      %v3562 = vpop.f32.mrb[0].mxu0
      %v3563 = vpop.f32.mrb[0].mxu0
      %v3564 = vadd.f32 0.0, %v3563
      %v3565 = vpop.f32.mrb[0].mxu0
      %3566 = vmatprep.mubr.bf16.mxu0 0
      %3567 = vmatmul.mubr.bf16.gmra.mrb[0].mxu0 %v3459
      %v3568 = vpop.f32.mrb[0].mxu0
      %v3569 = vadd.f32 0.0, %v3568
      %v3570 = vpop.f32.mrb[0].mxu0
      %v3571 = vpop.f32.mrb[0].mxu0
      %v3572 = vadd.f32 0.0, %v3571
      %v3573 = vpop.f32.mrb[0].mxu0
      %3574 = vmatprep.mubr.bf16.mxu0 0
      %3575 = vmatmul.mubr.bf16.gmra.mrb[0].mxu0 %v3462
      %v3576 = vpop.f32.mrb[0].mxu0
      %v3577 = vadd.f32 0.0, %v3576
      %v3578 = vpop.f32.mrb[0].mxu0
      %v3579 = vpop.f32.mrb[0].mxu0
      %v3580 = vadd.f32 0.0, %v3579
      %v3581 = vpop.f32.mrb[0].mxu0
      %3582 = vmatprep.mubr.bf16.mxu0 0
      %3583 = vmatmul.mubr.bf16.gmra.mrb[0].mxu0 %v3465
      %v3584 = vpop.f32.mrb[0].mxu0
      %v3585 = vadd.f32 0.0, %v3584
      %v3586 = vpop.f32.mrb[0].mxu0
      %v3587 = vpop.f32.mrb[0].mxu0
      %v3588 = vadd.f32 0.0, %v3587
      %v3589 = vpop.f32.mrb[0].mxu0
      %3590 = vmatprep.mubr.bf16.mxu0 0
      %3591 = vmatmul.mubr.bf16.gmra.mrb[0].mxu0 %v3468
      %v3592 = vpop.f32.mrb[0].mxu0
      %v3593 = vadd.f32 0.0, %v3592
      %v3594 = vpop.f32.mrb[0].mxu0
      %v3595 = vpop.f32.mrb[0].mxu0
      %v3596 = vadd.f32 0.0, %v3595
      %v3597 = vpop.f32.mrb[0].mxu0
      %3598 = vmatprep.mubr.bf16.mxu0 0
      %3599 = vmatmul.mubr.bf16.gmra.mrb[0].mxu0 %v3471
      %v3600 = vpop.f32.mrb[0].mxu0
      %v3601 = vadd.f32 0.0, %v3600
      %v3602 = vpop.f32.mrb[0].mxu0
      %v3603 = vpop.f32.mrb[0].mxu0
      %v3604 = vadd.f32 0.0, %v3603
      %v3605 = vpop.f32.mrb[0].mxu0
      %3606 = vmatprep.mubr.bf16.mxu0 0
      %3607 = vmatmul.mubr.bf16.gmra.mrb[0].mxu0 %v3474
      %v3608 = vpop.f32.mrb[0].mxu0
      %v3609 = vadd.f32 0.0, %v3608
      %v3610 = vpop.f32.mrb[0].mxu0
      %v3611 = vpop.f32.mrb[0].mxu0
      %v3612 = vadd.f32 0.0, %v3611
      %v3613 = vpop.f32.mrb[0].mxu0
      %3614 = vmatprep.mubr.bf16.mxu0 0
      %3615 = vmatmul.mubr.bf16.gmra.mrb[0].mxu0 %v3477
      %v3616 = vpop.f32.mrb[0].mxu0
      %v3617 = vadd.f32 0.0, %v3616
      %v3618 = vpop.f32.mrb[0].mxu0
      %v3619 = vpop.f32.mrb[0].mxu0
      %v3620 = vadd.f32 0.0, %v3619
      %v3621 = vpop.f32.mrb[0].mxu0
      %3622 = vmatprep.mubr.bf16.mxu0 0
      %3623 = vmatmul.mubr.bf16.gmra.mrb[0].mxu0 %v3480
      %v3624 = vpop.f32.mrb[0].mxu0
      %v3625 = vadd.f32 0.0, %v3624
      %v3626 = vpop.f32.mrb[0].mxu0
      %v3627 = vpop.f32.mrb[0].mxu0
      %v3628 = vadd.f32 0.0, %v3627
      %v3629 = vpop.f32.mrb[0].mxu0
      %3630 = vmatprep.mubr.bf16.mxu0 0
      %3631 = vmatmul.mubr.bf16.gmra.mrb[0].mxu0 %v3483
      %v3632 = vpop.f32.mrb[0].mxu0
      %v3633 = vadd.f32 0.0, %v3632
      %v3634 = vpop.f32.mrb[0].mxu0
      %v3635 = vpop.f32.mrb[0].mxu0
      %v3636 = vadd.f32 0.0, %v3635
      %v3637 = vpop.f32.mrb[0].mxu0
      %3638 = vmatprep.mubr.bf16.mxu0 0
      %3639 = vmatmul.mubr.bf16.gmra.mrb[0].mxu0 %v3486
      %v3640 = vpop.f32.mrb[0].mxu0
      %v3641 = vadd.f32 0.0, %v3640
      %v3642 = vpop.f32.mrb[0].mxu0
      %v3643 = vpop.f32.mrb[0].mxu0
      %v3644 = vadd.f32 0.0, %v3643
      %v3645 = vpop.f32.mrb[0].mxu0
      %3646 = vmatprep.mubr.bf16.mxu0 0
      %3647 = vmatmul.mubr.bf16.gmra.mrb[0].mxu0 %v3489
      %v3648 = vpop.f32.mrb[0].mxu0
      %v3649 = vadd.f32 0.0, %v3648
      %v3650 = vpop.f32.mrb[0].mxu0
      %v3651 = vpop.f32.mrb[0].mxu0
      %v3652 = vadd.f32 0.0, %v3651
      %v3653 = vpop.f32.mrb[0].mxu0
      %3654 = vmatprep.mubr.bf16.mxu0 0
      %3655 = vmatmul.mubr.bf16.gmra.mrb[0].mxu0 %v3492
      %v3656 = vpop.f32.mrb[0].mxu0
      %v3657 = vadd.f32 0.0, %v3656
      %v3658 = vpop.f32.mrb[0].mxu0
      %v3659 = vpop.f32.mrb[0].mxu0
      %v3660 = vadd.f32 0.0, %v3659
      %v3661 = vpop.f32.mrb[0].mxu0
      %3662 = vdwg.mxu0
      %v3663 = vmul.f32 %v3529, %v3237
      %v3664 = vmul.f32 %v3532, %v3239
      %v3665 = vmul.f32 %v3537, %v3241
      %v3666 = vmul.f32 %v3540, %v3243
      %v3667 = vmul.f32 %v3545, %v3245
      %v3668 = vmul.f32 %v3548, %v3247
      %v3669 = vmul.f32 %v3553, %v3249
      %v3670 = vmul.f32 %v3556, %v3251
      %v3671 = vmul.f32 %v3561, %v3253
      %v3672 = vmul.f32 %v3564, %v3255
      %v3673 = vmul.f32 %v3569, %v3257
      %v3674 = vmul.f32 %v3572, %v3259
      %v3675 = vmul.f32 %v3577, %v3261
      %v3676 = vmul.f32 %v3580, %v3263
      %v3677 = vmul.f32 %v3585, %v3265
      %v3678 = vmul.f32 %v3588, %v3267
      %v3679 = vmul.f32 %v3593, %v3269
      %v3680 = vmul.f32 %v3596, %v3271
      %v3681 = vmul.f32 %v3601, %v3273
      %v3682 = vmul.f32 %v3604, %v3275
      %v3683 = vmul.f32 %v3609, %v3277
      %v3684 = vmul.f32 %v3612, %v3279
      %v3685 = vmul.f32 %v3617, %v3281
      %v3686 = vmul.f32 %v3620, %v3283
      %v3687 = vmul.f32 %v3625, %v3285
      %v3688 = vmul.f32 %v3628, %v3287
      %v3689 = vmul.f32 %v3633, %v3289
      %v3690 = vmul.f32 %v3636, %v3291
      %v3691 = vmul.f32 %v3641, %v3293
      %v3692 = vmul.f32 %v3644, %v3295
      %v3693 = vmul.f32 %v3649, %v3297
      %v3694 = vmul.f32 %v3652, %v3299
      %v3695 = vmul.f32 %v3657, %v3301
      %v3696 = vmul.f32 %v3660, %v3303
      %v3697 = vadd.f32 %v3663, %v3380
      %v3698 = vadd.f32 %v3664, %v3381
      %v3699 = vadd.f32 %v3665, %v3382
      %v3700 = vadd.f32 %v3666, %v3383
      %v3701 = vadd.f32 %v3667, %v3384
      %v3702 = vadd.f32 %v3668, %v3385
      %v3703 = vadd.f32 %v3669, %v3386
      %v3704 = vadd.f32 %v3670, %v3387
      %v3705 = vadd.f32 %v3671, %v3388
      %v3706 = vadd.f32 %v3672, %v3389
      %v3707 = vadd.f32 %v3673, %v3390
      %v3708 = vadd.f32 %v3674, %v3391
      %v3709 = vadd.f32 %v3675, %v3392
      %v3710 = vadd.f32 %v3676, %v3393
      %v3711 = vadd.f32 %v3677, %v3394
      %v3712 = vadd.f32 %v3678, %v3395
      %v3713 = vadd.f32 %v3679, %v3396
      %v3714 = vadd.f32 %v3680, %v3397
      %v3715 = vadd.f32 %v3681, %v3398
      %v3716 = vadd.f32 %v3682, %v3399
      %v3717 = vadd.f32 %v3683, %v3400
      %v3718 = vadd.f32 %v3684, %v3401
      %v3719 = vadd.f32 %v3685, %v3402
      %v3720 = vadd.f32 %v3686, %v3403
      %v3721 = vadd.f32 %v3687, %v3404
      %v3722 = vadd.f32 %v3688, %v3405
      %v3723 = vadd.f32 %v3689, %v3406
      %v3724 = vadd.f32 %v3690, %v3407
      %v3725 = vadd.f32 %v3691, %v3408
      %v3726 = vadd.f32 %v3692, %v3409
      %v3727 = vadd.f32 %v3693, %v3410
      %v3728 = vadd.f32 %v3694, %v3411
      %v3729 = vadd.f32 %v3695, %v3412
      %v3730 = vadd.f32 %v3696, %v3413
      %vm3731 = vcmp.gt.f32.partialorder %v3697, 20.0
      %vm3732 = vcmp.gt.f32.partialorder %v3698, 20.0
      %vm3733 = vcmp.gt.f32.partialorder %v3699, 20.0
      %vm3734 = vcmp.gt.f32.partialorder %v3700, 20.0
      %vm3735 = vcmp.gt.f32.partialorder %v3701, 20.0
      %vm3736 = vcmp.gt.f32.partialorder %v3702, 20.0
      %vm3737 = vcmp.gt.f32.partialorder %v3703, 20.0
      %vm3738 = vcmp.gt.f32.partialorder %v3704, 20.0
      %vm3739 = vcmp.gt.f32.partialorder %v3705, 20.0
      %vm3740 = vcmp.gt.f32.partialorder %v3706, 20.0
      %vm3741 = vcmp.gt.f32.partialorder %v3707, 20.0
      %vm3742 = vcmp.gt.f32.partialorder %v3708, 20.0
      %vm3743 = vcmp.gt.f32.partialorder %v3709, 20.0
      %vm3744 = vcmp.gt.f32.partialorder %v3710, 20.0
      %vm3745 = vcmp.gt.f32.partialorder %v3711, 20.0
      %vm3746 = vcmp.gt.f32.partialorder %v3712, 20.0
      %vm3747 = vcmp.gt.f32.partialorder %v3713, 20.0
      %vm3748 = vcmp.gt.f32.partialorder %v3714, 20.0
      %vm3749 = vcmp.gt.f32.partialorder %v3715, 20.0
      %vm3750 = vcmp.gt.f32.partialorder %v3716, 20.0
      %vm3751 = vcmp.gt.f32.partialorder %v3717, 20.0
      %vm3752 = vcmp.gt.f32.partialorder %v3718, 20.0
      %vm3753 = vcmp.gt.f32.partialorder %v3719, 20.0
      %vm3754 = vcmp.gt.f32.partialorder %v3720, 20.0
      %vm3755 = vcmp.gt.f32.partialorder %v3721, 20.0
      %vm3756 = vcmp.gt.f32.partialorder %v3722, 20.0
      %vm3757 = vcmp.gt.f32.partialorder %v3723, 20.0
      %vm3758 = vcmp.gt.f32.partialorder %v3724, 20.0
      %vm3759 = vcmp.gt.f32.partialorder %v3725, 20.0
      %vm3760 = vcmp.gt.f32.partialorder %v3726, 20.0
      %vm3761 = vcmp.gt.f32.partialorder %v3727, 20.0
      %vm3762 = vcmp.gt.f32.partialorder %v3728, 20.0
      %vm3763 = vcmp.gt.f32.partialorder %v3729, 20.0
      %vm3764 = vcmp.gt.f32.partialorder %v3730, 20.0
      %v3765 = vmin.f32 %v3697, 20.0
      %v3766 = vmin.f32 %v3698, 20.0
      %v3767 = vmin.f32 %v3699, 20.0
      %v3768 = vmin.f32 %v3700, 20.0
      %v3769 = vmin.f32 %v3701, 20.0
      %v3770 = vmin.f32 %v3702, 20.0
      %v3771 = vmin.f32 %v3703, 20.0
      %v3772 = vmin.f32 %v3704, 20.0
      %v3773 = vmin.f32 %v3705, 20.0
      %v3774 = vmin.f32 %v3706, 20.0
      %v3775 = vmin.f32 %v3707, 20.0
      %v3776 = vmin.f32 %v3708, 20.0
      %v3777 = vmin.f32 %v3709, 20.0
      %v3778 = vmin.f32 %v3710, 20.0
      %v3779 = vmin.f32 %v3711, 20.0
      %v3780 = vmin.f32 %v3712, 20.0
      %v3781 = vmin.f32 %v3713, 20.0
      %v3782 = vmin.f32 %v3714, 20.0
      %v3783 = vmin.f32 %v3715, 20.0
      %v3784 = vmin.f32 %v3716, 20.0
      %v3785 = vmin.f32 %v3717, 20.0
      %v3786 = vmin.f32 %v3718, 20.0
      %v3787 = vmin.f32 %v3719, 20.0
      %v3788 = vmin.f32 %v3720, 20.0
      %v3789 = vmin.f32 %v3721, 20.0
      %v3790 = vmin.f32 %v3722, 20.0
      %v3791 = vmin.f32 %v3723, 20.0
      %v3792 = vmin.f32 %v3724, 20.0
      %v3793 = vmin.f32 %v3725, 20.0
      %v3794 = vmin.f32 %v3726, 20.0
      %v3795 = vmin.f32 %v3727, 20.0
      %v3796 = vmin.f32 %v3728, 20.0
      %v3797 = vmin.f32 %v3729, 20.0
      %v3798 = vmin.f32 %v3730, 20.0
      %v3799 = vmul.f32 %v3765, 1.442695
      %v3800 = vpow.pop %v3799
      %v3801 = vmul.f32 %v3766, 1.442695
      %v3802 = vpow.pop %v3801
      %v3803 = vmul.f32 %v3767, 1.442695
      %v3804 = vpow.pop %v3803
      %v3805 = vmul.f32 %v3768, 1.442695
      %v3806 = vpow.pop %v3805
      %v3807 = vmul.f32 %v3769, 1.442695
      %v3808 = vpow.pop %v3807
      %v3809 = vmul.f32 %v3770, 1.442695
      %v3810 = vpow.pop %v3809
      %v3811 = vmul.f32 %v3771, 1.442695
      %v3812 = vpow.pop %v3811
      %v3813 = vmul.f32 %v3772, 1.442695
      %v3814 = vpow.pop %v3813
      %v3815 = vmul.f32 %v3773, 1.442695
      %v3816 = vpow.pop %v3815
      %v3817 = vmul.f32 %v3774, 1.442695
      %v3818 = vpow.pop %v3817
      %v3819 = vmul.f32 %v3775, 1.442695
      %v3820 = vpow.pop %v3819
      %v3821 = vmul.f32 %v3776, 1.442695
      %v3822 = vpow.pop %v3821
      %v3823 = vmul.f32 %v3777, 1.442695
      %v3824 = vpow.pop %v3823
      %v3825 = vmul.f32 %v3778, 1.442695
      %v3826 = vpow.pop %v3825
      %v3827 = vmul.f32 %v3779, 1.442695
      %v3828 = vpow.pop %v3827
      %v3829 = vmul.f32 %v3780, 1.442695
      %v3830 = vpow.pop %v3829
      %v3831 = vmul.f32 %v3781, 1.442695
      %v3832 = vpow.pop %v3831
      %v3833 = vmul.f32 %v3782, 1.442695
      %v3834 = vpow.pop %v3833
      %v3835 = vmul.f32 %v3783, 1.442695
      %v3836 = vpow.pop %v3835
      %v3837 = vmul.f32 %v3784, 1.442695
      %v3838 = vpow.pop %v3837
      %v3839 = vmul.f32 %v3785, 1.442695
      %v3840 = vpow.pop %v3839
      %v3841 = vmul.f32 %v3786, 1.442695
      %v3842 = vpow.pop %v3841
      %v3843 = vmul.f32 %v3787, 1.442695
      %v3844 = vpow.pop %v3843
      %v3845 = vmul.f32 %v3788, 1.442695
      %v3846 = vpow.pop %v3845
      %v3847 = vmul.f32 %v3789, 1.442695
      %v3848 = vpow.pop %v3847
      %v3849 = vmul.f32 %v3790, 1.442695
      %v3850 = vpow.pop %v3849
      %v3851 = vmul.f32 %v3791, 1.442695
      %v3852 = vpow.pop %v3851
      %v3853 = vmul.f32 %v3792, 1.442695
      %v3854 = vpow.pop %v3853
      %v3855 = vmul.f32 %v3793, 1.442695
      %v3856 = vpow.pop %v3855
      %v3857 = vmul.f32 %v3794, 1.442695
      %v3858 = vpow.pop %v3857
      %v3859 = vmul.f32 %v3795, 1.442695
      %v3860 = vpow.pop %v3859
      %v3861 = vmul.f32 %v3796, 1.442695
      %v3862 = vpow.pop %v3861
      %v3863 = vmul.f32 %v3797, 1.442695
      %v3864 = vpow.pop %v3863
      %v3865 = vmul.f32 %v3798, 1.442695
      %v3866 = vpow.pop %v3865
      %v3867 = vadd.f32 %v3800, 1.0
      %v3868 = vlog2.pop %v3867
      %v3869 = vmul.f32 %v3868, 0.6931472
      %v3870 = vmul.f32 -0.5, %v3800
      %v3871 = vadd.f32 %v3870, 1.0
      %v3872 = vmul.f32 %v3871, %v3800
      %v3873 = vand.u32 2147483647, %v3800
      %vm3874 = vcmp.lt.f32.partialorder %v3873, 0.0004427343
      %v3875 = vsel %vm3874, %v3872, %v3869
      %v3876 = vadd.f32 %v3802, 1.0
      %v3877 = vlog2.pop %v3876
      %v3878 = vmul.f32 %v3877, 0.6931472
      %v3879 = vmul.f32 -0.5, %v3802
      %v3880 = vadd.f32 %v3879, 1.0
      %v3881 = vmul.f32 %v3880, %v3802
      %v3882 = vand.u32 2147483647, %v3802
      %vm3883 = vcmp.lt.f32.partialorder %v3882, 0.0004427343
      %v3884 = vsel %vm3883, %v3881, %v3878
      %v3885 = vadd.f32 %v3804, 1.0
      %v3886 = vlog2.pop %v3885
      %v3887 = vmul.f32 %v3886, 0.6931472
      %v3888 = vmul.f32 -0.5, %v3804
      %v3889 = vadd.f32 %v3888, 1.0
      %v3890 = vmul.f32 %v3889, %v3804
      %v3891 = vand.u32 2147483647, %v3804
      %vm3892 = vcmp.lt.f32.partialorder %v3891, 0.0004427343
      %v3893 = vsel %vm3892, %v3890, %v3887
      %v3894 = vadd.f32 %v3806, 1.0
      %v3895 = vlog2.pop %v3894
      %v3896 = vmul.f32 %v3895, 0.6931472
      %v3897 = vmul.f32 -0.5, %v3806
      %v3898 = vadd.f32 %v3897, 1.0
      %v3899 = vmul.f32 %v3898, %v3806
      %v3900 = vand.u32 2147483647, %v3806
      %vm3901 = vcmp.lt.f32.partialorder %v3900, 0.0004427343
      %v3902 = vsel %vm3901, %v3899, %v3896
      %v3903 = vadd.f32 %v3808, 1.0
      %v3904 = vlog2.pop %v3903
      %v3905 = vmul.f32 %v3904, 0.6931472
      %v3906 = vmul.f32 -0.5, %v3808
      %v3907 = vadd.f32 %v3906, 1.0
      %v3908 = vmul.f32 %v3907, %v3808
      %v3909 = vand.u32 2147483647, %v3808
      %vm3910 = vcmp.lt.f32.partialorder %v3909, 0.0004427343
      %v3911 = vsel %vm3910, %v3908, %v3905
      %v3912 = vadd.f32 %v3810, 1.0
      %v3913 = vlog2.pop %v3912
      %v3914 = vmul.f32 %v3913, 0.6931472
      %v3915 = vmul.f32 -0.5, %v3810
      %v3916 = vadd.f32 %v3915, 1.0
      %v3917 = vmul.f32 %v3916, %v3810
      %v3918 = vand.u32 2147483647, %v3810
      %vm3919 = vcmp.lt.f32.partialorder %v3918, 0.0004427343
      %v3920 = vsel %vm3919, %v3917, %v3914
      %v3921 = vadd.f32 %v3812, 1.0
      %v3922 = vlog2.pop %v3921
      %v3923 = vmul.f32 %v3922, 0.6931472
      %v3924 = vmul.f32 -0.5, %v3812
      %v3925 = vadd.f32 %v3924, 1.0
      %v3926 = vmul.f32 %v3925, %v3812
      %v3927 = vand.u32 2147483647, %v3812
      %vm3928 = vcmp.lt.f32.partialorder %v3927, 0.0004427343
      %v3929 = vsel %vm3928, %v3926, %v3923
      %v3930 = vadd.f32 %v3814, 1.0
      %v3931 = vlog2.pop %v3930
      %v3932 = vmul.f32 %v3931, 0.6931472
      %v3933 = vmul.f32 -0.5, %v3814
      %v3934 = vadd.f32 %v3933, 1.0
      %v3935 = vmul.f32 %v3934, %v3814
      %v3936 = vand.u32 2147483647, %v3814
      %vm3937 = vcmp.lt.f32.partialorder %v3936, 0.0004427343
      %v3938 = vsel %vm3937, %v3935, %v3932
      %v3939 = vadd.f32 %v3816, 1.0
      %v3940 = vlog2.pop %v3939
      %v3941 = vmul.f32 %v3940, 0.6931472
      %v3942 = vmul.f32 -0.5, %v3816
      %v3943 = vadd.f32 %v3942, 1.0
      %v3944 = vmul.f32 %v3943, %v3816
      %v3945 = vand.u32 2147483647, %v3816
      %vm3946 = vcmp.lt.f32.partialorder %v3945, 0.0004427343
      %v3947 = vsel %vm3946, %v3944, %v3941
      %v3948 = vadd.f32 %v3818, 1.0
      %v3949 = vlog2.pop %v3948
      %v3950 = vmul.f32 %v3949, 0.6931472
      %v3951 = vmul.f32 -0.5, %v3818
      %v3952 = vadd.f32 %v3951, 1.0
      %v3953 = vmul.f32 %v3952, %v3818
      %v3954 = vand.u32 2147483647, %v3818
      %vm3955 = vcmp.lt.f32.partialorder %v3954, 0.0004427343
      %v3956 = vsel %vm3955, %v3953, %v3950
      %v3957 = vadd.f32 %v3820, 1.0
      %v3958 = vlog2.pop %v3957
      %v3959 = vmul.f32 %v3958, 0.6931472
      %v3960 = vmul.f32 -0.5, %v3820
      %v3961 = vadd.f32 %v3960, 1.0
      %v3962 = vmul.f32 %v3961, %v3820
      %v3963 = vand.u32 2147483647, %v3820
      %vm3964 = vcmp.lt.f32.partialorder %v3963, 0.0004427343
      %v3965 = vsel %vm3964, %v3962, %v3959
      %v3966 = vadd.f32 %v3822, 1.0
      %v3967 = vlog2.pop %v3966
      %v3968 = vmul.f32 %v3967, 0.6931472
      %v3969 = vmul.f32 -0.5, %v3822
      %v3970 = vadd.f32 %v3969, 1.0
      %v3971 = vmul.f32 %v3970, %v3822
      %v3972 = vand.u32 2147483647, %v3822
      %vm3973 = vcmp.lt.f32.partialorder %v3972, 0.0004427343
      %v3974 = vsel %vm3973, %v3971, %v3968
      %v3975 = vadd.f32 %v3824, 1.0
      %v3976 = vlog2.pop %v3975
      %v3977 = vmul.f32 %v3976, 0.6931472
      %v3978 = vmul.f32 -0.5, %v3824
      %v3979 = vadd.f32 %v3978, 1.0
      %v3980 = vmul.f32 %v3979, %v3824
      %v3981 = vand.u32 2147483647, %v3824
      %vm3982 = vcmp.lt.f32.partialorder %v3981, 0.0004427343
      %v3983 = vsel %vm3982, %v3980, %v3977
      %v3984 = vadd.f32 %v3826, 1.0
      %v3985 = vlog2.pop %v3984
      %v3986 = vmul.f32 %v3985, 0.6931472
      %v3987 = vmul.f32 -0.5, %v3826
      %v3988 = vadd.f32 %v3987, 1.0
      %v3989 = vmul.f32 %v3988, %v3826
      %v3990 = vand.u32 2147483647, %v3826
      %vm3991 = vcmp.lt.f32.partialorder %v3990, 0.0004427343
      %v3992 = vsel %vm3991, %v3989, %v3986
      %v3993 = vadd.f32 %v3828, 1.0
      %v3994 = vlog2.pop %v3993
      %v3995 = vmul.f32 %v3994, 0.6931472
      %v3996 = vmul.f32 -0.5, %v3828
      %v3997 = vadd.f32 %v3996, 1.0
      %v3998 = vmul.f32 %v3997, %v3828
      %v3999 = vand.u32 2147483647, %v3828
      %vm4000 = vcmp.lt.f32.partialorder %v3999, 0.0004427343
      %v4001 = vsel %vm4000, %v3998, %v3995
      %v4002 = vadd.f32 %v3830, 1.0
      %v4003 = vlog2.pop %v4002
      %v4004 = vmul.f32 %v4003, 0.6931472
      %v4005 = vmul.f32 -0.5, %v3830
      %v4006 = vadd.f32 %v4005, 1.0
      %v4007 = vmul.f32 %v4006, %v3830
      %v4008 = vand.u32 2147483647, %v3830
      %vm4009 = vcmp.lt.f32.partialorder %v4008, 0.0004427343
      %v4010 = vsel %vm4009, %v4007, %v4004
      %v4011 = vadd.f32 %v3832, 1.0
      %v4012 = vlog2.pop %v4011
      %v4013 = vmul.f32 %v4012, 0.6931472
      %v4014 = vmul.f32 -0.5, %v3832
      %v4015 = vadd.f32 %v4014, 1.0
      %v4016 = vmul.f32 %v4015, %v3832
      %v4017 = vand.u32 2147483647, %v3832
      %vm4018 = vcmp.lt.f32.partialorder %v4017, 0.0004427343
      %v4019 = vsel %vm4018, %v4016, %v4013
      %v4020 = vadd.f32 %v3834, 1.0
      %v4021 = vlog2.pop %v4020
      %v4022 = vmul.f32 %v4021, 0.6931472
      %v4023 = vmul.f32 -0.5, %v3834
      %v4024 = vadd.f32 %v4023, 1.0
      %v4025 = vmul.f32 %v4024, %v3834
      %v4026 = vand.u32 2147483647, %v3834
      %vm4027 = vcmp.lt.f32.partialorder %v4026, 0.0004427343
      %v4028 = vsel %vm4027, %v4025, %v4022
      %v4029 = vadd.f32 %v3836, 1.0
      %v4030 = vlog2.pop %v4029
      %v4031 = vmul.f32 %v4030, 0.6931472
      %v4032 = vmul.f32 -0.5, %v3836
      %v4033 = vadd.f32 %v4032, 1.0
      %v4034 = vmul.f32 %v4033, %v3836
      %v4035 = vand.u32 2147483647, %v3836
      %vm4036 = vcmp.lt.f32.partialorder %v4035, 0.0004427343
      %v4037 = vsel %vm4036, %v4034, %v4031
      %v4038 = vadd.f32 %v3838, 1.0
      %v4039 = vlog2.pop %v4038
      %v4040 = vmul.f32 %v4039, 0.6931472
      %v4041 = vmul.f32 -0.5, %v3838
      %v4042 = vadd.f32 %v4041, 1.0
      %v4043 = vmul.f32 %v4042, %v3838
      %v4044 = vand.u32 2147483647, %v3838
      %vm4045 = vcmp.lt.f32.partialorder %v4044, 0.0004427343
      %v4046 = vsel %vm4045, %v4043, %v4040
      %v4047 = vadd.f32 %v3840, 1.0
      %v4048 = vlog2.pop %v4047
      %v4049 = vmul.f32 %v4048, 0.6931472
      %v4050 = vmul.f32 -0.5, %v3840
      %v4051 = vadd.f32 %v4050, 1.0
      %v4052 = vmul.f32 %v4051, %v3840
      %v4053 = vand.u32 2147483647, %v3840
      %vm4054 = vcmp.lt.f32.partialorder %v4053, 0.0004427343
      %v4055 = vsel %vm4054, %v4052, %v4049
      %v4056 = vadd.f32 %v3842, 1.0
      %v4057 = vlog2.pop %v4056
      %v4058 = vmul.f32 %v4057, 0.6931472
      %v4059 = vmul.f32 -0.5, %v3842
      %v4060 = vadd.f32 %v4059, 1.0
      %v4061 = vmul.f32 %v4060, %v3842
      %v4062 = vand.u32 2147483647, %v3842
      %vm4063 = vcmp.lt.f32.partialorder %v4062, 0.0004427343
      %v4064 = vsel %vm4063, %v4061, %v4058
      %v4065 = vadd.f32 %v3844, 1.0
      %v4066 = vlog2.pop %v4065
      %v4067 = vmul.f32 %v4066, 0.6931472
      %v4068 = vmul.f32 -0.5, %v3844
      %v4069 = vadd.f32 %v4068, 1.0
      %v4070 = vmul.f32 %v4069, %v3844
      %v4071 = vand.u32 2147483647, %v3844
      %vm4072 = vcmp.lt.f32.partialorder %v4071, 0.0004427343
      %v4073 = vsel %vm4072, %v4070, %v4067
      %v4074 = vadd.f32 %v3846, 1.0
      %v4075 = vlog2.pop %v4074
      %v4076 = vmul.f32 %v4075, 0.6931472
      %v4077 = vmul.f32 -0.5, %v3846
      %v4078 = vadd.f32 %v4077, 1.0
      %v4079 = vmul.f32 %v4078, %v3846
      %v4080 = vand.u32 2147483647, %v3846
      %vm4081 = vcmp.lt.f32.partialorder %v4080, 0.0004427343
      %v4082 = vsel %vm4081, %v4079, %v4076
      %v4083 = vadd.f32 %v3848, 1.0
      %v4084 = vlog2.pop %v4083
      %v4085 = vmul.f32 %v4084, 0.6931472
      %v4086 = vmul.f32 -0.5, %v3848
      %v4087 = vadd.f32 %v4086, 1.0
      %v4088 = vmul.f32 %v4087, %v3848
      %v4089 = vand.u32 2147483647, %v3848
      %vm4090 = vcmp.lt.f32.partialorder %v4089, 0.0004427343
      %v4091 = vsel %vm4090, %v4088, %v4085
      %v4092 = vadd.f32 %v3850, 1.0
      %v4093 = vlog2.pop %v4092
      %v4094 = vmul.f32 %v4093, 0.6931472
      %v4095 = vmul.f32 -0.5, %v3850
      %v4096 = vadd.f32 %v4095, 1.0
      %v4097 = vmul.f32 %v4096, %v3850
      %v4098 = vand.u32 2147483647, %v3850
      %vm4099 = vcmp.lt.f32.partialorder %v4098, 0.0004427343
      %v4100 = vsel %vm4099, %v4097, %v4094
      %v4101 = vadd.f32 %v3852, 1.0
      %v4102 = vlog2.pop %v4101
      %v4103 = vmul.f32 %v4102, 0.6931472
      %v4104 = vmul.f32 -0.5, %v3852
      %v4105 = vadd.f32 %v4104, 1.0
      %v4106 = vmul.f32 %v4105, %v3852
      %v4107 = vand.u32 2147483647, %v3852
      %vm4108 = vcmp.lt.f32.partialorder %v4107, 0.0004427343
      %v4109 = vsel %vm4108, %v4106, %v4103
      %v4110 = vadd.f32 %v3854, 1.0
      %v4111 = vlog2.pop %v4110
      %v4112 = vmul.f32 %v4111, 0.6931472
      %v4113 = vmul.f32 -0.5, %v3854
      %v4114 = vadd.f32 %v4113, 1.0
      %v4115 = vmul.f32 %v4114, %v3854
      %v4116 = vand.u32 2147483647, %v3854
      %vm4117 = vcmp.lt.f32.partialorder %v4116, 0.0004427343
      %v4118 = vsel %vm4117, %v4115, %v4112
      %v4119 = vadd.f32 %v3856, 1.0
      %v4120 = vlog2.pop %v4119
      %v4121 = vmul.f32 %v4120, 0.6931472
      %v4122 = vmul.f32 -0.5, %v3856
      %v4123 = vadd.f32 %v4122, 1.0
      %v4124 = vmul.f32 %v4123, %v3856
      %v4125 = vand.u32 2147483647, %v3856
      %vm4126 = vcmp.lt.f32.partialorder %v4125, 0.0004427343
      %v4127 = vsel %vm4126, %v4124, %v4121
      %v4128 = vadd.f32 %v3858, 1.0
      %v4129 = vlog2.pop %v4128
      %v4130 = vmul.f32 %v4129, 0.6931472
      %v4131 = vmul.f32 -0.5, %v3858
      %v4132 = vadd.f32 %v4131, 1.0
      %v4133 = vmul.f32 %v4132, %v3858
      %v4134 = vand.u32 2147483647, %v3858
      %vm4135 = vcmp.lt.f32.partialorder %v4134, 0.0004427343
      %v4136 = vsel %vm4135, %v4133, %v4130
      %v4137 = vadd.f32 %v3860, 1.0
      %v4138 = vlog2.pop %v4137
      %v4139 = vmul.f32 %v4138, 0.6931472
      %v4140 = vmul.f32 -0.5, %v3860
      %v4141 = vadd.f32 %v4140, 1.0
      %v4142 = vmul.f32 %v4141, %v3860
      %v4143 = vand.u32 2147483647, %v3860
      %vm4144 = vcmp.lt.f32.partialorder %v4143, 0.0004427343
      %v4145 = vsel %vm4144, %v4142, %v4139
      %v4146 = vadd.f32 %v3862, 1.0
      %v4147 = vlog2.pop %v4146
      %v4148 = vmul.f32 %v4147, 0.6931472
      %v4149 = vmul.f32 -0.5, %v3862
      %v4150 = vadd.f32 %v4149, 1.0
      %v4151 = vmul.f32 %v4150, %v3862
      %v4152 = vand.u32 2147483647, %v3862
      %vm4153 = vcmp.lt.f32.partialorder %v4152, 0.0004427343
      %v4154 = vsel %vm4153, %v4151, %v4148
      %v4155 = vadd.f32 %v3864, 1.0
      %v4156 = vlog2.pop %v4155
      %v4157 = vmul.f32 %v4156, 0.6931472
      %v4158 = vmul.f32 -0.5, %v3864
      %v4159 = vadd.f32 %v4158, 1.0
      %v4160 = vmul.f32 %v4159, %v3864
      %v4161 = vand.u32 2147483647, %v3864
      %vm4162 = vcmp.lt.f32.partialorder %v4161, 0.0004427343
      %v4163 = vsel %vm4162, %v4160, %v4157
      %v4164 = vadd.f32 %v3866, 1.0
      %v4165 = vlog2.pop %v4164
      %v4166 = vmul.f32 %v4165, 0.6931472
      %v4167 = vmul.f32 -0.5, %v3866
      %v4168 = vadd.f32 %v4167, 1.0
      %v4169 = vmul.f32 %v4168, %v3866
      %v4170 = vand.u32 2147483647, %v3866
      %vm4171 = vcmp.lt.f32.partialorder %v4170, 0.0004427343
      %v4172 = vsel %vm4171, %v4169, %v4166
      %v4173 = vsel %vm3731, %v3697, %v3875
      %v4174 = vsel %vm3732, %v3698, %v3884
      %v4175 = vsel %vm3733, %v3699, %v3893
      %v4176 = vsel %vm3734, %v3700, %v3902
      %v4177 = vsel %vm3735, %v3701, %v3911
      %v4178 = vsel %vm3736, %v3702, %v3920
      %v4179 = vsel %vm3737, %v3703, %v3929
      %v4180 = vsel %vm3738, %v3704, %v3938
      %v4181 = vsel %vm3739, %v3705, %v3947
      %v4182 = vsel %vm3740, %v3706, %v3956
      %v4183 = vsel %vm3741, %v3707, %v3965
      %v4184 = vsel %vm3742, %v3708, %v3974
      %v4185 = vsel %vm3743, %v3709, %v3983
      %v4186 = vsel %vm3744, %v3710, %v3992
      %v4187 = vsel %vm3745, %v3711, %v4001
      %v4188 = vsel %vm3746, %v3712, %v4010
      %v4189 = vsel %vm3747, %v3713, %v4019
      %v4190 = vsel %vm3748, %v3714, %v4028
      %v4191 = vsel %vm3749, %v3715, %v4037
      %v4192 = vsel %vm3750, %v3716, %v4046
      %v4193 = vsel %vm3751, %v3717, %v4055
      %v4194 = vsel %vm3752, %v3718, %v4064
      %v4195 = vsel %vm3753, %v3719, %v4073
      %v4196 = vsel %vm3754, %v3720, %v4082
      %v4197 = vsel %vm3755, %v3721, %v4091
      %v4198 = vsel %vm3756, %v3722, %v4100
      %v4199 = vsel %vm3757, %v3723, %v4109
      %v4200 = vsel %vm3758, %v3724, %v4118
      %v4201 = vsel %vm3759, %v3725, %v4127
      %v4202 = vsel %vm3760, %v3726, %v4136
      %v4203 = vsel %vm3761, %v3727, %v4145
      %v4204 = vsel %vm3762, %v3728, %v4154
      %v4205 = vsel %vm3763, %v3729, %v4163
      %v4206 = vsel %vm3764, %v3730, %v4172
      %v4207 = vld [vmem:[%s7] sm:$0xf]
      %v4208 = vld [vmem:[%s7 + $0x4] sm:$0xf]
      %v4209 = vld [vmem:[%s7 + $0x8] sm:$0xf]
      %v4210 = vld [vmem:[%s7 + $0xc] sm:$0xf]
      %v4211 = vld [vmem:[%s8] sm:$0xff]
      %v4212 = vlaneseq
      %v4213 = vshrl.u32 %v4212, 7
      %v4214 = vsub.s32 1, %v4213
      %v4215 = vrot.slane %v4211, %v4214
      %v4216 = vmul.f32 %v411, %v4215
      %v4217 = vmul.f32 %v416, %v4215
      %v4218 = vmul.f32 %v421, %v4215
      %v4219 = vmul.f32 %v426, %v4215
      %v4220 = vmul.f32 %v431, %v4215
      %v4221 = vmul.f32 %v436, %v4215
      %v4222 = vmul.f32 %v441, %v4215
      %v4223 = vmul.f32 %v446, %v4215
      %v4224 = vmul.f32 %v451, %v4215
      %v4225 = vmul.f32 %v456, %v4215
      %v4226 = vmul.f32 %v461, %v4215
      %v4227 = vmul.f32 %v466, %v4215
      %v4228 = vmul.f32 %v471, %v4215
      %v4229 = vmul.f32 %v476, %v4215
      %v4230 = vmul.f32 %v481, %v4215
      %v4231 = vmul.f32 %v486, %v4215
      %v4232 = vmul.f32 %v491, %v4215
      %v4233 = vmul.f32 %v496, %v4215
      %v4234 = vmul.f32 %v501, %v4215
      %v4235 = vmul.f32 %v506, %v4215
      %v4236 = vmul.f32 %v511, %v4215
      %v4237 = vmul.f32 %v516, %v4215
      %v4238 = vmul.f32 %v521, %v4215
      %v4239 = vmul.f32 %v526, %v4215
      %v4240 = vmul.f32 %v531, %v4215
      %v4241 = vmul.f32 %v536, %v4215
      %v4242 = vmul.f32 %v541, %v4215
      %v4243 = vmul.f32 %v546, %v4215
      %v4244 = vmul.f32 %v551, %v4215
      %v4245 = vmul.f32 %v556, %v4215
      %v4246 = vmul.f32 %v561, %v4215
      %v4247 = vmul.f32 %v566, %v4215
      %v4248 = vmul.f32 %v571, %v4215
      %v4249 = vmul.f32 %v576, %v4215
      %v4250 = vlaneseq
      %v4251 = vshrl.u32 %v4250, 7
      %v4252 = vsub.s32 2, %v4251
      %v4253 = vrot.slane %v4211, %v4252
      %v4254 = vadd.f32 %v4216, %v4253
      %v4255 = vadd.f32 %v4217, %v4253
      %v4256 = vadd.f32 %v4218, %v4253
      %v4257 = vadd.f32 %v4219, %v4253
      %v4258 = vadd.f32 %v4220, %v4253
      %v4259 = vadd.f32 %v4221, %v4253
      %v4260 = vadd.f32 %v4222, %v4253
      %v4261 = vadd.f32 %v4223, %v4253
      %v4262 = vadd.f32 %v4224, %v4253
      %v4263 = vadd.f32 %v4225, %v4253
      %v4264 = vadd.f32 %v4226, %v4253
      %v4265 = vadd.f32 %v4227, %v4253
      %v4266 = vadd.f32 %v4228, %v4253
      %v4267 = vadd.f32 %v4229, %v4253
      %v4268 = vadd.f32 %v4230, %v4253
      %v4269 = vadd.f32 %v4231, %v4253
      %v4270 = vadd.f32 %v4232, %v4253
      %v4271 = vadd.f32 %v4233, %v4253
      %v4272 = vadd.f32 %v4234, %v4253
      %v4273 = vadd.f32 %v4235, %v4253
      %v4274 = vadd.f32 %v4236, %v4253
      %v4275 = vadd.f32 %v4237, %v4253
      %v4276 = vadd.f32 %v4238, %v4253
      %v4277 = vadd.f32 %v4239, %v4253
      %v4278 = vadd.f32 %v4240, %v4253
      %v4279 = vadd.f32 %v4241, %v4253
      %v4280 = vadd.f32 %v4242, %v4253
      %v4281 = vadd.f32 %v4243, %v4253
      %v4282 = vadd.f32 %v4244, %v4253
      %v4283 = vadd.f32 %v4245, %v4253
      %v4284 = vadd.f32 %v4246, %v4253
      %v4285 = vadd.f32 %v4247, %v4253
      %v4286 = vadd.f32 %v4248, %v4253
      %v4287 = vadd.f32 %v4249, %v4253
      %v4288 = vxor.u32 %v4254, 2147483648
      %v4289 = vxor.u32 %v4255, 2147483648
      %v4290 = vxor.u32 %v4256, 2147483648
      %v4291 = vxor.u32 %v4257, 2147483648
      %v4292 = vxor.u32 %v4258, 2147483648
      %v4293 = vxor.u32 %v4259, 2147483648
      %v4294 = vxor.u32 %v4260, 2147483648
      %v4295 = vxor.u32 %v4261, 2147483648
      %v4296 = vxor.u32 %v4262, 2147483648
      %v4297 = vxor.u32 %v4263, 2147483648
      %v4298 = vxor.u32 %v4264, 2147483648
      %v4299 = vxor.u32 %v4265, 2147483648
      %v4300 = vxor.u32 %v4266, 2147483648
      %v4301 = vxor.u32 %v4267, 2147483648
      %v4302 = vxor.u32 %v4268, 2147483648
      %v4303 = vxor.u32 %v4269, 2147483648
      %v4304 = vxor.u32 %v4270, 2147483648
      %v4305 = vxor.u32 %v4271, 2147483648
      %v4306 = vxor.u32 %v4272, 2147483648
      %v4307 = vxor.u32 %v4273, 2147483648
      %v4308 = vxor.u32 %v4274, 2147483648
      %v4309 = vxor.u32 %v4275, 2147483648
      %v4310 = vxor.u32 %v4276, 2147483648
      %v4311 = vxor.u32 %v4277, 2147483648
      %v4312 = vxor.u32 %v4278, 2147483648
      %v4313 = vxor.u32 %v4279, 2147483648
      %v4314 = vxor.u32 %v4280, 2147483648
      %v4315 = vxor.u32 %v4281, 2147483648
      %v4316 = vxor.u32 %v4282, 2147483648
      %v4317 = vxor.u32 %v4283, 2147483648
      %v4318 = vxor.u32 %v4284, 2147483648
      %v4319 = vxor.u32 %v4285, 2147483648
      %v4320 = vxor.u32 %v4286, 2147483648
      %v4321 = vxor.u32 %v4287, 2147483648
      %v4322 = vmul.f32 %v4288, 1.442695
      %v4323 = vpow.pop %v4322
      %v4324 = vmul.f32 %v4289, 1.442695
      %v4325 = vpow.pop %v4324
      %v4326 = vmul.f32 %v4290, 1.442695
      %v4327 = vpow.pop %v4326
      %v4328 = vmul.f32 %v4291, 1.442695
      %v4329 = vpow.pop %v4328
      %v4330 = vmul.f32 %v4292, 1.442695
      %v4331 = vpow.pop %v4330
      %v4332 = vmul.f32 %v4293, 1.442695
      %v4333 = vpow.pop %v4332
      %v4334 = vmul.f32 %v4294, 1.442695
      %v4335 = vpow.pop %v4334
      %v4336 = vmul.f32 %v4295, 1.442695
      %v4337 = vpow.pop %v4336
      %v4338 = vmul.f32 %v4296, 1.442695
      %v4339 = vpow.pop %v4338
      %v4340 = vmul.f32 %v4297, 1.442695
      %v4341 = vpow.pop %v4340
      %v4342 = vmul.f32 %v4298, 1.442695
      %v4343 = vpow.pop %v4342
      %v4344 = vmul.f32 %v4299, 1.442695
      %v4345 = vpow.pop %v4344
      %v4346 = vmul.f32 %v4300, 1.442695
      %v4347 = vpow.pop %v4346
      %v4348 = vmul.f32 %v4301, 1.442695
      %v4349 = vpow.pop %v4348
      %v4350 = vmul.f32 %v4302, 1.442695
      %v4351 = vpow.pop %v4350
      %v4352 = vmul.f32 %v4303, 1.442695
      %v4353 = vpow.pop %v4352
      %v4354 = vmul.f32 %v4304, 1.442695
      %v4355 = vpow.pop %v4354
      %v4356 = vmul.f32 %v4305, 1.442695
      %v4357 = vpow.pop %v4356
      %v4358 = vmul.f32 %v4306, 1.442695
      %v4359 = vpow.pop %v4358
      %v4360 = vmul.f32 %v4307, 1.442695
      %v4361 = vpow.pop %v4360
      %v4362 = vmul.f32 %v4308, 1.442695
      %v4363 = vpow.pop %v4362
      %v4364 = vmul.f32 %v4309, 1.442695
      %v4365 = vpow.pop %v4364
      %v4366 = vmul.f32 %v4310, 1.442695
      %v4367 = vpow.pop %v4366
      %v4368 = vmul.f32 %v4311, 1.442695
      %v4369 = vpow.pop %v4368
      %v4370 = vmul.f32 %v4312, 1.442695
      %v4371 = vpow.pop %v4370
      %v4372 = vmul.f32 %v4313, 1.442695
      %v4373 = vpow.pop %v4372
      %v4374 = vmul.f32 %v4314, 1.442695
      %v4375 = vpow.pop %v4374
      %v4376 = vmul.f32 %v4315, 1.442695
      %v4377 = vpow.pop %v4376
      %v4378 = vmul.f32 %v4316, 1.442695
      %v4379 = vpow.pop %v4378
      %v4380 = vmul.f32 %v4317, 1.442695
      %v4381 = vpow.pop %v4380
      %v4382 = vmul.f32 %v4318, 1.442695
      %v4383 = vpow.pop %v4382
      %v4384 = vmul.f32 %v4319, 1.442695
      %v4385 = vpow.pop %v4384
      %v4386 = vmul.f32 %v4320, 1.442695
      %v4387 = vpow.pop %v4386
      %v4388 = vmul.f32 %v4321, 1.442695
      %v4389 = vpow.pop %v4388
      %v4390 = vadd.f32 %v4323, 1.0
      %v4391 = vadd.f32 %v4325, 1.0
      %v4392 = vadd.f32 %v4327, 1.0
      %v4393 = vadd.f32 %v4329, 1.0
      %v4394 = vadd.f32 %v4331, 1.0
      %v4395 = vadd.f32 %v4333, 1.0
      %v4396 = vadd.f32 %v4335, 1.0
      %v4397 = vadd.f32 %v4337, 1.0
      %v4398 = vadd.f32 %v4339, 1.0
      %v4399 = vadd.f32 %v4341, 1.0
      %v4400 = vadd.f32 %v4343, 1.0
      %v4401 = vadd.f32 %v4345, 1.0
      %v4402 = vadd.f32 %v4347, 1.0
      %v4403 = vadd.f32 %v4349, 1.0
      %v4404 = vadd.f32 %v4351, 1.0
      %v4405 = vadd.f32 %v4353, 1.0
      %v4406 = vadd.f32 %v4355, 1.0
      %v4407 = vadd.f32 %v4357, 1.0
      %v4408 = vadd.f32 %v4359, 1.0
      %v4409 = vadd.f32 %v4361, 1.0
      %v4410 = vadd.f32 %v4363, 1.0
      %v4411 = vadd.f32 %v4365, 1.0
      %v4412 = vadd.f32 %v4367, 1.0
      %v4413 = vadd.f32 %v4369, 1.0
      %v4414 = vadd.f32 %v4371, 1.0
      %v4415 = vadd.f32 %v4373, 1.0
      %v4416 = vadd.f32 %v4375, 1.0
      %v4417 = vadd.f32 %v4377, 1.0
      %v4418 = vadd.f32 %v4379, 1.0
      %v4419 = vadd.f32 %v4381, 1.0
      %v4420 = vadd.f32 %v4383, 1.0
      %v4421 = vadd.f32 %v4385, 1.0
      %v4422 = vadd.f32 %v4387, 1.0
      %v4423 = vadd.f32 %v4389, 1.0
      %v4424 = vrcp.pop %v4390
      %v4425 = vmul.f32 1.0, %v4424
      %v4426 = vrcp.pop %v4391
      %v4427 = vmul.f32 1.0, %v4426
      %v4428 = vrcp.pop %v4392
      %v4429 = vmul.f32 1.0, %v4428
      %v4430 = vrcp.pop %v4393
      %v4431 = vmul.f32 1.0, %v4430
      %v4432 = vrcp.pop %v4394
      %v4433 = vmul.f32 1.0, %v4432
      %v4434 = vrcp.pop %v4395
      %v4435 = vmul.f32 1.0, %v4434
      %v4436 = vrcp.pop %v4396
      %v4437 = vmul.f32 1.0, %v4436
      %v4438 = vrcp.pop %v4397
      %v4439 = vmul.f32 1.0, %v4438
      %v4440 = vrcp.pop %v4398
      %v4441 = vmul.f32 1.0, %v4440
      %v4442 = vrcp.pop %v4399
      %v4443 = vmul.f32 1.0, %v4442
      %v4444 = vrcp.pop %v4400
      %v4445 = vmul.f32 1.0, %v4444
      %v4446 = vrcp.pop %v4401
      %v4447 = vmul.f32 1.0, %v4446
      %v4448 = vrcp.pop %v4402
      %v4449 = vmul.f32 1.0, %v4448
      %v4450 = vrcp.pop %v4403
      %v4451 = vmul.f32 1.0, %v4450
      %v4452 = vrcp.pop %v4404
      %v4453 = vmul.f32 1.0, %v4452
      %v4454 = vrcp.pop %v4405
      %v4455 = vmul.f32 1.0, %v4454
      %v4456 = vrcp.pop %v4406
      %v4457 = vmul.f32 1.0, %v4456
      %v4458 = vrcp.pop %v4407
      %v4459 = vmul.f32 1.0, %v4458
      %v4460 = vrcp.pop %v4408
      %v4461 = vmul.f32 1.0, %v4460
      %v4462 = vrcp.pop %v4409
      %v4463 = vmul.f32 1.0, %v4462
      %v4464 = vrcp.pop %v4410
      %v4465 = vmul.f32 1.0, %v4464
      %v4466 = vrcp.pop %v4411
      %v4467 = vmul.f32 1.0, %v4466
      %v4468 = vrcp.pop %v4412
      %v4469 = vmul.f32 1.0, %v4468
      %v4470 = vrcp.pop %v4413
      %v4471 = vmul.f32 1.0, %v4470
      %v4472 = vrcp.pop %v4414
      %v4473 = vmul.f32 1.0, %v4472
      %v4474 = vrcp.pop %v4415
      %v4475 = vmul.f32 1.0, %v4474
      %v4476 = vrcp.pop %v4416
      %v4477 = vmul.f32 1.0, %v4476
      %v4478 = vrcp.pop %v4417
      %v4479 = vmul.f32 1.0, %v4478
      %v4480 = vrcp.pop %v4418
      %v4481 = vmul.f32 1.0, %v4480
      %v4482 = vrcp.pop %v4419
      %v4483 = vmul.f32 1.0, %v4482
      %v4484 = vrcp.pop %v4420
      %v4485 = vmul.f32 1.0, %v4484
      %v4486 = vrcp.pop %v4421
      %v4487 = vmul.f32 1.0, %v4486
      %v4488 = vrcp.pop %v4422
      %v4489 = vmul.f32 1.0, %v4488
      %v4490 = vrcp.pop %v4423
      %v4491 = vmul.f32 1.0, %v4490
      %v4492 = vlaneseq
      %v4493 = vshrl.u32 %v4492, 7
      %v4494 = vsub.s32 0, %v4493
      %v4495 = vrot.slane %v4211, %v4494
      %v4496 = vmul.f32 %v4495, %v4425
      %v4497 = vmul.f32 %v4495, %v4427
      %v4498 = vmul.f32 %v4495, %v4429
      %v4499 = vmul.f32 %v4495, %v4431
      %v4500 = vmul.f32 %v4495, %v4433
      %v4501 = vmul.f32 %v4495, %v4435
      %v4502 = vmul.f32 %v4495, %v4437
      %v4503 = vmul.f32 %v4495, %v4439
      %v4504 = vmul.f32 %v4495, %v4441
      %v4505 = vmul.f32 %v4495, %v4443
      %v4506 = vmul.f32 %v4495, %v4445
      %v4507 = vmul.f32 %v4495, %v4447
      %v4508 = vmul.f32 %v4495, %v4449
      %v4509 = vmul.f32 %v4495, %v4451
      %v4510 = vmul.f32 %v4495, %v4453
      %v4511 = vmul.f32 %v4495, %v4455
      %v4512 = vmul.f32 %v4495, %v4457
      %v4513 = vmul.f32 %v4495, %v4459
      %v4514 = vmul.f32 %v4495, %v4461
      %v4515 = vmul.f32 %v4495, %v4463
      %v4516 = vmul.f32 %v4495, %v4465
      %v4517 = vmul.f32 %v4495, %v4467
      %v4518 = vmul.f32 %v4495, %v4469
      %v4519 = vmul.f32 %v4495, %v4471
      %v4520 = vmul.f32 %v4495, %v4473
      %v4521 = vmul.f32 %v4495, %v4475
      %v4522 = vmul.f32 %v4495, %v4477
      %v4523 = vmul.f32 %v4495, %v4479
      %v4524 = vmul.f32 %v4495, %v4481
      %v4525 = vmul.f32 %v4495, %v4483
      %v4526 = vmul.f32 %v4495, %v4485
      %v4527 = vmul.f32 %v4495, %v4487
      %v4528 = vmul.f32 %v4495, %v4489
      %v4529 = vmul.f32 %v4495, %v4491
      %v4530 = vlaneseq
      %v4531 = vshrl.u32 %v4530, 7
      %v4532 = vsub.s32 3, %v4531
      %v4533 = vrot.slane %v4211, %v4532
      %v4534 = vmul.f32 %v411, %v4533
      %v4535 = vmul.f32 %v416, %v4533
      %v4536 = vmul.f32 %v421, %v4533
      %v4537 = vmul.f32 %v426, %v4533
      %v4538 = vmul.f32 %v431, %v4533
      %v4539 = vmul.f32 %v436, %v4533
      %v4540 = vmul.f32 %v441, %v4533
      %v4541 = vmul.f32 %v446, %v4533
      %v4542 = vmul.f32 %v451, %v4533
      %v4543 = vmul.f32 %v456, %v4533
      %v4544 = vmul.f32 %v461, %v4533
      %v4545 = vmul.f32 %v466, %v4533
      %v4546 = vmul.f32 %v471, %v4533
      %v4547 = vmul.f32 %v476, %v4533
      %v4548 = vmul.f32 %v481, %v4533
      %v4549 = vmul.f32 %v486, %v4533
      %v4550 = vmul.f32 %v491, %v4533
      %v4551 = vmul.f32 %v496, %v4533
      %v4552 = vmul.f32 %v501, %v4533
      %v4553 = vmul.f32 %v506, %v4533
      %v4554 = vmul.f32 %v511, %v4533
      %v4555 = vmul.f32 %v516, %v4533
      %v4556 = vmul.f32 %v521, %v4533
      %v4557 = vmul.f32 %v526, %v4533
      %v4558 = vmul.f32 %v531, %v4533
      %v4559 = vmul.f32 %v536, %v4533
      %v4560 = vmul.f32 %v541, %v4533
      %v4561 = vmul.f32 %v546, %v4533
      %v4562 = vmul.f32 %v551, %v4533
      %v4563 = vmul.f32 %v556, %v4533
      %v4564 = vmul.f32 %v561, %v4533
      %v4565 = vmul.f32 %v566, %v4533
      %v4566 = vmul.f32 %v571, %v4533
      %v4567 = vmul.f32 %v576, %v4533
      %v4568 = vadd.f32 %v4496, %v4534
      %v4569 = vadd.f32 %v4497, %v4535
      %v4570 = vadd.f32 %v4498, %v4536
      %v4571 = vadd.f32 %v4499, %v4537
      %v4572 = vadd.f32 %v4500, %v4538
      %v4573 = vadd.f32 %v4501, %v4539
      %v4574 = vadd.f32 %v4502, %v4540
      %v4575 = vadd.f32 %v4503, %v4541
      %v4576 = vadd.f32 %v4504, %v4542
      %v4577 = vadd.f32 %v4505, %v4543
      %v4578 = vadd.f32 %v4506, %v4544
      %v4579 = vadd.f32 %v4507, %v4545
      %v4580 = vadd.f32 %v4508, %v4546
      %v4581 = vadd.f32 %v4509, %v4547
      %v4582 = vadd.f32 %v4510, %v4548
      %v4583 = vadd.f32 %v4511, %v4549
      %v4584 = vadd.f32 %v4512, %v4550
      %v4585 = vadd.f32 %v4513, %v4551
      %v4586 = vadd.f32 %v4514, %v4552
      %v4587 = vadd.f32 %v4515, %v4553
      %v4588 = vadd.f32 %v4516, %v4554
      %v4589 = vadd.f32 %v4517, %v4555
      %v4590 = vadd.f32 %v4518, %v4556
      %v4591 = vadd.f32 %v4519, %v4557
      %v4592 = vadd.f32 %v4520, %v4558
      %v4593 = vadd.f32 %v4521, %v4559
      %v4594 = vadd.f32 %v4522, %v4560
      %v4595 = vadd.f32 %v4523, %v4561
      %v4596 = vadd.f32 %v4524, %v4562
      %v4597 = vadd.f32 %v4525, %v4563
      %v4598 = vadd.f32 %v4526, %v4564
      %v4599 = vadd.f32 %v4527, %v4565
      %v4600 = vadd.f32 %v4528, %v4566
      %v4601 = vadd.f32 %v4529, %v4567
      %v4602 = vpack.c.bf16 %v4174, %v4173
      %v4603 = vpack.c.bf16 %v4176, %v4175
      %v4604 = vpack.c.bf16 %v4178, %v4177
      %v4605 = vpack.c.bf16 %v4180, %v4179
      %v4606 = vpack.c.bf16 %v4182, %v4181
      %v4607 = vpack.c.bf16 %v4184, %v4183
      %v4608 = vpack.c.bf16 %v4186, %v4185
      %v4609 = vpack.c.bf16 %v4188, %v4187
      %v4610 = vpack.c.bf16 %v4190, %v4189
      %v4611 = vpack.c.bf16 %v4192, %v4191
      %v4612 = vpack.c.bf16 %v4194, %v4193
      %v4613 = vpack.c.bf16 %v4196, %v4195
      %v4614 = vpack.c.bf16 %v4198, %v4197
      %v4615 = vpack.c.bf16 %v4200, %v4199
      %v4616 = vpack.c.bf16 %v4202, %v4201
      %v4617 = vpack.c.bf16 %v4204, %v4203
      %v4618 = vpack.c.bf16 %v4206, %v4205
      %v4623 = vunpack.c.l.b16 %v4207
      %v4624 = vunpack.c.l.b16 %v4208
      %v4625 = vunpack.c.l.b16 %v4209
      %v4626 = vunpack.c.l.b16 %v4210
      %v4627 = vpack.c.b16 %v4624, %v4623
      %v4628 = vpack.c.b16 %v4626, %v4625
      %v4632 = vsel %vm2254, %v4602, 0
      %v4635 = vsel %vm2254, %v4603, 0
      %v4638 = vsel %vm2254, %v4604, 0
      %v4641 = vsel %vm2254, %v4605, 0
      %v4644 = vsel %vm2254, %v4606, 0
      %v4647 = vsel %vm2254, %v4607, 0
      %v4650 = vsel %vm2254, %v4608, 0
      %v4653 = vsel %vm2254, %v4609, 0
      %v4656 = vsel %vm2254, %v4610, 0
      %v4659 = vsel %vm2254, %v4611, 0
      %v4662 = vsel %vm2254, %v4612, 0
      %v4665 = vsel %vm2254, %v4613, 0
      %v4668 = vsel %vm2254, %v4614, 0
      %v4671 = vsel %vm2254, %v4615, 0
      %v4674 = vsel %vm2254, %v4616, 0
      %v4677 = vsel %vm2254, %v4617, 0
      %v4680 = vsel %vm2254, %v4618, 0
      %4682 = vmatprep.subr.bf16.mxu0 0
      %4683 = vmatpush1.bf16.msra.mxu0 %v4627
      %4684 = vmatprep.subr.bf16.mxu0 0
      %4685 = vmatpush1.bf16.msra.mxu0 %v4628
      %4686 = vmatprep.subr.bf16.mxu0 0
      %4687 = vmatpush1.bf16.msra.mxu0 0
      %4688 = vmatprep.subr.bf16.mxu0 0
      %4689 = vmatpush1.bf16.msra.mxu0 0
      %4690 = vmatprep.subr.bf16.mxu0 0
      %4691 = vmatpush1.bf16.msra.mxu0 0
      %4692 = vmatprep.subr.bf16.mxu0 0
      %4693 = vmatpush1.bf16.msra.mxu0 0
      %4694 = vmatprep.subr.bf16.mxu0 0
      %4695 = vmatpush1.bf16.msra.mxu0 0
      %4696 = vmatprep.subr.bf16.mxu0 0
      %4697 = vmatpush1.bf16.msra.mxu0 0
      %4698 = vmatprep.subr.bf16.mxu0 0
      %4699 = vmatpush1.bf16.msra.mxu0 0
      %4700 = vmatprep.subr.bf16.mxu0 0
      %4701 = vmatpush1.bf16.msra.mxu0 0
      %4702 = vmatprep.subr.bf16.mxu0 0
      %4703 = vmatpush1.bf16.msra.mxu0 0
      %4704 = vmatprep.subr.bf16.mxu0 0
      %4705 = vmatpush1.bf16.msra.mxu0 0
      %4706 = vmatprep.subr.bf16.mxu0 0
      %4707 = vmatpush1.bf16.msra.mxu0 0
      %4708 = vmatprep.subr.bf16.mxu0 0
      %4709 = vmatpush1.bf16.msra.mxu0 0
      %4710 = vmatprep.subr.bf16.mxu0 0
      %4711 = vmatpush1.bf16.msra.mxu0 0
      %4712 = vmatprep.subr.bf16.mxu0 0
      %4713 = vmatpush1.bf16.msra.mxu0 0
      %4714 = vmatprep.mubr.bf16.mxu0 0
      %4715 = vmatmul.mubr.bf16.gmra.mrb[0].mxu0 %v4632
      %v4716 = vpop.f32.mrb[0].mxu0
      %v4717 = vadd.f32 0.0, %v4716
      %v4718 = vpop.f32.mrb[0].mxu0
      %v4719 = vpop.f32.mrb[0].mxu0
      %v4720 = vadd.f32 0.0, %v4719
      %v4721 = vpop.f32.mrb[0].mxu0
      %4722 = vmatprep.mubr.bf16.mxu0 0
      %4723 = vmatmul.mubr.bf16.gmra.mrb[0].mxu0 %v4635
      %v4724 = vpop.f32.mrb[0].mxu0
      %v4725 = vadd.f32 0.0, %v4724
      %v4726 = vpop.f32.mrb[0].mxu0
      %v4727 = vpop.f32.mrb[0].mxu0
      %v4728 = vadd.f32 0.0, %v4727
      %v4729 = vpop.f32.mrb[0].mxu0
      %4730 = vmatprep.mubr.bf16.mxu0 0
      %4731 = vmatmul.mubr.bf16.gmra.mrb[0].mxu0 %v4638
      %v4732 = vpop.f32.mrb[0].mxu0
      %v4733 = vadd.f32 0.0, %v4732
      %v4734 = vpop.f32.mrb[0].mxu0
      %v4735 = vpop.f32.mrb[0].mxu0
      %v4736 = vadd.f32 0.0, %v4735
      %v4737 = vpop.f32.mrb[0].mxu0
      %4738 = vmatprep.mubr.bf16.mxu0 0
      %4739 = vmatmul.mubr.bf16.gmra.mrb[0].mxu0 %v4641
      %v4740 = vpop.f32.mrb[0].mxu0
      %v4741 = vadd.f32 0.0, %v4740
      %v4742 = vpop.f32.mrb[0].mxu0
      %v4743 = vpop.f32.mrb[0].mxu0
      %v4744 = vadd.f32 0.0, %v4743
      %v4745 = vpop.f32.mrb[0].mxu0
      %4746 = vmatprep.mubr.bf16.mxu0 0
      %4747 = vmatmul.mubr.bf16.gmra.mrb[0].mxu0 %v4644
      %v4748 = vpop.f32.mrb[0].mxu0
      %v4749 = vadd.f32 0.0, %v4748
      %v4750 = vpop.f32.mrb[0].mxu0
      %v4751 = vpop.f32.mrb[0].mxu0
      %v4752 = vadd.f32 0.0, %v4751
      %v4753 = vpop.f32.mrb[0].mxu0
      %4754 = vmatprep.mubr.bf16.mxu0 0
      %4755 = vmatmul.mubr.bf16.gmra.mrb[0].mxu0 %v4647
      %v4756 = vpop.f32.mrb[0].mxu0
      %v4757 = vadd.f32 0.0, %v4756
      %v4758 = vpop.f32.mrb[0].mxu0
      %v4759 = vpop.f32.mrb[0].mxu0
      %v4760 = vadd.f32 0.0, %v4759
      %v4761 = vpop.f32.mrb[0].mxu0
      %4762 = vmatprep.mubr.bf16.mxu0 0
      %4763 = vmatmul.mubr.bf16.gmra.mrb[0].mxu0 %v4650
      %v4764 = vpop.f32.mrb[0].mxu0
      %v4765 = vadd.f32 0.0, %v4764
      %v4766 = vpop.f32.mrb[0].mxu0
      %v4767 = vpop.f32.mrb[0].mxu0
      %v4768 = vadd.f32 0.0, %v4767
      %v4769 = vpop.f32.mrb[0].mxu0
      %4770 = vmatprep.mubr.bf16.mxu0 0
      %4771 = vmatmul.mubr.bf16.gmra.mrb[0].mxu0 %v4653
      %v4772 = vpop.f32.mrb[0].mxu0
      %v4773 = vadd.f32 0.0, %v4772
      %v4774 = vpop.f32.mrb[0].mxu0
      %v4775 = vpop.f32.mrb[0].mxu0
      %v4776 = vadd.f32 0.0, %v4775
      %v4777 = vpop.f32.mrb[0].mxu0
      %4778 = vmatprep.mubr.bf16.mxu0 0
      %4779 = vmatmul.mubr.bf16.gmra.mrb[0].mxu0 %v4656
      %v4780 = vpop.f32.mrb[0].mxu0
      %v4781 = vadd.f32 0.0, %v4780
      %v4782 = vpop.f32.mrb[0].mxu0
      %v4783 = vpop.f32.mrb[0].mxu0
      %v4784 = vadd.f32 0.0, %v4783
      %v4785 = vpop.f32.mrb[0].mxu0
      %4786 = vmatprep.mubr.bf16.mxu0 0
      %4787 = vmatmul.mubr.bf16.gmra.mrb[0].mxu0 %v4659
      %v4788 = vpop.f32.mrb[0].mxu0
      %v4789 = vadd.f32 0.0, %v4788
      %v4790 = vpop.f32.mrb[0].mxu0
      %v4791 = vpop.f32.mrb[0].mxu0
      %v4792 = vadd.f32 0.0, %v4791
      %v4793 = vpop.f32.mrb[0].mxu0
      %4794 = vmatprep.mubr.bf16.mxu0 0
      %4795 = vmatmul.mubr.bf16.gmra.mrb[0].mxu0 %v4662
      %v4796 = vpop.f32.mrb[0].mxu0
      %v4797 = vadd.f32 0.0, %v4796
      %v4798 = vpop.f32.mrb[0].mxu0
      %v4799 = vpop.f32.mrb[0].mxu0
      %v4800 = vadd.f32 0.0, %v4799
      %v4801 = vpop.f32.mrb[0].mxu0
      %4802 = vmatprep.mubr.bf16.mxu0 0
      %4803 = vmatmul.mubr.bf16.gmra.mrb[0].mxu0 %v4665
      %v4804 = vpop.f32.mrb[0].mxu0
      %v4805 = vadd.f32 0.0, %v4804
      %v4806 = vpop.f32.mrb[0].mxu0
      %v4807 = vpop.f32.mrb[0].mxu0
      %v4808 = vadd.f32 0.0, %v4807
      %v4809 = vpop.f32.mrb[0].mxu0
      %4810 = vmatprep.mubr.bf16.mxu0 0
      %4811 = vmatmul.mubr.bf16.gmra.mrb[0].mxu0 %v4668
      %v4812 = vpop.f32.mrb[0].mxu0
      %v4813 = vadd.f32 0.0, %v4812
      %v4814 = vpop.f32.mrb[0].mxu0
      %v4815 = vpop.f32.mrb[0].mxu0
      %v4816 = vadd.f32 0.0, %v4815
      %v4817 = vpop.f32.mrb[0].mxu0
      %4818 = vmatprep.mubr.bf16.mxu0 0
      %4819 = vmatmul.mubr.bf16.gmra.mrb[0].mxu0 %v4671
      %v4820 = vpop.f32.mrb[0].mxu0
      %v4821 = vadd.f32 0.0, %v4820
      %v4822 = vpop.f32.mrb[0].mxu0
      %v4823 = vpop.f32.mrb[0].mxu0
      %v4824 = vadd.f32 0.0, %v4823
      %v4825 = vpop.f32.mrb[0].mxu0
      %4826 = vmatprep.mubr.bf16.mxu0 0
      %4827 = vmatmul.mubr.bf16.gmra.mrb[0].mxu0 %v4674
      %v4828 = vpop.f32.mrb[0].mxu0
      %v4829 = vadd.f32 0.0, %v4828
      %v4830 = vpop.f32.mrb[0].mxu0
      %v4831 = vpop.f32.mrb[0].mxu0
      %v4832 = vadd.f32 0.0, %v4831
      %v4833 = vpop.f32.mrb[0].mxu0
      %4834 = vmatprep.mubr.bf16.mxu0 0
      %4835 = vmatmul.mubr.bf16.gmra.mrb[0].mxu0 %v4677
      %v4836 = vpop.f32.mrb[0].mxu0
      %v4837 = vadd.f32 0.0, %v4836
      %v4838 = vpop.f32.mrb[0].mxu0
      %v4839 = vpop.f32.mrb[0].mxu0
      %v4840 = vadd.f32 0.0, %v4839
      %v4841 = vpop.f32.mrb[0].mxu0
      %4842 = vmatprep.mubr.bf16.mxu0 0
      %4843 = vmatmul.mubr.bf16.gmra.mrb[0].mxu0 %v4680
      %v4844 = vpop.f32.mrb[0].mxu0
      %v4845 = vadd.f32 0.0, %v4844
      %v4846 = vpop.f32.mrb[0].mxu0
      %v4847 = vpop.f32.mrb[0].mxu0
      %v4848 = vadd.f32 0.0, %v4847
      %v4849 = vpop.f32.mrb[0].mxu0
      %4850 = vdwg.mxu0
      %v4851 = vmul.f32 %v4717, %v4425
      %v4852 = vmul.f32 %v4720, %v4427
      %v4853 = vmul.f32 %v4725, %v4429
      %v4854 = vmul.f32 %v4728, %v4431
      %v4855 = vmul.f32 %v4733, %v4433
      %v4856 = vmul.f32 %v4736, %v4435
      %v4857 = vmul.f32 %v4741, %v4437
      %v4858 = vmul.f32 %v4744, %v4439
      %v4859 = vmul.f32 %v4749, %v4441
      %v4860 = vmul.f32 %v4752, %v4443
      %v4861 = vmul.f32 %v4757, %v4445
      %v4862 = vmul.f32 %v4760, %v4447
      %v4863 = vmul.f32 %v4765, %v4449
      %v4864 = vmul.f32 %v4768, %v4451
      %v4865 = vmul.f32 %v4773, %v4453
      %v4866 = vmul.f32 %v4776, %v4455
      %v4867 = vmul.f32 %v4781, %v4457
      %v4868 = vmul.f32 %v4784, %v4459
      %v4869 = vmul.f32 %v4789, %v4461
      %v4870 = vmul.f32 %v4792, %v4463
      %v4871 = vmul.f32 %v4797, %v4465
      %v4872 = vmul.f32 %v4800, %v4467
      %v4873 = vmul.f32 %v4805, %v4469
      %v4874 = vmul.f32 %v4808, %v4471
      %v4875 = vmul.f32 %v4813, %v4473
      %v4876 = vmul.f32 %v4816, %v4475
      %v4877 = vmul.f32 %v4821, %v4477
      %v4878 = vmul.f32 %v4824, %v4479
      %v4879 = vmul.f32 %v4829, %v4481
      %v4880 = vmul.f32 %v4832, %v4483
      %v4881 = vmul.f32 %v4837, %v4485
      %v4882 = vmul.f32 %v4840, %v4487
      %v4883 = vmul.f32 %v4845, %v4489
      %v4884 = vmul.f32 %v4848, %v4491
      %v4885 = vadd.f32 %v4851, %v4568
      %v4886 = vadd.f32 %v4852, %v4569
      %v4887 = vadd.f32 %v4853, %v4570
      %v4888 = vadd.f32 %v4854, %v4571
      %v4889 = vadd.f32 %v4855, %v4572
      %v4890 = vadd.f32 %v4856, %v4573
      %v4891 = vadd.f32 %v4857, %v4574
      %v4892 = vadd.f32 %v4858, %v4575
      %v4893 = vadd.f32 %v4859, %v4576
      %v4894 = vadd.f32 %v4860, %v4577
      %v4895 = vadd.f32 %v4861, %v4578
      %v4896 = vadd.f32 %v4862, %v4579
      %v4897 = vadd.f32 %v4863, %v4580
      %v4898 = vadd.f32 %v4864, %v4581
      %v4899 = vadd.f32 %v4865, %v4582
      %v4900 = vadd.f32 %v4866, %v4583
      %v4901 = vadd.f32 %v4867, %v4584
      %v4902 = vadd.f32 %v4868, %v4585
      %v4903 = vadd.f32 %v4869, %v4586
      %v4904 = vadd.f32 %v4870, %v4587
      %v4905 = vadd.f32 %v4871, %v4588
      %v4906 = vadd.f32 %v4872, %v4589
      %v4907 = vadd.f32 %v4873, %v4590
      %v4908 = vadd.f32 %v4874, %v4591
      %v4909 = vadd.f32 %v4875, %v4592
      %v4910 = vadd.f32 %v4876, %v4593
      %v4911 = vadd.f32 %v4877, %v4594
      %v4912 = vadd.f32 %v4878, %v4595
      %v4913 = vadd.f32 %v4879, %v4596
      %v4914 = vadd.f32 %v4880, %v4597
      %v4915 = vadd.f32 %v4881, %v4598
      %v4916 = vadd.f32 %v4882, %v4599
      %v4917 = vadd.f32 %v4883, %v4600
      %v4918 = vadd.f32 %v4884, %v4601
      %4919 = vst [vmem:[%s334] sm:$0xff] %v4885
      %4920 = vst [vmem:[%s334 + $0x8] sm:$0xff] %v4886
      %4921 = vst [vmem:[%s334 + $0x10] sm:$0xff] %v4887
      %4922 = vst [vmem:[%s334 + $0x18] sm:$0xff] %v4888
      %4923 = vst [vmem:[%s334 + $0x20] sm:$0xff] %v4889
      %4924 = vst [vmem:[%s334 + $0x28] sm:$0xff] %v4890
      %4925 = vst [vmem:[%s334 + $0x30] sm:$0xff] %v4891
      %4926 = vst [vmem:[%s334 + $0x38] sm:$0xff] %v4892
      %4927 = vst [vmem:[%s334 + $0x40] sm:$0xff] %v4893
      %4928 = vst [vmem:[%s334 + $0x48] sm:$0xff] %v4894
      %4929 = vst [vmem:[%s334 + $0x50] sm:$0xff] %v4895
      %4930 = vst [vmem:[%s334 + $0x58] sm:$0xff] %v4896
      %4931 = vst [vmem:[%s334 + $0x60] sm:$0xff] %v4897
      %4932 = vst [vmem:[%s334 + $0x68] sm:$0xff] %v4898
      %4933 = vst [vmem:[%s334 + $0x70] sm:$0xff] %v4899
      %4934 = vst [vmem:[%s334 + $0x78] sm:$0xff] %v4900
      %4935 = vst [vmem:[%s334 + $0x80] sm:$0xff] %v4901
      %4936 = vst [vmem:[%s334 + $0x88] sm:$0xff] %v4902
      %4937 = vst [vmem:[%s334 + $0x90] sm:$0xff] %v4903
      %4938 = vst [vmem:[%s334 + $0x98] sm:$0xff] %v4904
      %4939 = vst [vmem:[%s334 + $0xa0] sm:$0xff] %v4905
      %4940 = vst [vmem:[%s334 + $0xa8] sm:$0xff] %v4906
      %4941 = vst [vmem:[%s334 + $0xb0] sm:$0xff] %v4907
      %4942 = vst [vmem:[%s334 + $0xb8] sm:$0xff] %v4908
      %4943 = vst [vmem:[%s334 + $0xc0] sm:$0xff] %v4909
      %4944 = vst [vmem:[%s334 + $0xc8] sm:$0xff] %v4910
      %4945 = vst [vmem:[%s334 + $0xd0] sm:$0xff] %v4911
      %4946 = vst [vmem:[%s334 + $0xd8] sm:$0xff] %v4912
      %4947 = vst [vmem:[%s334 + $0xe0] sm:$0xff] %v4913
      %4948 = vst [vmem:[%s334 + $0xe8] sm:$0xff] %v4914
      %4949 = vst [vmem:[%s334 + $0xf0] sm:$0xff] %v4915
      %4950 = vst [vmem:[%s334 + $0xf8] sm:$0xff] %v4916
      %4951 = vst [vmem:[%s334 + $0x100] sm:$0xff] %v4917
      %4952 = vst [vmem:[%s334 + $0x108] sm:$0xff] %v4918
      %s4953 = smul.u32 34, %s20
      %p4954 = scmp.lt.s32.totalorder %s4953, 67
      %s4955 = scalar_select %p4954, %s4953, 67
      %s4956 = smul.addr %s4955, 8
      %s4957 = scalar_lea.vmem %s9, %s4956
      // Predicated region
      $region57: #{odenet_forward.1} parent=55 // pred_check
        %p4958 = pneg %p232
      $region58: #{odenet_forward.1} parent=55 // pred_check_branch
        %4960 = sbr.rel (%p4958) target = $region60
      $region59: #{odenet_forward.1} parent=55 // pred_region
        %s4961 = smul.u32 34, %s20
      $region60: #{odenet_forward.1} parent=55 // pred_fallthru
        _
    $region56: #{odenet_forward.1} parent=5 // pred_fallthru
      _
    %p4962 = scmp.le.s32.totalorder 2, %s15
    // Predicated region
    $region61: #{odenet_forward.1} parent=5 // pred_check
      %p4963 = pneg %p4962
    $region62: #{odenet_forward.1} parent=5 // pred_check_branch
      %4965 = sbr.rel (%p4963) target = $region64
    $region63: #{odenet_forward.1} parent=5 // pred_region
      %s4966 = ssub.s32 %s15, 2
      // Predicated region
      $region65: #{odenet_forward.1} parent=63 // pred_check
        %p4967 = pneg %p238
      $region66: #{odenet_forward.1} parent=63 // pred_check_branch
        %4969 = sbr.rel (%p4967) target = $region68
      $region67: #{odenet_forward.1} parent=63 // pred_region
        %s4970 = smul.u32 34, %s21
        %p4971 = scmp.lt.s32.totalorder %s4970, 67
        %s4972 = scalar_select %p4971, %s4970, 67
        %s4973 = smul.addr %s4972, 8
        %s4974 = scalar_lea.vmem %s9, %s4973
      $region68: #{odenet_forward.1} parent=63 // pred_fallthru
        _
    $region64: #{odenet_forward.1} parent=5 // pred_fallthru
      _
  $region6: #{odenet_forward.1} parent=0 // loop_footer
    %s19 = sadd.s32 1, %s15
  $region7: #{odenet_forward.1} parent=0 // loop_footer_branch
    %14 = sbr.rel target = $region3
  $region8: #{odenet_forward.1} parent=0 // loop_exit
    _

</llo_original>
